<compile_context>
chip_gen: v7x
topology: tpu7x:2x2x1
jax: 0.10.0
libtpu: 0.0.40
codegen_flags: <defaults>
</compile_context>

<pallas_src>
import jax
import jax.numpy as jnp
import numpy as np
from jax import lax
from jax.experimental import pallas as pl
from jax.experimental.pallas import tpu as pltpu


def bottleneck_kernel(x_ref, w1_ref, b1_ref, w2_ref, b2_ref, w3_ref, b3_ref,
                      out_ref, hp_ref):
    # x_ref  : (1, H, W, Cin)      bf16 NHWC block (one image)
    # w1_ref : (Cin, P)            bf16 (BN1 folded)
    # b1_ref : (1, P)              f32
    # w2_ref : (3, 3P, P)          bf16 (dx, dy*P + cin, cout) (BN2 folded)
    # b2_ref : (1, P)              f32
    # w3_ref : (P, Cout)           bf16 (BN3 folded)
    # b3_ref : (1, Cout)           f32
    # out_ref: (1, H, W, Cout)     bf16
    # hp_ref : VMEM (H+2, W+2, P)  bf16 zero-haloed conv2 input (scratch)
    _, H, W, Cin = x_ref.shape
    P = w1_ref.shape[1]
    Cout = w3_ref.shape[1]

    # ---- conv1 (1x1, BN folded) + bias + ReLU --------------------------------
    xv = x_ref[0].reshape(H * W, Cin)                       # bf16
    h1 = jnp.dot(xv, w1_ref[...], preferred_element_type=jnp.float32)
    h1 = jnp.maximum(h1 + b1_ref[...], 0.0).astype(jnp.bfloat16)

    # ---- stage the zero-haloed conv2 input in the VMEM scratch ---------------
    zrow = jnp.zeros((1, W + 2, P), hp_ref.dtype)
    hp_ref[pl.ds(0, 1), :, :] = zrow                        # top pad row
    hp_ref[pl.ds(H + 1, 1), :, :] = zrow                    # bottom pad row
    zcol = jnp.zeros((H + 2, 1, P), hp_ref.dtype)
    hp_ref[:, pl.ds(0, 1), :] = zcol                        # left pad col
    hp_ref[:, pl.ds(W + 1, 1), :] = zcol                    # right pad col
    hp_ref[pl.ds(1, H), pl.ds(1, W), :] = h1.reshape(H, W, P)

    # ---- conv2 (3x3, pad=1, BN folded) ---------------------------------------
    # Fuse the 3 dy taps into the contraction dim (K = 3P) via a lane-concat of
    # row-shifted slabs (major-dim slices are relayout-free); accumulate the 3
    # dx taps as values (single write, no VMEM accumulator round-trips).
    hpv = hp_ref[...]                                       # (H+2, W+2, P)
    cat = jnp.concatenate([hpv[dy:dy + H] for dy in range(3)],
                          axis=-1)                          # (H, W+2, 3P)
    acc = None
    for dx in range(3):
        patch = cat[:, dx:dx + W, :].reshape(H * W, 3 * P)
        tap = jnp.dot(patch, w2_ref[dx], preferred_element_type=jnp.float32)
        acc = tap if acc is None else acc + tap
    h2 = jnp.maximum(acc + b2_ref[...], 0.0).astype(jnp.bfloat16)

    # ---- conv3 (1x1, BN folded) + bias ---------------------------------------
    h3 = jnp.dot(h2, w3_ref[...], preferred_element_type=jnp.float32) + b3_ref[...]

    # ---- identity residual add + ReLU ----------------------------------------
    res = x_ref[0].reshape(H * W, Cin).astype(jnp.float32)
    out = jnp.maximum(h3 + res, 0.0)
    out_ref[0] = out.reshape(H, W, Cout).astype(out_ref.dtype)


def bottleneck_forward_nhwc(x_nhwc, kparams):
    """Fused Bottleneck forward.  x_nhwc: (N, H, W, Cin) bf16, NHWC.
    stride=1, downsample=None -> identity residual, so Cin == planes*4."""
    (w1, b1, w2, b2, w3, b3) = kparams
    N, H, W, Cin = x_nhwc.shape
    P = w1.shape[1]
    Cout = w3.shape[1]
    assert Cout == Cin, "identity residual requires inplanes == planes*4"
    # TODO(synk): stride>1 / downsample residual branch not implemented
    # (module is exercised here with stride=1, downsample=None).
    # TODO(synk): for H*W too large for VMEM, add row tiling with an h1 halo
    # carried in scratch; full-H tiles cover all standard ResNet bottlenecks.

    def full_spec(a):
        nd = a.ndim
        return pl.BlockSpec(a.shape, lambda n, _nd=nd: (0,) * _nd)

    # ---- cost estimate + VMEM budget (helps XLA scheduling / pipelining) -----
    flops = 2 * N * H * W * (Cin * P + 9 * P * P + P * Cout)
    w_bytes = 2 * (Cin * P + 9 * P * P + P * Cout) + 4 * (2 * P + Cout)
    bytes_accessed = 2 * N * H * W * (Cin + Cout) + w_bytes
    in_blk, out_blk = 2 * H * W * Cin, 2 * H * W * Cout      # bf16 blocks
    hp_bytes = 2 * (H + 2) * (W + 2) * P
    live = H * W * (2 * P + 4 * P + 4 * Cout) + 2 * H * (W + 2) * 3 * P
    vmem_needed = 2 * (in_blk + out_blk) + hp_bytes + 2 * w_bytes + live
    vmem_limit = int(min(max(2 * vmem_needed, 16 << 20), 56 << 20))

    return pl.pallas_call(
        bottleneck_kernel,
        out_shape=jax.ShapeDtypeStruct((N, H, W, Cout), jnp.bfloat16),
        grid_spec=pltpu.PrefetchScalarGridSpec(
            num_scalar_prefetch=0,
            grid=(N,),
            in_specs=[
                pl.BlockSpec((1, H, W, Cin), lambda n: (n, 0, 0, 0)),
                full_spec(w1), full_spec(b1),
                full_spec(w2), full_spec(b2),
                full_spec(w3), full_spec(b3),
            ],
            out_specs=pl.BlockSpec((1, H, W, Cout), lambda n: (n, 0, 0, 0)),
            scratch_shapes=[
                pltpu.VMEM((H + 2, W + 2, P), jnp.bfloat16),  # haloed conv2 input
            ],
        ),
        compiler_params=pltpu.CompilerParams(
            dimension_semantics=("parallel",),
            vmem_limit_bytes=vmem_limit,
        ),
        cost_estimate=pl.CostEstimate(flops=flops, transcendentals=0,
                                      bytes_accessed=bytes_accessed),
    )(x_nhwc, w1, b1, w2, b2, w3, b3)


def bottleneck_forward_nchw(x_nchw, kparams):
    """PyTorch-layout adapter (NCHW in/out).  Real pipelines should stay NHWC
    end-to-end; these transposes are extra HBM passes on a mem-bound block."""
    x_nhwc = jnp.transpose(x_nchw, (0, 2, 3, 1)).astype(jnp.bfloat16)
    y = bottleneck_forward_nhwc(x_nhwc, kparams)
    return jnp.transpose(y, (0, 3, 1, 2)).astype(x_nchw.dtype)


def make_params(key, inplanes, planes, eps=1e-5):
    """Deterministic synthetic conv weights + BatchNorm folded to scale/bias."""
    ks = jax.random.split(key, 12)
    P, C4 = planes, planes * 4

    def bn_fold(kg, kb, km, kv, c):
        gamma = 1.0 + 0.1 * jax.random.normal(kg, (c,), jnp.float32)
        beta = 0.1 * jax.random.normal(kb, (c,), jnp.float32)
        mean = 0.1 * jax.random.normal(km, (c,), jnp.float32)
        var = jnp.abs(jax.random.normal(kv, (c,), jnp.float32)) + 0.5
        scale = gamma / jnp.sqrt(var + eps)
        bias = beta - mean * scale
        return scale, bias

    # conv weights stored matmul-ready: (Cin, Cout) / (kh, kw, Cin, Cout)
    w1 = 0.1 * jax.random.normal(ks[0], (inplanes, P), jnp.float32)
    w2 = 0.1 * jax.random.normal(ks[1], (3, 3, P, P), jnp.float32)
    w3 = 0.1 * jax.random.normal(ks[2], (P, C4), jnp.float32)
    s1, b1 = bn_fold(ks[3], ks[4], ks[5], ks[6], P)
    s2, b2 = bn_fold(ks[7], ks[8], ks[9], ks[10], P)
    s3, b3 = bn_fold(ks[11], ks[0], ks[1], ks[2], C4)
    return (w1, s1, b1, w2, s2, b2, w3, s3, b3)


def fold_bn_into_weights(params):
    """Fold BN scale into the conv weights (bf16, MXU-ready); f32 biases.
    Returns (kernel_params, reference_params)."""
    (w1, s1, b1, w2, s2, b2, w3, s3, b3) = params
    P = w2.shape[2]
    w1f = (w1 * s1[None, :]).astype(jnp.bfloat16)                    # (Cin, P)
    w2f = (w2 * s2[None, None, None, :]).astype(jnp.bfloat16)        # (3,3,P,P) HWIO
    w3f = (w3 * s3[None, :]).astype(jnp.bfloat16)                    # (P, C4)
    # Kernel layout for conv2: per dx, the 3 dy taps fused into the contraction
    # dim -> (dx, dy*P + cin, cout)
    w2k = jnp.transpose(w2f, (1, 0, 2, 3)).reshape(3, 3 * P, P)
    kparams = (w1f, b1.reshape(1, -1), w2k, b2.reshape(1, -1),
               w3f, b3.reshape(1, -1))
    refparams = (w1f, b1, w2f, b2, w3f, b3)
    return kparams, refparams


def bottleneck_reference_nhwc(x_nhwc, refparams):
    """Pure-JAX reference with matching numerics (bf16 conv inputs, f32 acc)."""
    (w1, b1, w2, b2, w3, b3) = refparams

    def conv(x, w_hwio, pad):
        return lax.conv_general_dilated(
            x.astype(jnp.bfloat16), w_hwio, window_strides=(1, 1), padding=pad,
            dimension_numbers=("NHWC", "HWIO", "NHWC"),
            preferred_element_type=jnp.float32)

    h = jax.nn.relu(conv(x_nhwc, w1.reshape(1, 1, *w1.shape), "VALID") + b1)
    h = jax.nn.relu(conv(h, w2, [(1, 1), (1, 1)]) + b2)
    h = conv(h, w3.reshape(1, 1, *w3.shape), "VALID") + b3
    return jax.nn.relu(h + x_nhwc.astype(jnp.float32)).astype(jnp.bfloat16)


if __name__ == "__main__":
    # Bottleneck(inplanes=16, planes=4, stride=1, downsample=None)
    # NOTE: demo channel counts (Cin=16, P=4) only light up a sliver of the
    # 128-lane MXU/vregs; at real ResNet widths (64/256/...) the same kernel is
    # lane-dense without any code change — don't benchmark at these sizes.
    N, inplanes, planes, H, W = 2, 16, 4, 16, 16

    key = jax.random.PRNGKey(0)
    kx, kp = jax.random.split(key)
    x_nhwc = jax.random.normal(kx, (N, H, W, inplanes), jnp.float32).astype(jnp.bfloat16)
    kparams, refparams = fold_bn_into_weights(make_params(kp, inplanes, planes))

    out = jax.block_until_ready(bottleneck_forward_nhwc(x_nhwc, kparams))
    ref = bottleneck_reference_nhwc(x_nhwc, refparams)

    assert out.shape == (N, H, W, inplanes) and out.dtype == jnp.bfloat16
    np.testing.assert_allclose(np.asarray(out, dtype=np.float32),
                               np.asarray(ref, dtype=np.float32),
                               rtol=2e-2, atol=2e-2)

    print("KERNEL_OK")
</pallas_src>

<mosaic_0001>
module attributes {stable_mosaic.version = 11 : i64} {
  func.func @bottleneck_kernel(%arg0: i32, %arg1: memref<1x16x16x16xbf16, #tpu.memory_space<vmem>>, %arg2: memref<16x4xbf16, #tpu.memory_space<vmem>>, %arg3: memref<1x4xf32, #tpu.memory_space<vmem>>, %arg4: memref<3x12x4xbf16, #tpu.memory_space<vmem>>, %arg5: memref<1x4xf32, #tpu.memory_space<vmem>>, %arg6: memref<4x16xbf16, #tpu.memory_space<vmem>>, %arg7: memref<1x16xf32, #tpu.memory_space<vmem>>, %arg8: memref<1x16x16x16xbf16, #tpu.memory_space<vmem>>, %arg9: memref<18x18x4xbf16, #tpu.memory_space<vmem>>) attributes {dimension_semantics = [#tpu.dimension_semantics<parallel>], iteration_bounds = array<i64: 2>, scalar_prefetch = 0 : i64, scratch_operands = 1 : i64, tpu.core_type = #tpu.core_type<tc>, window_params = [{transform_indices = @transform_0, window_bounds = array<i64: 1, 16, 16, 16>}, {pipeline_mode = #tpu.pipeline_mode<synchronous>, transform_indices = @transform_1, window_bounds = array<i64: 16, 4>}, {pipeline_mode = #tpu.pipeline_mode<synchronous>, transform_indices = @transform_2, window_bounds = array<i64: 1, 4>}, {pipeline_mode = #tpu.pipeline_mode<synchronous>, transform_indices = @transform_3, window_bounds = array<i64: 3, 12, 4>}, {pipeline_mode = #tpu.pipeline_mode<synchronous>, transform_indices = @transform_4, window_bounds = array<i64: 1, 4>}, {pipeline_mode = #tpu.pipeline_mode<synchronous>, transform_indices = @transform_5, window_bounds = array<i64: 4, 16>}, {pipeline_mode = #tpu.pipeline_mode<synchronous>, transform_indices = @transform_6, window_bounds = array<i64: 1, 16>}, {transform_indices = @transform_7, window_bounds = array<i64: 1, 16, 16, 16>}]} {
    %c0 = arith.constant 0 : index
    %c0_0 = arith.constant 0 : index
    %c0_1 = arith.constant 0 : index
    %c0_2 = arith.constant 0 : index
    %0 = vector.load %arg1[%c0, %c0_0, %c0_1, %c0_2] : memref<1x16x16x16xbf16, #tpu.memory_space<vmem>>, vector<1x16x16x16xbf16>
    %1 = vector.shape_cast %0 : vector<1x16x16x16xbf16> to vector<16x16x16xbf16>
    %2 = vector.shape_cast %1 : vector<16x16x16xbf16> to vector<256x16xbf16>
    %c0_3 = arith.constant 0 : index
    %c0_4 = arith.constant 0 : index
    %3 = vector.load %arg2[%c0_3, %c0_4] : memref<16x4xbf16, #tpu.memory_space<vmem>>, vector<16x4xbf16>
    %cst = arith.constant dense<0.000000e+00> : vector<256x4xf32>
    %4 = tpu.matmul %2, %3, %cst {dimension_numbers = #tpu.dot_dimension_numbers<[1], [0], [0], [1], [0, 0, 1, 1], [], []>} : vector<256x16xbf16>, vector<16x4xbf16>, vector<256x4xf32> -> vector<256x4xf32>
    %c0_5 = arith.constant 0 : index
    %c0_6 = arith.constant 0 : index
    %5 = vector.load %arg3[%c0_5, %c0_6] : memref<1x4xf32, #tpu.memory_space<vmem>>, vector<1x4xf32>
    %6 = vector.broadcast %5 : vector<1x4xf32> to vector<256x4xf32>
    %7 = arith.addf %4, %6 : vector<256x4xf32>
    %cst_7 = arith.constant 0.000000e+00 : f32
    %8 = vector.broadcast %cst_7 : f32 to vector<256x4xf32>
    %9 = arith.maximumf %7, %8 : vector<256x4xf32>
    %10 = arith.truncf %9 : vector<256x4xf32> to vector<256x4xbf16>
    %cst_8 = arith.constant 0.000000e+00 : bf16
    %11 = vector.broadcast %cst_8 : bf16 to vector<1x18x4xbf16>
    %c0_9 = arith.constant 0 : index
    %c0_10 = arith.constant 0 : index
    %c0_11 = arith.constant 0 : index
    %12 = vector.load %arg9[%c0_9, %c0_10, %c0_11] : memref<18x18x4xbf16, #tpu.memory_space<vmem>>, vector<1x18x4xbf16>
    tpu.vector_store %arg9[%c0_9, %c0_10, %c0_11], %11 {strides = array<i32>} : memref<18x18x4xbf16, #tpu.memory_space<vmem>>, vector<1x18x4xbf16>,
    %c17 = arith.constant 17 : index
    %c0_12 = arith.constant 0 : index
    %c0_13 = arith.constant 0 : index
    %13 = vector.load %arg9[%c17, %c0_12, %c0_13] : memref<18x18x4xbf16, #tpu.memory_space<vmem>>, vector<1x18x4xbf16>
    tpu.vector_store %arg9[%c17, %c0_12, %c0_13], %11 {strides = array<i32>} : memref<18x18x4xbf16, #tpu.memory_space<vmem>>, vector<1x18x4xbf16>,
    %cst_14 = arith.constant 0.000000e+00 : bf16
    %14 = vector.broadcast %cst_14 : bf16 to vector<18x1x4xbf16>
    %c0_15 = arith.constant 0 : index
    %c0_16 = arith.constant 0 : index
    %c0_17 = arith.constant 0 : index
    %15 = vector.load %arg9[%c0_15, %c0_16, %c0_17] : memref<18x18x4xbf16, #tpu.memory_space<vmem>>, vector<18x1x4xbf16>
    tpu.vector_store %arg9[%c0_15, %c0_16, %c0_17], %14 {strides = array<i32>} : memref<18x18x4xbf16, #tpu.memory_space<vmem>>, vector<18x1x4xbf16>,
    %c0_18 = arith.constant 0 : index
    %c17_19 = arith.constant 17 : index
    %c0_20 = arith.constant 0 : index
    %16 = vector.load %arg9[%c0_18, %c17_19, %c0_20] : memref<18x18x4xbf16, #tpu.memory_space<vmem>>, vector<18x1x4xbf16>
    tpu.vector_store %arg9[%c0_18, %c17_19, %c0_20], %14 {strides = array<i32>} : memref<18x18x4xbf16, #tpu.memory_space<vmem>>, vector<18x1x4xbf16>,
    %17 = vector.shape_cast %10 : vector<256x4xbf16> to vector<16x16x4xbf16>
    %c1 = arith.constant 1 : index
    %c1_21 = arith.constant 1 : index
    %c0_22 = arith.constant 0 : index
    %18 = vector.load %arg9[%c1, %c1_21, %c0_22] : memref<18x18x4xbf16, #tpu.memory_space<vmem>>, vector<16x16x4xbf16>
    tpu.vector_store %arg9[%c1, %c1_21, %c0_22], %17 {strides = array<i32>} : memref<18x18x4xbf16, #tpu.memory_space<vmem>>, vector<16x16x4xbf16>,
    %c0_23 = arith.constant 0 : index
    %c0_24 = arith.constant 0 : index
    %c0_25 = arith.constant 0 : index
    %19 = vector.load %arg9[%c0_23, %c0_24, %c0_25] : memref<18x18x4xbf16, #tpu.memory_space<vmem>>, vector<18x18x4xbf16>
    %20 = vector.extract_strided_slice %19 {offsets = [0, 0, 0], sizes = [16, 18, 4], strides = [1, 1, 1]} : vector<18x18x4xbf16> to vector<16x18x4xbf16>
    %21 = vector.extract_strided_slice %19 {offsets = [1, 0, 0], sizes = [16, 18, 4], strides = [1, 1, 1]} : vector<18x18x4xbf16> to vector<16x18x4xbf16>
    %22 = vector.extract_strided_slice %19 {offsets = [2, 0, 0], sizes = [16, 18, 4], strides = [1, 1, 1]} : vector<18x18x4xbf16> to vector<16x18x4xbf16>
    %23 = tpu.concatenate %20, %21, %22 in 2 : vector<16x18x4xbf16>, vector<16x18x4xbf16>, vector<16x18x4xbf16> -> vector<16x18x12xbf16>
    %24 = vector.extract_strided_slice %23 {offsets = [0, 0, 0], sizes = [16, 16, 12], strides = [1, 1, 1]} : vector<16x18x12xbf16> to vector<16x16x12xbf16>
    %25 = vector.shape_cast %24 : vector<16x16x12xbf16> to vector<256x12xbf16>
    %c0_26 = arith.constant 0 : index
    %c0_27 = arith.constant 0 : index
    %c0_28 = arith.constant 0 : index
    %26 = vector.load %arg4[%c0_26, %c0_27, %c0_28] : memref<3x12x4xbf16, #tpu.memory_space<vmem>>, vector<1x12x4xbf16>
    %27 = vector.shape_cast %26 : vector<1x12x4xbf16> to vector<12x4xbf16>
    %cst_29 = arith.constant dense<0.000000e+00> : vector<256x4xf32>
    %28 = tpu.matmul %25, %27, %cst_29 {dimension_numbers = #tpu.dot_dimension_numbers<[1], [0], [0], [1], [0, 0, 1, 1], [], []>} : vector<256x12xbf16>, vector<12x4xbf16>, vector<256x4xf32> -> vector<256x4xf32>
    %29 = vector.extract_strided_slice %23 {offsets = [0, 1, 0], sizes = [16, 16, 12], strides = [1, 1, 1]} : vector<16x18x12xbf16> to vector<16x16x12xbf16>
    %30 = vector.shape_cast %29 : vector<16x16x12xbf16> to vector<256x12xbf16>
    %c1_30 = arith.constant 1 : index
    %c0_31 = arith.constant 0 : index
    %c0_32 = arith.constant 0 : index
    %31 = vector.load %arg4[%c1_30, %c0_31, %c0_32] : memref<3x12x4xbf16, #tpu.memory_space<vmem>>, vector<1x12x4xbf16>
    %32 = vector.shape_cast %31 : vector<1x12x4xbf16> to vector<12x4xbf16>
    %cst_33 = arith.constant dense<0.000000e+00> : vector<256x4xf32>
    %33 = tpu.matmul %30, %32, %cst_33 {dimension_numbers = #tpu.dot_dimension_numbers<[1], [0], [0], [1], [0, 0, 1, 1], [], []>} : vector<256x12xbf16>, vector<12x4xbf16>, vector<256x4xf32> -> vector<256x4xf32>
    %34 = arith.addf %28, %33 : vector<256x4xf32>
    %35 = vector.extract_strided_slice %23 {offsets = [0, 2, 0], sizes = [16, 16, 12], strides = [1, 1, 1]} : vector<16x18x12xbf16> to vector<16x16x12xbf16>
    %36 = vector.shape_cast %35 : vector<16x16x12xbf16> to vector<256x12xbf16>
    %c2 = arith.constant 2 : index
    %c0_34 = arith.constant 0 : index
    %c0_35 = arith.constant 0 : index
    %37 = vector.load %arg4[%c2, %c0_34, %c0_35] : memref<3x12x4xbf16, #tpu.memory_space<vmem>>, vector<1x12x4xbf16>
    %38 = vector.shape_cast %37 : vector<1x12x4xbf16> to vector<12x4xbf16>
    %cst_36 = arith.constant dense<0.000000e+00> : vector<256x4xf32>
    %39 = tpu.matmul %36, %38, %cst_36 {dimension_numbers = #tpu.dot_dimension_numbers<[1], [0], [0], [1], [0, 0, 1, 1], [], []>} : vector<256x12xbf16>, vector<12x4xbf16>, vector<256x4xf32> -> vector<256x4xf32>
    %40 = arith.addf %34, %39 : vector<256x4xf32>
    %c0_37 = arith.constant 0 : index
    %c0_38 = arith.constant 0 : index
    %41 = vector.load %arg5[%c0_37, %c0_38] : memref<1x4xf32, #tpu.memory_space<vmem>>, vector<1x4xf32>
    %42 = vector.broadcast %41 : vector<1x4xf32> to vector<256x4xf32>
    %43 = arith.addf %40, %42 : vector<256x4xf32>
    %cst_39 = arith.constant 0.000000e+00 : f32
    %44 = vector.broadcast %cst_39 : f32 to vector<256x4xf32>
    %45 = arith.maximumf %43, %44 : vector<256x4xf32>
    %46 = arith.truncf %45 : vector<256x4xf32> to vector<256x4xbf16>
    %c0_40 = arith.constant 0 : index
    %c0_41 = arith.constant 0 : index
    %47 = vector.load %arg6[%c0_40, %c0_41] : memref<4x16xbf16, #tpu.memory_space<vmem>>, vector<4x16xbf16>
    %cst_42 = arith.constant dense<0.000000e+00> : vector<256x16xf32>
    %48 = tpu.matmul %46, %47, %cst_42 {dimension_numbers = #tpu.dot_dimension_numbers<[1], [0], [0], [1], [0, 0, 1, 1], [], []>} : vector<256x4xbf16>, vector<4x16xbf16>, vector<256x16xf32> -> vector<256x16xf32>
    %c0_43 = arith.constant 0 : index
    %c0_44 = arith.constant 0 : index
    %49 = vector.load %arg7[%c0_43, %c0_44] : memref<1x16xf32, #tpu.memory_space<vmem>>, vector<1x16xf32>
    %50 = vector.broadcast %49 : vector<1x16xf32> to vector<256x16xf32>
    %51 = arith.addf %48, %50 : vector<256x16xf32>
    %c0_45 = arith.constant 0 : index
    %c0_46 = arith.constant 0 : index
    %c0_47 = arith.constant 0 : index
    %c0_48 = arith.constant 0 : index
    %52 = vector.load %arg1[%c0_45, %c0_46, %c0_47, %c0_48] : memref<1x16x16x16xbf16, #tpu.memory_space<vmem>>, vector<1x16x16x16xbf16>
    %53 = vector.shape_cast %52 : vector<1x16x16x16xbf16> to vector<16x16x16xbf16>
    %54 = vector.shape_cast %53 : vector<16x16x16xbf16> to vector<256x16xbf16>
    %55 = arith.extf %54 : vector<256x16xbf16> to vector<256x16xf32>
    %56 = arith.addf %51, %55 : vector<256x16xf32>
    %cst_49 = arith.constant 0.000000e+00 : f32
    %57 = vector.broadcast %cst_49 : f32 to vector<256x16xf32>
    %58 = arith.maximumf %56, %57 : vector<256x16xf32>
    %59 = vector.shape_cast %58 : vector<256x16xf32> to vector<16x16x16xf32>
    %60 = arith.truncf %59 : vector<16x16x16xf32> to vector<16x16x16xbf16>
    %c0_50 = arith.constant 0 : index
    %c0_51 = arith.constant 0 : index
    %c0_52 = arith.constant 0 : index
    %c0_53 = arith.constant 0 : index
    %61 = vector.load %arg8[%c0_50, %c0_51, %c0_52, %c0_53] : memref<1x16x16x16xbf16, #tpu.memory_space<vmem>>, vector<1x16x16x16xbf16>
    %62 = vector.shape_cast %61 : vector<1x16x16x16xbf16> to vector<16x16x16xbf16>
    %63 = vector.shape_cast %60 : vector<16x16x16xbf16> to vector<1x16x16x16xbf16>
    tpu.vector_store %arg8[%c0_50, %c0_51, %c0_52, %c0_53], %63 {strides = array<i32>} : memref<1x16x16x16xbf16, #tpu.memory_space<vmem>>, vector<1x16x16x16xbf16>,
    return
  }
  func.func @transform_0(%arg0: i32) -> (i32, i32, i32, i32) {
    %c0_i32 = arith.constant 0 : i32
    %c0_i32_0 = arith.constant 0 : i32
    %c0_i32_1 = arith.constant 0 : i32
    %c0_i32_2 = arith.constant 0 : i32
    return %arg0, %c0_i32, %c0_i32_0, %c0_i32_1 : i32, i32, i32, i32
  }
  func.func @transform_1(%arg0: i32) -> (i32, i32) {
    %c0_i32 = arith.constant 0 : i32
    %c0_i32_0 = arith.constant 0 : i32
    %c0_i32_1 = arith.constant 0 : i32
    return %c0_i32, %c0_i32_0 : i32, i32
  }
  func.func @transform_2(%arg0: i32) -> (i32, i32) {
    %c0_i32 = arith.constant 0 : i32
    %c0_i32_0 = arith.constant 0 : i32
    %c0_i32_1 = arith.constant 0 : i32
    return %c0_i32, %c0_i32_0 : i32, i32
  }
  func.func @transform_3(%arg0: i32) -> (i32, i32, i32) {
    %c0_i32 = arith.constant 0 : i32
    %c0_i32_0 = arith.constant 0 : i32
    %c0_i32_1 = arith.constant 0 : i32
    %c0_i32_2 = arith.constant 0 : i32
    return %c0_i32, %c0_i32_0, %c0_i32_1 : i32, i32, i32
  }
  func.func @transform_4(%arg0: i32) -> (i32, i32) {
    %c0_i32 = arith.constant 0 : i32
    %c0_i32_0 = arith.constant 0 : i32
    %c0_i32_1 = arith.constant 0 : i32
    return %c0_i32, %c0_i32_0 : i32, i32
  }
  func.func @transform_5(%arg0: i32) -> (i32, i32) {
    %c0_i32 = arith.constant 0 : i32
    %c0_i32_0 = arith.constant 0 : i32
    %c0_i32_1 = arith.constant 0 : i32
    return %c0_i32, %c0_i32_0 : i32, i32
  }
  func.func @transform_6(%arg0: i32) -> (i32, i32) {
    %c0_i32 = arith.constant 0 : i32
    %c0_i32_0 = arith.constant 0 : i32
    %c0_i32_1 = arith.constant 0 : i32
    return %c0_i32, %c0_i32_0 : i32, i32
  }
  func.func @transform_7(%arg0: i32) -> (i32, i32, i32, i32) {
    %c0_i32 = arith.constant 0 : i32
    %c0_i32_0 = arith.constant 0 : i32
    %c0_i32_1 = arith.constant 0 : i32
    %c0_i32_2 = arith.constant 0 : i32
    return %arg0, %c0_i32, %c0_i32_0, %c0_i32_1 : i32, i32, i32, i32
  }
}

</mosaic_0001>

<llo_original>
// kernel: tpu_custom_call.1
$region0: #{tpu_custom_call.1}
  #allocation0 [shape = 'u32[]', space=smem, size = 0x4, offset = 0x4, fixed_abs, tag = 'smem constant byte address 0x4 - core index']
  #allocation1 [shape = 'u32[144,128]{1,0:T(1,128)}', space=vmem, size = 0x12000, scoped, tag = 'internal scratch']
  #allocation2 [shape = 'bf16[18,18,4]{2,1,0:T(8,128)(2,1)}', space=vmem, size = 0x1b000, scoped, tag = 'scratch operand']
  %s0 = inlined_call_operand.hbm [shape: bf16[2,16,16,16], index: 0, kind: input, shape index: {}]
  %s1 = inlined_call_operand.vmem [shape: bf16[16,4], index: 1, kind: input, shape index: {}]
  %s2 = inlined_call_operand.vmem [shape: f32[1,4], index: 2, kind: input, shape index: {}]
  %s3 = inlined_call_operand.vmem [shape: bf16[3,12,4], index: 3, kind: input, shape index: {}]
  %s4 = inlined_call_operand.vmem [shape: f32[1,4], index: 4, kind: input, shape index: {}]
  %s5 = inlined_call_operand.vmem [shape: bf16[4,16], index: 5, kind: input, shape index: {}]
  %s6 = inlined_call_operand.vmem [shape: f32[1,16], index: 6, kind: input, shape index: {}]
  %s7 = inlined_call_operand.hbm [shape: bf16[2,16,16,16], index: 7, kind: output, shape index: {}]
  %s8 = sld [smem:[#allocation0]]
  $region65: #{tpu_custom_call.1} parent=0
    _
  %s10 = ssub.s32 1, %s8
  %s11 = scalar_select 0, %s10, %s8
  $region1: #{tpu_custom_call.1} parent=0
    #allocation3 [shape = 'u8[131072]{0}', space=vmem, size = 0x20000, scoped, tag = 'input window, operand 0']
    #allocation4 [shape = 's32[2]{0}', space=sflag, size = 0x8, scoped, tag = 'scoped memory for tpu_custom_call.1']
    #allocation5 [shape = 's32[2]{0}', space=sflag, size = 0x8, scoped, tag = 'scoped memory for tpu_custom_call.1']
    #allocation6 [shape = 'u8[131072]{0}', space=vmem, size = 0x20000, scoped, tag = 'output window, operand 0']
    %12 = vsyncpa [#allocation4], 0
    %s13 = scalar_lea.sflag [#allocation4], 1
    %14 = vsyncpa %s13, 0
    %15 = vsyncpa [#allocation5], 0
    %s16 = scalar_lea.sflag [#allocation5], 1
    %17 = vsyncpa %s16, 0
    loop: start=0, step=1, limit=4
    $region2: #{tpu_custom_call.1} parent=1 // loop_pre_header
      _
    $region3: #{tpu_custom_call.1} parent=1 // loop_header
      %s19 = sphi 0, %s23
      %p20 = scmp.ge.s32.totalorder %s19, 4
      %s29 = sphi 0, %s31
      %s32 = sphi 0, %s29
      %s33 = sphi 0, %s32
      %s49 = sphi 0, %s33
      %s53 = sphi 0, %s53
      %s55 = sphi 0, %s53
      %s56 = sphi 0, %s55
      %s70 = sphi 0, %s56
      %s74 = sphi 0, %s74
      %s76 = sphi 0, %s74
      %s77 = sphi 0, %s76
      %s91 = sphi 0, %s77
      %s95 = sphi 0, %s95
      %s97 = sphi 0, %s95
      %s98 = sphi 0, %s97
      %s112 = sphi 0, %s98
      %s116 = sphi 0, %s116
      %s118 = sphi 0, %s116
      %s119 = sphi 0, %s118
      %s133 = sphi 0, %s119
      %s137 = sphi 0, %s137
      %s139 = sphi 0, %s137
      %s140 = sphi 0, %s139
      %s154 = sphi 0, %s140
      %s158 = sphi 0, %s158
      %s160 = sphi 0, %s158
      %s161 = sphi 0, %s160
      %s175 = sphi 0, %s161
      %s181 = sphi 0, %s183
      %s184 = sphi 0, %s181
      %s185 = sphi 0, %s184
      %s201 = sphi 0, %s185
    $region4: #{tpu_custom_call.1} parent=1 // loop_header_branch
      %22 = sbr.rel (%p20) target = $region8
    $region5: #{tpu_custom_call.1} parent=1 // loop_body
      %s24 = ssub.s32 %s19, 1
      %s25 = ssub.s32 %s19, 2
      %s26 = sadd.s32 %s19, 1
      %s27 = ssub.s32 %s19, %s26
      %p28 = scmp.eq.s32.totalorder %s27, 0
      %s30 = sadd.s32 %s29, 1
      %s31 = scalar_select %p28, %s29, %s30
      %p34 = pneg %p28
      %p35 = scmp.eq.s32.totalorder %s19, 1
      %p36 = por %p34, %p35
      %p37 = scmp.ne.s32.totalorder %s29, %s32
      %p38 = scmp.eq.s32.totalorder %s19, 0
      %p39 = por %p37, %p38
      %p40 = scmp.ne.s32.totalorder %s29, %s32
      %p41 = scmp.eq.s32.totalorder %s24, 1
      %p42 = por %p40, %p41
      %p43 = scmp.ne.s32.totalorder %s32, %s33
      %p44 = scmp.eq.s32.totalorder %s24, 0
      %p45 = por %p43, %p44
      %p46 = scmp.ne.s32.totalorder %s32, %s33
      %p47 = scmp.eq.s32.totalorder %s25, 1
      %p48 = por %p46, %p47
      %p50 = scmp.ne.s32.totalorder %s33, %s49
      %p51 = scmp.eq.s32.totalorder %s25, 0
      %p52 = por %p50, %p51
      %s54 = sadd.s32 %s53, 1
      %p57 = scmp.eq.s32.totalorder %s19, 1
      %p58 = scmp.ne.s32.totalorder %s53, %s55
      %p59 = scmp.eq.s32.totalorder %s19, 0
      %p60 = por %p58, %p59
      %p61 = scmp.ne.s32.totalorder %s53, %s55
      %p62 = scmp.eq.s32.totalorder %s24, 1
      %p63 = por %p61, %p62
      %p64 = scmp.ne.s32.totalorder %s55, %s56
      %p65 = scmp.eq.s32.totalorder %s24, 0
      %p66 = por %p64, %p65
      %p67 = scmp.ne.s32.totalorder %s55, %s56
      %p68 = scmp.eq.s32.totalorder %s25, 1
      %p69 = por %p67, %p68
      %p71 = scmp.ne.s32.totalorder %s56, %s70
      %p72 = scmp.eq.s32.totalorder %s25, 0
      %p73 = por %p71, %p72
      %s75 = sadd.s32 %s74, 1
      %p78 = scmp.eq.s32.totalorder %s19, 1
      %p79 = scmp.ne.s32.totalorder %s74, %s76
      %p80 = scmp.eq.s32.totalorder %s19, 0
      %p81 = por %p79, %p80
      %p82 = scmp.ne.s32.totalorder %s74, %s76
      %p83 = scmp.eq.s32.totalorder %s24, 1
      %p84 = por %p82, %p83
      %p85 = scmp.ne.s32.totalorder %s76, %s77
      %p86 = scmp.eq.s32.totalorder %s24, 0
      %p87 = por %p85, %p86
      %p88 = scmp.ne.s32.totalorder %s76, %s77
      %p89 = scmp.eq.s32.totalorder %s25, 1
      %p90 = por %p88, %p89
      %p92 = scmp.ne.s32.totalorder %s77, %s91
      %p93 = scmp.eq.s32.totalorder %s25, 0
      %p94 = por %p92, %p93
      %s96 = sadd.s32 %s95, 1
      %p99 = scmp.eq.s32.totalorder %s19, 1
      %p100 = scmp.ne.s32.totalorder %s95, %s97
      %p101 = scmp.eq.s32.totalorder %s19, 0
      %p102 = por %p100, %p101
      %p103 = scmp.ne.s32.totalorder %s95, %s97
      %p104 = scmp.eq.s32.totalorder %s24, 1
      %p105 = por %p103, %p104
      %p106 = scmp.ne.s32.totalorder %s97, %s98
      %p107 = scmp.eq.s32.totalorder %s24, 0
      %p108 = por %p106, %p107
      %p109 = scmp.ne.s32.totalorder %s97, %s98
      %p110 = scmp.eq.s32.totalorder %s25, 1
      %p111 = por %p109, %p110
      %p113 = scmp.ne.s32.totalorder %s98, %s112
      %p114 = scmp.eq.s32.totalorder %s25, 0
      %p115 = por %p113, %p114
      %s117 = sadd.s32 %s116, 1
      %p120 = scmp.eq.s32.totalorder %s19, 1
      %p121 = scmp.ne.s32.totalorder %s116, %s118
      %p122 = scmp.eq.s32.totalorder %s19, 0
      %p123 = por %p121, %p122
      %p124 = scmp.ne.s32.totalorder %s116, %s118
      %p125 = scmp.eq.s32.totalorder %s24, 1
      %p126 = por %p124, %p125
      %p127 = scmp.ne.s32.totalorder %s118, %s119
      %p128 = scmp.eq.s32.totalorder %s24, 0
      %p129 = por %p127, %p128
      %p130 = scmp.ne.s32.totalorder %s118, %s119
      %p131 = scmp.eq.s32.totalorder %s25, 1
      %p132 = por %p130, %p131
      %p134 = scmp.ne.s32.totalorder %s119, %s133
      %p135 = scmp.eq.s32.totalorder %s25, 0
      %p136 = por %p134, %p135
      %s138 = sadd.s32 %s137, 1
      %p141 = scmp.eq.s32.totalorder %s19, 1
      %p142 = scmp.ne.s32.totalorder %s137, %s139
      %p143 = scmp.eq.s32.totalorder %s19, 0
      %p144 = por %p142, %p143
      %p145 = scmp.ne.s32.totalorder %s137, %s139
      %p146 = scmp.eq.s32.totalorder %s24, 1
      %p147 = por %p145, %p146
      %p148 = scmp.ne.s32.totalorder %s139, %s140
      %p149 = scmp.eq.s32.totalorder %s24, 0
      %p150 = por %p148, %p149
      %p151 = scmp.ne.s32.totalorder %s139, %s140
      %p152 = scmp.eq.s32.totalorder %s25, 1
      %p153 = por %p151, %p152
      %p155 = scmp.ne.s32.totalorder %s140, %s154
      %p156 = scmp.eq.s32.totalorder %s25, 0
      %p157 = por %p155, %p156
      %s159 = sadd.s32 %s158, 1
      %p162 = scmp.eq.s32.totalorder %s19, 1
      %p163 = scmp.ne.s32.totalorder %s158, %s160
      %p164 = scmp.eq.s32.totalorder %s19, 0
      %p165 = por %p163, %p164
      %p166 = scmp.ne.s32.totalorder %s158, %s160
      %p167 = scmp.eq.s32.totalorder %s24, 1
      %p168 = por %p166, %p167
      %p169 = scmp.ne.s32.totalorder %s160, %s161
      %p170 = scmp.eq.s32.totalorder %s24, 0
      %p171 = por %p169, %p170
      %p172 = scmp.ne.s32.totalorder %s160, %s161
      %p173 = scmp.eq.s32.totalorder %s25, 1
      %p174 = por %p172, %p173
      %p176 = scmp.ne.s32.totalorder %s161, %s175
      %p177 = scmp.eq.s32.totalorder %s25, 0
      %p178 = por %p176, %p177
      %s179 = ssub.s32 %s19, %s26
      %p180 = scmp.eq.s32.totalorder %s179, 0
      %s182 = sadd.s32 %s181, 1
      %s183 = scalar_select %p180, %s181, %s182
      %p186 = pneg %p180
      %p187 = scmp.eq.s32.totalorder %s19, 1
      %p188 = por %p186, %p187
      %p189 = scmp.ne.s32.totalorder %s181, %s184
      %p190 = scmp.eq.s32.totalorder %s19, 0
      %p191 = por %p189, %p190
      %p192 = scmp.ne.s32.totalorder %s181, %s184
      %p193 = scmp.eq.s32.totalorder %s24, 1
      %p194 = por %p192, %p193
      %p195 = scmp.ne.s32.totalorder %s184, %s185
      %p196 = scmp.eq.s32.totalorder %s24, 0
      %p197 = por %p195, %p196
      %p198 = scmp.ne.s32.totalorder %s184, %s185
      %p199 = scmp.eq.s32.totalorder %s25, 1
      %p200 = por %p198, %p199
      %p202 = scmp.ne.s32.totalorder %s185, %s201
      %p203 = scmp.eq.s32.totalorder %s25, 0
      %p204 = por %p202, %p203
      %p205 = scmp.le.s32.totalorder 1, %s19
      %p206 = scmp.lt.s32.totalorder %s19, 3
      %p207 = pnand %p205, %p206
      %p208 = pneg %p207
      // Predicated region
      $region9: #{tpu_custom_call.1} parent=5 // pred_check
        _
      $region10: #{tpu_custom_call.1} parent=5 // pred_check_branch
        %210 = sbr.rel (%p207) target = $region12
      $region11: #{tpu_custom_call.1} parent=5 // pred_region
        %s211 = ssub.s32 %s19, 1
        // Predicated region
        $region13: #{tpu_custom_call.1} parent=11 // pred_check
          %p212 = pneg %p66
        $region14: #{tpu_custom_call.1} parent=11 // pred_check_branch
          %214 = sbr.rel (%p212) target = $region16
        $region15: #{tpu_custom_call.1} parent=11 // pred_region
          _
        $region16: #{tpu_custom_call.1} parent=11 // pred_fallthru
          _
        // Predicated region
        $region17: #{tpu_custom_call.1} parent=11 // pred_check
          %p215 = pneg %p87
        $region18: #{tpu_custom_call.1} parent=11 // pred_check_branch
          %217 = sbr.rel (%p215) target = $region20
        $region19: #{tpu_custom_call.1} parent=11 // pred_region
          _
        $region20: #{tpu_custom_call.1} parent=11 // pred_fallthru
          _
        // Predicated region
        $region21: #{tpu_custom_call.1} parent=11 // pred_check
          %p218 = pneg %p108
        $region22: #{tpu_custom_call.1} parent=11 // pred_check_branch
          %220 = sbr.rel (%p218) target = $region24
        $region23: #{tpu_custom_call.1} parent=11 // pred_region
          _
        $region24: #{tpu_custom_call.1} parent=11 // pred_fallthru
          _
        // Predicated region
        $region25: #{tpu_custom_call.1} parent=11 // pred_check
          %p221 = pneg %p129
        $region26: #{tpu_custom_call.1} parent=11 // pred_check_branch
          %223 = sbr.rel (%p221) target = $region28
        $region27: #{tpu_custom_call.1} parent=11 // pred_region
          _
        $region28: #{tpu_custom_call.1} parent=11 // pred_fallthru
          _
        // Predicated region
        $region29: #{tpu_custom_call.1} parent=11 // pred_check
          %p224 = pneg %p150
        $region30: #{tpu_custom_call.1} parent=11 // pred_check_branch
          %226 = sbr.rel (%p224) target = $region32
        $region31: #{tpu_custom_call.1} parent=11 // pred_region
          _
        $region32: #{tpu_custom_call.1} parent=11 // pred_fallthru
          _
        // Predicated region
        $region33: #{tpu_custom_call.1} parent=11 // pred_check
          %p227 = pneg %p171
        $region34: #{tpu_custom_call.1} parent=11 // pred_check_branch
          %229 = sbr.rel (%p227) target = $region36
        $region35: #{tpu_custom_call.1} parent=11 // pred_region
          _
        $region36: #{tpu_custom_call.1} parent=11 // pred_fallthru
          _
      $region12: #{tpu_custom_call.1} parent=5 // pred_fallthru
        _
      %p230 = scmp.lt.s32.totalorder %s19, 2
      // Predicated region
      $region37: #{tpu_custom_call.1} parent=5 // pred_check
        %p231 = pneg %p230
      $region38: #{tpu_custom_call.1} parent=5 // pred_check_branch
        %233 = sbr.rel (%p231) target = $region40
      $region39: #{tpu_custom_call.1} parent=5 // pred_region
        // Predicated region
        $region41: #{tpu_custom_call.1} parent=39 // pred_check
          %p234 = pneg %p39
        $region42: #{tpu_custom_call.1} parent=39 // pred_check_branch
          %236 = sbr.rel (%p234) target = $region44
        $region43: #{tpu_custom_call.1} parent=39 // pred_region
          %s237 = sand.u32 %s29, 1
          %s238 = scalar_lea.sflag [#allocation4], %s237
          %s239 = sand.u32 %s29, 1
          %s240 = smul.addr %s239, 128
          %s241 = scalar_lea.vmem [#allocation3], %s240
          %s243 = ssub.s32 2048, 2048
          %244 = vsyncadd %s238, %s243
          %s245 = smul.addr %s19, 32
          %s246 = smul.addr %s245, 64
          %s247 = scalar_lea.hbm %s0, %s246
          %s248 = sshll.u32 %s241, 4
          %s249 = int_to_ptr.vmem [resolvable:$true] %s248
          %254 = dma.hbm_to_vmem [thread:$0]  %s247, 2048, %s249, %s238, 64, 64, 4
        $region44: #{tpu_custom_call.1} parent=39 // pred_fallthru
          _
      $region40: #{tpu_custom_call.1} parent=5 // pred_fallthru
        _
      %p255 = scmp.le.s32.totalorder 1, %s19
      %p256 = scmp.lt.s32.totalorder %s19, 3
      %p257 = pnand %p255, %p256
      %p258 = pneg %p257
      // Predicated region
      $region45: #{tpu_custom_call.1} parent=5 // pred_check
        _
      $region46: #{tpu_custom_call.1} parent=5 // pred_check_branch
        %260 = sbr.rel (%p257) target = $region48
      $region47: #{tpu_custom_call.1} parent=5 // pred_region
        %s261 = ssub.s32 %s19, 1
        %s262 = sand.u32 %s32, 1
        %s263 = scalar_lea.sflag [#allocation4], %s262
        %s264 = sand.u32 %s32, 1
        %s265 = smul.addr %s264, 128
        %s266 = scalar_lea.vmem [#allocation3], %s265
        // Predicated region
        $region49: #{tpu_custom_call.1} parent=47 // pred_check
          %p267 = pneg %p45
        $region50: #{tpu_custom_call.1} parent=47 // pred_check_branch
          %269 = sbr.rel (%p267) target = $region52
        $region51: #{tpu_custom_call.1} parent=47 // pred_region
          %270 = dma.done %s263, 2048
        $region52: #{tpu_custom_call.1} parent=47 // pred_fallthru
          _
        %s271 = sand.u32 %s32, 1
        %s272 = scalar_lea.sflag [#allocation4], %s271
        %s273 = sand.u32 %s32, 1
        %s274 = smul.addr %s273, 128
        %s275 = scalar_lea.vmem [#allocation3], %s274
        %p276 = pneg %p45
        %p277 = pneg %p42
        %p278 = pneg %p66
        %p279 = pneg %p63
        %p280 = pneg %p87
        %p281 = pneg %p84
        %p282 = pneg %p108
        %p283 = pneg %p105
        %p284 = pneg %p129
        %p285 = pneg %p126
        %p286 = pneg %p150
        %p287 = pneg %p147
        %p288 = pneg %p171
        %p289 = pneg %p168
        %p290 = pneg %p197
        %p291 = pneg %p194
        %s292 = sand.u32 %s184, 1
        %s293 = scalar_lea.sflag [#allocation5], %s292
        %s294 = sand.u32 %s184, 1
        %s295 = smul.addr %s294, 128
        %s296 = scalar_lea.vmem [#allocation6], %s295
        %v298 = vld [vmem:[%s266] sm:$0xf]
        %v299 = vld [vmem:[%s266 + $0x4] sm:$0xf]
        %v300 = vld [vmem:[%s266 + $0x8] sm:$0xf]
        %v301 = vld [vmem:[%s266 + $0xc] sm:$0xf]
        %v302 = vld [vmem:[%s266 + $0x10] sm:$0xf]
        %v303 = vld [vmem:[%s266 + $0x14] sm:$0xf]
        %v304 = vld [vmem:[%s266 + $0x18] sm:$0xf]
        %v305 = vld [vmem:[%s266 + $0x1c] sm:$0xf]
        %v306 = vld [vmem:[%s266 + $0x20] sm:$0xf]
        %v307 = vld [vmem:[%s266 + $0x24] sm:$0xf]
        %v308 = vld [vmem:[%s266 + $0x28] sm:$0xf]
        %v309 = vld [vmem:[%s266 + $0x2c] sm:$0xf]
        %v310 = vld [vmem:[%s266 + $0x30] sm:$0xf]
        %v311 = vld [vmem:[%s266 + $0x34] sm:$0xf]
        %v312 = vld [vmem:[%s266 + $0x38] sm:$0xf]
        %v313 = vld [vmem:[%s266 + $0x3c] sm:$0xf]
        %v314 = vld [vmem:[%s266 + $0x40] sm:$0xf]
        %v315 = vld [vmem:[%s266 + $0x44] sm:$0xf]
        %v316 = vld [vmem:[%s266 + $0x48] sm:$0xf]
        %v317 = vld [vmem:[%s266 + $0x4c] sm:$0xf]
        %v318 = vld [vmem:[%s266 + $0x50] sm:$0xf]
        %v319 = vld [vmem:[%s266 + $0x54] sm:$0xf]
        %v320 = vld [vmem:[%s266 + $0x58] sm:$0xf]
        %v321 = vld [vmem:[%s266 + $0x5c] sm:$0xf]
        %v322 = vld [vmem:[%s266 + $0x60] sm:$0xf]
        %v323 = vld [vmem:[%s266 + $0x64] sm:$0xf]
        %v324 = vld [vmem:[%s266 + $0x68] sm:$0xf]
        %v325 = vld [vmem:[%s266 + $0x6c] sm:$0xf]
        %v326 = vld [vmem:[%s266 + $0x70] sm:$0xf]
        %v327 = vld [vmem:[%s266 + $0x74] sm:$0xf]
        %v328 = vld [vmem:[%s266 + $0x78] sm:$0xf]
        %v329 = vld [vmem:[%s266 + $0x7c] sm:$0xf]
        %v330 = vld [vmem:[%s1] sm:$0xf]
        %v331 = vld [vmem:[%s1 + $0x4] sm:$0xf]
        %v332 = vld [vmem:[%s2] sm:$0x1]
        %v334 = vlaneseq
        %v335 = vshrl.u32 %v334, 7
        %v336 = vsub.s32 0, %v335
        %v337 = vrot.slane %v332, %v336
        %v371 = vunpack.c.l.b16 %v298
        %v372 = vunpack.c.l.b16 %v299
        %v373 = vunpack.c.l.b16 %v300
        %v374 = vunpack.c.l.b16 %v301
        %v375 = vunpack.c.l.b16 %v302
        %v376 = vunpack.c.l.b16 %v303
        %v377 = vunpack.c.l.b16 %v304
        %v378 = vunpack.c.l.b16 %v305
        %v379 = vunpack.c.l.b16 %v306
        %v380 = vunpack.c.l.b16 %v307
        %v381 = vunpack.c.l.b16 %v308
        %v382 = vunpack.c.l.b16 %v309
        %v383 = vunpack.c.l.b16 %v310
        %v384 = vunpack.c.l.b16 %v311
        %v385 = vunpack.c.l.b16 %v312
        %v386 = vunpack.c.l.b16 %v313
        %v387 = vunpack.c.l.b16 %v314
        %v388 = vunpack.c.l.b16 %v315
        %v389 = vunpack.c.l.b16 %v316
        %v390 = vunpack.c.l.b16 %v317
        %v391 = vunpack.c.l.b16 %v318
        %v392 = vunpack.c.l.b16 %v319
        %v393 = vunpack.c.l.b16 %v320
        %v394 = vunpack.c.l.b16 %v321
        %v395 = vunpack.c.l.b16 %v322
        %v396 = vunpack.c.l.b16 %v323
        %v397 = vunpack.c.l.b16 %v324
        %v398 = vunpack.c.l.b16 %v325
        %v399 = vunpack.c.l.b16 %v326
        %v400 = vunpack.c.l.b16 %v327
        %v401 = vunpack.c.l.b16 %v328
        %v402 = vunpack.c.l.b16 %v329
        %v403 = vpack.c.b16 %v372, %v371
        %v404 = vpack.c.b16 %v374, %v373
        %v405 = vpack.c.b16 %v376, %v375
        %v406 = vpack.c.b16 %v378, %v377
        %v407 = vpack.c.b16 %v380, %v379
        %v408 = vpack.c.b16 %v382, %v381
        %v409 = vpack.c.b16 %v384, %v383
        %v410 = vpack.c.b16 %v386, %v385
        %v411 = vpack.c.b16 %v388, %v387
        %v412 = vpack.c.b16 %v390, %v389
        %v413 = vpack.c.b16 %v392, %v391
        %v414 = vpack.c.b16 %v394, %v393
        %v415 = vpack.c.b16 %v396, %v395
        %v416 = vpack.c.b16 %v398, %v397
        %v417 = vpack.c.b16 %v400, %v399
        %v418 = vpack.c.b16 %v402, %v401
        %v421 = vunpack.c.l.b16 %v330
        %v422 = vunpack.c.l.b16 %v331
        %v423 = vpack.c.b16 %v422, %v421
        %vm425 = vcmask 130048
        %v427 = vsel %vm425, %v403, 0
        %v430 = vsel %vm425, %v404, 0
        %v433 = vsel %vm425, %v405, 0
        %v436 = vsel %vm425, %v406, 0
        %v439 = vsel %vm425, %v407, 0
        %v442 = vsel %vm425, %v408, 0
        %v445 = vsel %vm425, %v409, 0
        %v448 = vsel %vm425, %v410, 0
        %v451 = vsel %vm425, %v411, 0
        %v454 = vsel %vm425, %v412, 0
        %v457 = vsel %vm425, %v413, 0
        %v460 = vsel %vm425, %v414, 0
        %v463 = vsel %vm425, %v415, 0
        %v466 = vsel %vm425, %v416, 0
        %v469 = vsel %vm425, %v417, 0
        %v472 = vsel %vm425, %v418, 0
        %474 = vmatprep.subr.bf16.mxu0 0
        %475 = vmatpush1.bf16.msra.mxu0 %v423
        %476 = vmatprep.subr.bf16.mxu0 0
        %477 = vmatpush1.bf16.msra.mxu0 0
        %478 = vmatprep.subr.bf16.mxu0 0
        %479 = vmatpush1.bf16.msra.mxu0 0
        %480 = vmatprep.subr.bf16.mxu0 0
        %481 = vmatpush1.bf16.msra.mxu0 0
        %482 = vmatprep.subr.bf16.mxu0 0
        %483 = vmatpush1.bf16.msra.mxu0 0
        %484 = vmatprep.subr.bf16.mxu0 0
        %485 = vmatpush1.bf16.msra.mxu0 0
        %486 = vmatprep.subr.bf16.mxu0 0
        %487 = vmatpush1.bf16.msra.mxu0 0
        %488 = vmatprep.subr.bf16.mxu0 0
        %489 = vmatpush1.bf16.msra.mxu0 0
        %490 = vmatprep.subr.bf16.mxu0 0
        %491 = vmatpush1.bf16.msra.mxu0 0
        %492 = vmatprep.subr.bf16.mxu0 0
        %493 = vmatpush1.bf16.msra.mxu0 0
        %494 = vmatprep.subr.bf16.mxu0 0
        %495 = vmatpush1.bf16.msra.mxu0 0
        %496 = vmatprep.subr.bf16.mxu0 0
        %497 = vmatpush1.bf16.msra.mxu0 0
        %498 = vmatprep.subr.bf16.mxu0 0
        %499 = vmatpush1.bf16.msra.mxu0 0
        %500 = vmatprep.subr.bf16.mxu0 0
        %501 = vmatpush1.bf16.msra.mxu0 0
        %502 = vmatprep.subr.bf16.mxu0 0
        %503 = vmatpush1.bf16.msra.mxu0 0
        %504 = vmatprep.subr.bf16.mxu0 0
        %505 = vmatpush1.bf16.msra.mxu0 0
        %506 = vmatprep.mubr.bf16.mxu0 0
        %507 = vmatmul.mubr.bf16.gmra.mrb[0].mxu0 %v427
        %v508 = vpop.f32.mrb[0].mxu0
        %v509 = vadd.f32 %v337, %v508
        %v510 = vpop.f32.mrb[0].mxu0
        %v511 = vpop.f32.mrb[0].mxu0
        %v512 = vadd.f32 %v337, %v511
        %v513 = vpop.f32.mrb[0].mxu0
        %514 = vmatprep.mubr.bf16.mxu0 0
        %515 = vmatmul.mubr.bf16.gmra.mrb[0].mxu0 %v430
        %v516 = vpop.f32.mrb[0].mxu0
        %v517 = vadd.f32 %v337, %v516
        %v518 = vpop.f32.mrb[0].mxu0
        %v519 = vpop.f32.mrb[0].mxu0
        %v520 = vadd.f32 %v337, %v519
        %v521 = vpop.f32.mrb[0].mxu0
        %522 = vmatprep.mubr.bf16.mxu0 0
        %523 = vmatmul.mubr.bf16.gmra.mrb[0].mxu0 %v433
        %v524 = vpop.f32.mrb[0].mxu0
        %v525 = vadd.f32 %v337, %v524
        %v526 = vpop.f32.mrb[0].mxu0
        %v527 = vpop.f32.mrb[0].mxu0
        %v528 = vadd.f32 %v337, %v527
        %v529 = vpop.f32.mrb[0].mxu0
        %530 = vmatprep.mubr.bf16.mxu0 0
        %531 = vmatmul.mubr.bf16.gmra.mrb[0].mxu0 %v436
        %v532 = vpop.f32.mrb[0].mxu0
        %v533 = vadd.f32 %v337, %v532
        %v534 = vpop.f32.mrb[0].mxu0
        %v535 = vpop.f32.mrb[0].mxu0
        %v536 = vadd.f32 %v337, %v535
        %v537 = vpop.f32.mrb[0].mxu0
        %538 = vmatprep.mubr.bf16.mxu0 0
        %539 = vmatmul.mubr.bf16.gmra.mrb[0].mxu0 %v439
        %v540 = vpop.f32.mrb[0].mxu0
        %v541 = vadd.f32 %v337, %v540
        %v542 = vpop.f32.mrb[0].mxu0
        %v543 = vpop.f32.mrb[0].mxu0
        %v544 = vadd.f32 %v337, %v543
        %v545 = vpop.f32.mrb[0].mxu0
        %546 = vmatprep.mubr.bf16.mxu0 0
        %547 = vmatmul.mubr.bf16.gmra.mrb[0].mxu0 %v442
        %v548 = vpop.f32.mrb[0].mxu0
        %v549 = vadd.f32 %v337, %v548
        %v550 = vpop.f32.mrb[0].mxu0
        %v551 = vpop.f32.mrb[0].mxu0
        %v552 = vadd.f32 %v337, %v551
        %v553 = vpop.f32.mrb[0].mxu0
        %554 = vmatprep.mubr.bf16.mxu0 0
        %555 = vmatmul.mubr.bf16.gmra.mrb[0].mxu0 %v445
        %v556 = vpop.f32.mrb[0].mxu0
        %v557 = vadd.f32 %v337, %v556
        %v558 = vpop.f32.mrb[0].mxu0
        %v559 = vpop.f32.mrb[0].mxu0
        %v560 = vadd.f32 %v337, %v559
        %v561 = vpop.f32.mrb[0].mxu0
        %562 = vmatprep.mubr.bf16.mxu0 0
        %563 = vmatmul.mubr.bf16.gmra.mrb[0].mxu0 %v448
        %v564 = vpop.f32.mrb[0].mxu0
        %v565 = vadd.f32 %v337, %v564
        %v566 = vpop.f32.mrb[0].mxu0
        %v567 = vpop.f32.mrb[0].mxu0
        %v568 = vadd.f32 %v337, %v567
        %v569 = vpop.f32.mrb[0].mxu0
        %570 = vmatprep.mubr.bf16.mxu0 0
        %571 = vmatmul.mubr.bf16.gmra.mrb[0].mxu0 %v451
        %v572 = vpop.f32.mrb[0].mxu0
        %v573 = vadd.f32 %v337, %v572
        %v574 = vpop.f32.mrb[0].mxu0
        %v575 = vpop.f32.mrb[0].mxu0
        %v576 = vadd.f32 %v337, %v575
        %v577 = vpop.f32.mrb[0].mxu0
        %578 = vmatprep.mubr.bf16.mxu0 0
        %579 = vmatmul.mubr.bf16.gmra.mrb[0].mxu0 %v454
        %v580 = vpop.f32.mrb[0].mxu0
        %v581 = vadd.f32 %v337, %v580
        %v582 = vpop.f32.mrb[0].mxu0
        %v583 = vpop.f32.mrb[0].mxu0
        %v584 = vadd.f32 %v337, %v583
        %v585 = vpop.f32.mrb[0].mxu0
        %586 = vmatprep.mubr.bf16.mxu0 0
        %587 = vmatmul.mubr.bf16.gmra.mrb[0].mxu0 %v457
        %v588 = vpop.f32.mrb[0].mxu0
        %v589 = vadd.f32 %v337, %v588
        %v590 = vpop.f32.mrb[0].mxu0
        %v591 = vpop.f32.mrb[0].mxu0
        %v592 = vadd.f32 %v337, %v591
        %v593 = vpop.f32.mrb[0].mxu0
        %594 = vmatprep.mubr.bf16.mxu0 0
        %595 = vmatmul.mubr.bf16.gmra.mrb[0].mxu0 %v460
        %v596 = vpop.f32.mrb[0].mxu0
        %v597 = vadd.f32 %v337, %v596
        %v598 = vpop.f32.mrb[0].mxu0
        %v599 = vpop.f32.mrb[0].mxu0
        %v600 = vadd.f32 %v337, %v599
        %v601 = vpop.f32.mrb[0].mxu0
        %602 = vmatprep.mubr.bf16.mxu0 0
        %603 = vmatmul.mubr.bf16.gmra.mrb[0].mxu0 %v463
        %v604 = vpop.f32.mrb[0].mxu0
        %v605 = vadd.f32 %v337, %v604
        %v606 = vpop.f32.mrb[0].mxu0
        %v607 = vpop.f32.mrb[0].mxu0
        %v608 = vadd.f32 %v337, %v607
        %v609 = vpop.f32.mrb[0].mxu0
        %610 = vmatprep.mubr.bf16.mxu0 0
        %611 = vmatmul.mubr.bf16.gmra.mrb[0].mxu0 %v466
        %v612 = vpop.f32.mrb[0].mxu0
        %v613 = vadd.f32 %v337, %v612
        %v614 = vpop.f32.mrb[0].mxu0
        %v615 = vpop.f32.mrb[0].mxu0
        %v616 = vadd.f32 %v337, %v615
        %v617 = vpop.f32.mrb[0].mxu0
        %618 = vmatprep.mubr.bf16.mxu0 0
        %619 = vmatmul.mubr.bf16.gmra.mrb[0].mxu0 %v469
        %v620 = vpop.f32.mrb[0].mxu0
        %v621 = vadd.f32 %v337, %v620
        %v622 = vpop.f32.mrb[0].mxu0
        %v623 = vpop.f32.mrb[0].mxu0
        %v624 = vadd.f32 %v337, %v623
        %v625 = vpop.f32.mrb[0].mxu0
        %626 = vmatprep.mubr.bf16.mxu0 0
        %627 = vmatmul.mubr.bf16.gmra.mrb[0].mxu0 %v472
        %v628 = vpop.f32.mrb[0].mxu0
        %v629 = vadd.f32 %v337, %v628
        %v630 = vpop.f32.mrb[0].mxu0
        %v631 = vpop.f32.mrb[0].mxu0
        %v632 = vadd.f32 %v337, %v631
        %v633 = vpop.f32.mrb[0].mxu0
        %634 = vdwg.mxu0
        %v635 = vmax.f32 %v509, 0.0
        %v636 = vmax.f32 %v512, 0.0
        %v637 = vmax.f32 %v517, 0.0
        %v638 = vmax.f32 %v520, 0.0
        %v639 = vmax.f32 %v525, 0.0
        %v640 = vmax.f32 %v528, 0.0
        %v641 = vmax.f32 %v533, 0.0
        %v642 = vmax.f32 %v536, 0.0
        %v643 = vmax.f32 %v541, 0.0
        %v644 = vmax.f32 %v544, 0.0
        %v645 = vmax.f32 %v549, 0.0
        %v646 = vmax.f32 %v552, 0.0
        %v647 = vmax.f32 %v557, 0.0
        %v648 = vmax.f32 %v560, 0.0
        %v649 = vmax.f32 %v565, 0.0
        %v650 = vmax.f32 %v568, 0.0
        %v651 = vmax.f32 %v573, 0.0
        %v652 = vmax.f32 %v576, 0.0
        %v653 = vmax.f32 %v581, 0.0
        %v654 = vmax.f32 %v584, 0.0
        %v655 = vmax.f32 %v589, 0.0
        %v656 = vmax.f32 %v592, 0.0
        %v657 = vmax.f32 %v597, 0.0
        %v658 = vmax.f32 %v600, 0.0
        %v659 = vmax.f32 %v605, 0.0
        %v660 = vmax.f32 %v608, 0.0
        %v661 = vmax.f32 %v613, 0.0
        %v662 = vmax.f32 %v616, 0.0
        %v663 = vmax.f32 %v621, 0.0
        %v664 = vmax.f32 %v624, 0.0
        %v665 = vmax.f32 %v629, 0.0
        %v666 = vmax.f32 %v632, 0.0
        %v667 = vpack.c.bf16 %v636, %v635
        %v668 = vpack.c.bf16 %v638, %v637
        %v669 = vpack.c.bf16 %v640, %v639
        %v670 = vpack.c.bf16 %v642, %v641
        %v671 = vpack.c.bf16 %v644, %v643
        %v672 = vpack.c.bf16 %v646, %v645
        %v673 = vpack.c.bf16 %v648, %v647
        %v674 = vpack.c.bf16 %v650, %v649
        %v675 = vpack.c.bf16 %v652, %v651
        %v676 = vpack.c.bf16 %v654, %v653
        %v677 = vpack.c.bf16 %v656, %v655
        %v678 = vpack.c.bf16 %v658, %v657
        %v679 = vpack.c.bf16 %v660, %v659
        %v680 = vpack.c.bf16 %v662, %v661
        %v681 = vpack.c.bf16 %v664, %v663
        %v682 = vpack.c.bf16 %v666, %v665
        %vm683 = vcmask 27648
        %684 = vst.msk [vmem:[#allocation2] sm:$0xf] %vm683, 0
        %685 = vst.msk [vmem:[#allocation2 + $0x4] sm:$0xf] %vm683, 0
        %vm686 = vcmask 24576
        %687 = vst.msk [vmem:[#allocation2 + $0x8] sm:$0x1] %vm686, 0
        %s688 = scalar_lea.vmem [#allocation2], 204
        %689 = vst.msk [vmem:[%s688] sm:$0xf] %vm683, 0
        %690 = vst.msk [vmem:[%s688 + $0x4] sm:$0xf] %vm683, 0
        %691 = vst.msk [vmem:[%s688 + $0x8] sm:$0x1] %vm686, 0
        %vm692 = vcmask 24576
        %vm693 = vsmask.f32 256
        %vm694 = vmand %vm692, %vm693
        %v695 = vld [vmem:[#allocation2] sm:$0x1]
        %v696 = vsel %vm694, 0, %v695
        %697 = vst [vmem:[#allocation2] sm:$0x1] %v696
        %v698 = vld [vmem:[#allocation2 + $0xc] sm:$0x1]
        %v699 = vsel %vm694, 0, %v698
        %700 = vst [vmem:[#allocation2 + $0xc] sm:$0x1] %v699
        %v701 = vld [vmem:[#allocation2 + $0x18] sm:$0x1]
        %v702 = vsel %vm694, 0, %v701
        %703 = vst [vmem:[#allocation2 + $0x18] sm:$0x1] %v702
        %v704 = vld [vmem:[#allocation2 + $0x24] sm:$0x1]
        %v705 = vsel %vm694, 0, %v704
        %706 = vst [vmem:[#allocation2 + $0x24] sm:$0x1] %v705
        %v707 = vld [vmem:[#allocation2 + $0x30] sm:$0x1]
        %v708 = vsel %vm694, 0, %v707
        %709 = vst [vmem:[#allocation2 + $0x30] sm:$0x1] %v708
        %v710 = vld [vmem:[#allocation2 + $0x3c] sm:$0x1]
        %v711 = vsel %vm694, 0, %v710
        %712 = vst [vmem:[#allocation2 + $0x3c] sm:$0x1] %v711
        %v713 = vld [vmem:[#allocation2 + $0x48] sm:$0x1]
        %v714 = vsel %vm694, 0, %v713
        %715 = vst [vmem:[#allocation2 + $0x48] sm:$0x1] %v714
        %v716 = vld [vmem:[#allocation2 + $0x54] sm:$0x1]
        %v717 = vsel %vm694, 0, %v716
        %718 = vst [vmem:[#allocation2 + $0x54] sm:$0x1] %v717
        %v719 = vld [vmem:[#allocation2 + $0x60] sm:$0x1]
        %v720 = vsel %vm694, 0, %v719
        %721 = vst [vmem:[#allocation2 + $0x60] sm:$0x1] %v720
        %v722 = vld [vmem:[#allocation2 + $0x6c] sm:$0x1]
        %v723 = vsel %vm694, 0, %v722
        %724 = vst [vmem:[#allocation2 + $0x6c] sm:$0x1] %v723
        %v725 = vld [vmem:[#allocation2 + $0x78] sm:$0x1]
        %v726 = vsel %vm694, 0, %v725
        %727 = vst [vmem:[#allocation2 + $0x78] sm:$0x1] %v726
        %v728 = vld [vmem:[#allocation2 + $0x84] sm:$0x1]
        %v729 = vsel %vm694, 0, %v728
        %730 = vst [vmem:[#allocation2 + $0x84] sm:$0x1] %v729
        %v731 = vld [vmem:[#allocation2 + $0x90] sm:$0x1]
        %v732 = vsel %vm694, 0, %v731
        %733 = vst [vmem:[#allocation2 + $0x90] sm:$0x1] %v732
        %v734 = vld [vmem:[#allocation2 + $0x9c] sm:$0x1]
        %v735 = vsel %vm694, 0, %v734
        %736 = vst [vmem:[#allocation2 + $0x9c] sm:$0x1] %v735
        %v737 = vld [vmem:[#allocation2 + $0xa8] sm:$0x1]
        %v738 = vsel %vm694, 0, %v737
        %739 = vst [vmem:[#allocation2 + $0xa8] sm:$0x1] %v738
        %v740 = vld [vmem:[#allocation2 + $0xb4] sm:$0x1]
        %v741 = vsel %vm694, 0, %v740
        %742 = vst [vmem:[#allocation2 + $0xb4] sm:$0x1] %v741
        %v743 = vld [vmem:[#allocation2 + $0xc0] sm:$0x1]
        %v744 = vsel %vm694, 0, %v743
        %745 = vst [vmem:[#allocation2 + $0xc0] sm:$0x1] %v744
        %v746 = vld [vmem:[#allocation2 + $0xcc] sm:$0x1]
        %v747 = vsel %vm694, 0, %v746
        %748 = vst [vmem:[#allocation2 + $0xcc] sm:$0x1] %v747
        %vm749 = vsmask.f32 7938
        %vm750 = vmand %vm692, %vm749
        %v751 = vld [vmem:[#allocation2 + $0x8] sm:$0x1]
        %v752 = vsel %vm750, 0, %v751
        %753 = vst [vmem:[#allocation2 + $0x8] sm:$0x1] %v752
        %v754 = vld [vmem:[#allocation2 + $0x14] sm:$0x1]
        %v755 = vsel %vm750, 0, %v754
        %756 = vst [vmem:[#allocation2 + $0x14] sm:$0x1] %v755
        %v757 = vld [vmem:[#allocation2 + $0x20] sm:$0x1]
        %v758 = vsel %vm750, 0, %v757
        %759 = vst [vmem:[#allocation2 + $0x20] sm:$0x1] %v758
        %v760 = vld [vmem:[#allocation2 + $0x2c] sm:$0x1]
        %v761 = vsel %vm750, 0, %v760
        %762 = vst [vmem:[#allocation2 + $0x2c] sm:$0x1] %v761
        %v763 = vld [vmem:[#allocation2 + $0x38] sm:$0x1]
        %v764 = vsel %vm750, 0, %v763
        %765 = vst [vmem:[#allocation2 + $0x38] sm:$0x1] %v764
        %v766 = vld [vmem:[#allocation2 + $0x44] sm:$0x1]
        %v767 = vsel %vm750, 0, %v766
        %768 = vst [vmem:[#allocation2 + $0x44] sm:$0x1] %v767
        %v769 = vld [vmem:[#allocation2 + $0x50] sm:$0x1]
        %v770 = vsel %vm750, 0, %v769
        %771 = vst [vmem:[#allocation2 + $0x50] sm:$0x1] %v770
        %v772 = vld [vmem:[#allocation2 + $0x5c] sm:$0x1]
        %v773 = vsel %vm750, 0, %v772
        %774 = vst [vmem:[#allocation2 + $0x5c] sm:$0x1] %v773
        %v775 = vld [vmem:[#allocation2 + $0x68] sm:$0x1]
        %v776 = vsel %vm750, 0, %v775
        %777 = vst [vmem:[#allocation2 + $0x68] sm:$0x1] %v776
        %v778 = vld [vmem:[#allocation2 + $0x74] sm:$0x1]
        %v779 = vsel %vm750, 0, %v778
        %780 = vst [vmem:[#allocation2 + $0x74] sm:$0x1] %v779
        %v781 = vld [vmem:[#allocation2 + $0x80] sm:$0x1]
        %v782 = vsel %vm750, 0, %v781
        %783 = vst [vmem:[#allocation2 + $0x80] sm:$0x1] %v782
        %v784 = vld [vmem:[#allocation2 + $0x8c] sm:$0x1]
        %v785 = vsel %vm750, 0, %v784
        %786 = vst [vmem:[#allocation2 + $0x8c] sm:$0x1] %v785
        %v787 = vld [vmem:[#allocation2 + $0x98] sm:$0x1]
        %v788 = vsel %vm750, 0, %v787
        %789 = vst [vmem:[#allocation2 + $0x98] sm:$0x1] %v788
        %v790 = vld [vmem:[#allocation2 + $0xa4] sm:$0x1]
        %v791 = vsel %vm750, 0, %v790
        %792 = vst [vmem:[#allocation2 + $0xa4] sm:$0x1] %v791
        %v793 = vld [vmem:[#allocation2 + $0xb0] sm:$0x1]
        %v794 = vsel %vm750, 0, %v793
        %795 = vst [vmem:[#allocation2 + $0xb0] sm:$0x1] %v794
        %v796 = vld [vmem:[#allocation2 + $0xbc] sm:$0x1]
        %v797 = vsel %vm750, 0, %v796
        %798 = vst [vmem:[#allocation2 + $0xbc] sm:$0x1] %v797
        %v799 = vld [vmem:[#allocation2 + $0xc8] sm:$0x1]
        %v800 = vsel %vm750, 0, %v799
        %801 = vst [vmem:[#allocation2 + $0xc8] sm:$0x1] %v800
        %v802 = vld [vmem:[#allocation2 + $0xd4] sm:$0x1]
        %v803 = vsel %vm750, 0, %v802
        %804 = vst [vmem:[#allocation2 + $0xd4] sm:$0x1] %v803
        %v821 = vunpack.c.l.b16 %v667
        %v822 = vunpack.c.h.b16 %v667
        %v823 = vunpack.c.l.b16 %v668
        %v824 = vunpack.c.h.b16 %v668
        %v825 = vunpack.c.l.b16 %v669
        %v826 = vunpack.c.h.b16 %v669
        %v827 = vunpack.c.l.b16 %v670
        %v828 = vunpack.c.h.b16 %v670
        %v829 = vunpack.c.l.b16 %v671
        %v830 = vunpack.c.h.b16 %v671
        %v831 = vunpack.c.l.b16 %v672
        %v832 = vunpack.c.h.b16 %v672
        %v833 = vunpack.c.l.b16 %v673
        %v834 = vunpack.c.h.b16 %v673
        %v835 = vunpack.c.l.b16 %v674
        %v836 = vunpack.c.h.b16 %v674
        %v837 = vunpack.c.l.b16 %v675
        %v838 = vunpack.c.h.b16 %v675
        %v839 = vunpack.c.l.b16 %v676
        %v840 = vunpack.c.h.b16 %v676
        %v841 = vunpack.c.l.b16 %v677
        %v842 = vunpack.c.h.b16 %v677
        %v843 = vunpack.c.l.b16 %v678
        %v844 = vunpack.c.h.b16 %v678
        %v845 = vunpack.c.l.b16 %v679
        %v846 = vunpack.c.h.b16 %v679
        %v847 = vunpack.c.l.b16 %v680
        %v848 = vunpack.c.h.b16 %v680
        %v849 = vunpack.c.l.b16 %v681
        %v850 = vunpack.c.h.b16 %v681
        %v851 = vunpack.c.l.b16 %v682
        %v852 = vunpack.c.h.b16 %v682
        %v853 = vpack.c.b16 %v821, %v821
        %v854 = vpack.c.b16 %v822, %v822
        %v855 = vpack.c.b16 %v823, %v823
        %v856 = vpack.c.b16 %v824, %v824
        %v857 = vpack.c.b16 %v825, %v825
        %v858 = vpack.c.b16 %v826, %v826
        %v859 = vpack.c.b16 %v827, %v827
        %v860 = vpack.c.b16 %v828, %v828
        %v861 = vpack.c.b16 %v829, %v829
        %v862 = vpack.c.b16 %v830, %v830
        %v863 = vpack.c.b16 %v831, %v831
        %v864 = vpack.c.b16 %v832, %v832
        %v865 = vpack.c.b16 %v833, %v833
        %v866 = vpack.c.b16 %v834, %v834
        %v867 = vpack.c.b16 %v835, %v835
        %v868 = vpack.c.b16 %v836, %v836
        %v869 = vpack.c.b16 %v837, %v837
        %v870 = vpack.c.b16 %v838, %v838
        %v871 = vpack.c.b16 %v839, %v839
        %v872 = vpack.c.b16 %v840, %v840
        %v873 = vpack.c.b16 %v841, %v841
        %v874 = vpack.c.b16 %v842, %v842
        %v875 = vpack.c.b16 %v843, %v843
        %v876 = vpack.c.b16 %v844, %v844
        %v877 = vpack.c.b16 %v845, %v845
        %v878 = vpack.c.b16 %v846, %v846
        %v879 = vpack.c.b16 %v847, %v847
        %v880 = vpack.c.b16 %v848, %v848
        %v881 = vpack.c.b16 %v849, %v849
        %v882 = vpack.c.b16 %v850, %v850
        %v883 = vpack.c.b16 %v851, %v851
        %v884 = vpack.c.b16 %v852, %v852
        %vm885 = vsmask.f32 4368
        %vm886 = vmor %vm693, %vm885
        %v888 = vshrl.u32 %v853, 16
        %v890 = vrot.slane %v888, 7
        %v891 = vshll.u32 %v853, 16
        %v893 = vor.u32 %v890, %v891
        %v894 = vrot.slane %v890, 4
        %v896 = vshrl.u32 %v854, 16
        %v898 = vrot.slane %v896, 7
        %v899 = vshll.u32 %v854, 16
        %v901 = vor.u32 %v898, %v899
        %v902 = vsel %vm886, %v894, %v901
        %v903 = vrot.slane %v898, 4
        %v905 = vshrl.u32 %v855, 16
        %v907 = vrot.slane %v905, 7
        %v908 = vshll.u32 %v855, 16
        %v910 = vor.u32 %v907, %v908
        %v911 = vrot.slane %v907, 4
        %v913 = vshrl.u32 %v856, 16
        %v915 = vrot.slane %v913, 7
        %v916 = vshll.u32 %v856, 16
        %v918 = vor.u32 %v915, %v916
        %v919 = vsel %vm886, %v911, %v918
        %v920 = vrot.slane %v915, 4
        %v922 = vshrl.u32 %v857, 16
        %v924 = vrot.slane %v922, 7
        %v925 = vshll.u32 %v857, 16
        %v927 = vor.u32 %v924, %v925
        %v928 = vrot.slane %v924, 4
        %v930 = vshrl.u32 %v858, 16
        %v932 = vrot.slane %v930, 7
        %v933 = vshll.u32 %v858, 16
        %v935 = vor.u32 %v932, %v933
        %v936 = vsel %vm886, %v928, %v935
        %v937 = vrot.slane %v932, 4
        %v939 = vshrl.u32 %v859, 16
        %v941 = vrot.slane %v939, 7
        %v942 = vshll.u32 %v859, 16
        %v944 = vor.u32 %v941, %v942
        %v945 = vrot.slane %v941, 4
        %v947 = vshrl.u32 %v860, 16
        %v949 = vrot.slane %v947, 7
        %v950 = vshll.u32 %v860, 16
        %v952 = vor.u32 %v949, %v950
        %v953 = vsel %vm886, %v945, %v952
        %v954 = vrot.slane %v949, 4
        %v956 = vshrl.u32 %v861, 16
        %v958 = vrot.slane %v956, 7
        %v959 = vshll.u32 %v861, 16
        %v961 = vor.u32 %v958, %v959
        %v962 = vrot.slane %v958, 4
        %v964 = vshrl.u32 %v862, 16
        %v966 = vrot.slane %v964, 7
        %v967 = vshll.u32 %v862, 16
        %v969 = vor.u32 %v966, %v967
        %v970 = vsel %vm886, %v962, %v969
        %v971 = vrot.slane %v966, 4
        %v973 = vshrl.u32 %v863, 16
        %v975 = vrot.slane %v973, 7
        %v976 = vshll.u32 %v863, 16
        %v978 = vor.u32 %v975, %v976
        %v979 = vrot.slane %v975, 4
        %v981 = vshrl.u32 %v864, 16
        %v983 = vrot.slane %v981, 7
        %v984 = vshll.u32 %v864, 16
        %v986 = vor.u32 %v983, %v984
        %v987 = vsel %vm886, %v979, %v986
        %v988 = vrot.slane %v983, 4
        %v990 = vshrl.u32 %v865, 16
        %v992 = vrot.slane %v990, 7
        %v993 = vshll.u32 %v865, 16
        %v995 = vor.u32 %v992, %v993
        %v996 = vrot.slane %v992, 4
        %v998 = vshrl.u32 %v866, 16
        %v1000 = vrot.slane %v998, 7
        %v1001 = vshll.u32 %v866, 16
        %v1003 = vor.u32 %v1000, %v1001
        %v1004 = vsel %vm886, %v996, %v1003
        %v1005 = vrot.slane %v1000, 4
        %v1007 = vshrl.u32 %v867, 16
        %v1009 = vrot.slane %v1007, 7
        %v1010 = vshll.u32 %v867, 16
        %v1012 = vor.u32 %v1009, %v1010
        %v1013 = vrot.slane %v1009, 4
        %v1015 = vshrl.u32 %v868, 16
        %v1017 = vrot.slane %v1015, 7
        %v1018 = vshll.u32 %v868, 16
        %v1020 = vor.u32 %v1017, %v1018
        %v1021 = vsel %vm886, %v1013, %v1020
        %v1022 = vrot.slane %v1017, 4
        %v1024 = vshrl.u32 %v869, 16
        %v1026 = vrot.slane %v1024, 7
        %v1027 = vshll.u32 %v869, 16
        %v1029 = vor.u32 %v1026, %v1027
        %v1030 = vrot.slane %v1026, 4
        %v1032 = vshrl.u32 %v870, 16
        %v1034 = vrot.slane %v1032, 7
        %v1035 = vshll.u32 %v870, 16
        %v1037 = vor.u32 %v1034, %v1035
        %v1038 = vsel %vm886, %v1030, %v1037
        %v1039 = vrot.slane %v1034, 4
        %v1041 = vshrl.u32 %v871, 16
        %v1043 = vrot.slane %v1041, 7
        %v1044 = vshll.u32 %v871, 16
        %v1046 = vor.u32 %v1043, %v1044
        %v1047 = vrot.slane %v1043, 4
        %v1049 = vshrl.u32 %v872, 16
        %v1051 = vrot.slane %v1049, 7
        %v1052 = vshll.u32 %v872, 16
        %v1054 = vor.u32 %v1051, %v1052
        %v1055 = vsel %vm886, %v1047, %v1054
        %v1056 = vrot.slane %v1051, 4
        %v1058 = vshrl.u32 %v873, 16
        %v1060 = vrot.slane %v1058, 7
        %v1061 = vshll.u32 %v873, 16
        %v1063 = vor.u32 %v1060, %v1061
        %v1064 = vrot.slane %v1060, 4
        %v1066 = vshrl.u32 %v874, 16
        %v1068 = vrot.slane %v1066, 7
        %v1069 = vshll.u32 %v874, 16
        %v1071 = vor.u32 %v1068, %v1069
        %v1072 = vsel %vm886, %v1064, %v1071
        %v1073 = vrot.slane %v1068, 4
        %v1075 = vshrl.u32 %v875, 16
        %v1077 = vrot.slane %v1075, 7
        %v1078 = vshll.u32 %v875, 16
        %v1080 = vor.u32 %v1077, %v1078
        %v1081 = vrot.slane %v1077, 4
        %v1083 = vshrl.u32 %v876, 16
        %v1085 = vrot.slane %v1083, 7
        %v1086 = vshll.u32 %v876, 16
        %v1088 = vor.u32 %v1085, %v1086
        %v1089 = vsel %vm886, %v1081, %v1088
        %v1090 = vrot.slane %v1085, 4
        %v1092 = vshrl.u32 %v877, 16
        %v1094 = vrot.slane %v1092, 7
        %v1095 = vshll.u32 %v877, 16
        %v1097 = vor.u32 %v1094, %v1095
        %v1098 = vrot.slane %v1094, 4
        %v1100 = vshrl.u32 %v878, 16
        %v1102 = vrot.slane %v1100, 7
        %v1103 = vshll.u32 %v878, 16
        %v1105 = vor.u32 %v1102, %v1103
        %v1106 = vsel %vm886, %v1098, %v1105
        %v1107 = vrot.slane %v1102, 4
        %v1109 = vshrl.u32 %v879, 16
        %v1111 = vrot.slane %v1109, 7
        %v1112 = vshll.u32 %v879, 16
        %v1114 = vor.u32 %v1111, %v1112
        %v1115 = vrot.slane %v1111, 4
        %v1117 = vshrl.u32 %v880, 16
        %v1119 = vrot.slane %v1117, 7
        %v1120 = vshll.u32 %v880, 16
        %v1122 = vor.u32 %v1119, %v1120
        %v1123 = vsel %vm886, %v1115, %v1122
        %v1124 = vrot.slane %v1119, 4
        %v1126 = vshrl.u32 %v881, 16
        %v1128 = vrot.slane %v1126, 7
        %v1129 = vshll.u32 %v881, 16
        %v1131 = vor.u32 %v1128, %v1129
        %v1132 = vrot.slane %v1128, 4
        %v1134 = vshrl.u32 %v882, 16
        %v1136 = vrot.slane %v1134, 7
        %v1137 = vshll.u32 %v882, 16
        %v1139 = vor.u32 %v1136, %v1137
        %v1140 = vsel %vm886, %v1132, %v1139
        %v1141 = vrot.slane %v1136, 4
        %v1143 = vshrl.u32 %v883, 16
        %v1145 = vrot.slane %v1143, 7
        %v1146 = vshll.u32 %v883, 16
        %v1148 = vor.u32 %v1145, %v1146
        %v1149 = vrot.slane %v1145, 4
        %v1151 = vshrl.u32 %v884, 16
        %v1153 = vrot.slane %v1151, 7
        %v1154 = vshll.u32 %v884, 16
        %v1156 = vor.u32 %v1153, %v1154
        %v1157 = vsel %vm886, %v1149, %v1156
        %v1158 = vrot.slane %v1153, 4
        %s1207 = scalar_lea.vmem [#allocation2], 12
        %vm1208 = vcmask 27648
        %vm1209 = vmand %vm1208, %vm749
        %v1210 = vld [vmem:[%s1207] sm:$0xf]
        %v1211 = vsel %vm1209, %v893, %v1210
        %1212 = vst [vmem:[%s1207] sm:$0xf] %v1211
        %1213 = vst.msk [vmem:[%s1207 + $0x4] sm:$0xf] %vm683, %v902
        %v1214 = vld [vmem:[%s1207 + $0x8] sm:$0x1]
        %v1215 = vsel %vm694, %v903, %v1214
        %1216 = vst [vmem:[%s1207 + $0x8] sm:$0x1] %v1215
        %v1217 = vld [vmem:[%s1207 + $0xc] sm:$0xf]
        %v1218 = vsel %vm1209, %v910, %v1217
        %1219 = vst [vmem:[%s1207 + $0xc] sm:$0xf] %v1218
        %1220 = vst.msk [vmem:[%s1207 + $0x10] sm:$0xf] %vm683, %v919
        %v1221 = vld [vmem:[%s1207 + $0x14] sm:$0x1]
        %v1222 = vsel %vm694, %v920, %v1221
        %1223 = vst [vmem:[%s1207 + $0x14] sm:$0x1] %v1222
        %v1224 = vld [vmem:[%s1207 + $0x18] sm:$0xf]
        %v1225 = vsel %vm1209, %v927, %v1224
        %1226 = vst [vmem:[%s1207 + $0x18] sm:$0xf] %v1225
        %1227 = vst.msk [vmem:[%s1207 + $0x1c] sm:$0xf] %vm683, %v936
        %v1228 = vld [vmem:[%s1207 + $0x20] sm:$0x1]
        %v1229 = vsel %vm694, %v937, %v1228
        %1230 = vst [vmem:[%s1207 + $0x20] sm:$0x1] %v1229
        %v1231 = vld [vmem:[%s1207 + $0x24] sm:$0xf]
        %v1232 = vsel %vm1209, %v944, %v1231
        %1233 = vst [vmem:[%s1207 + $0x24] sm:$0xf] %v1232
        %1234 = vst.msk [vmem:[%s1207 + $0x28] sm:$0xf] %vm683, %v953
        %v1235 = vld [vmem:[%s1207 + $0x2c] sm:$0x1]
        %v1236 = vsel %vm694, %v954, %v1235
        %1237 = vst [vmem:[%s1207 + $0x2c] sm:$0x1] %v1236
        %v1238 = vld [vmem:[%s1207 + $0x30] sm:$0xf]
        %v1239 = vsel %vm1209, %v961, %v1238
        %1240 = vst [vmem:[%s1207 + $0x30] sm:$0xf] %v1239
        %1241 = vst.msk [vmem:[%s1207 + $0x34] sm:$0xf] %vm683, %v970
        %v1242 = vld [vmem:[%s1207 + $0x38] sm:$0x1]
        %v1243 = vsel %vm694, %v971, %v1242
        %1244 = vst [vmem:[%s1207 + $0x38] sm:$0x1] %v1243
        %v1245 = vld [vmem:[%s1207 + $0x3c] sm:$0xf]
        %v1246 = vsel %vm1209, %v978, %v1245
        %1247 = vst [vmem:[%s1207 + $0x3c] sm:$0xf] %v1246
        %1248 = vst.msk [vmem:[%s1207 + $0x40] sm:$0xf] %vm683, %v987
        %v1249 = vld [vmem:[%s1207 + $0x44] sm:$0x1]
        %v1250 = vsel %vm694, %v988, %v1249
        %1251 = vst [vmem:[%s1207 + $0x44] sm:$0x1] %v1250
        %v1252 = vld [vmem:[%s1207 + $0x48] sm:$0xf]
        %v1253 = vsel %vm1209, %v995, %v1252
        %1254 = vst [vmem:[%s1207 + $0x48] sm:$0xf] %v1253
        %1255 = vst.msk [vmem:[%s1207 + $0x4c] sm:$0xf] %vm683, %v1004
        %v1256 = vld [vmem:[%s1207 + $0x50] sm:$0x1]
        %v1257 = vsel %vm694, %v1005, %v1256
        %1258 = vst [vmem:[%s1207 + $0x50] sm:$0x1] %v1257
        %v1259 = vld [vmem:[%s1207 + $0x54] sm:$0xf]
        %v1260 = vsel %vm1209, %v1012, %v1259
        %1261 = vst [vmem:[%s1207 + $0x54] sm:$0xf] %v1260
        %1262 = vst.msk [vmem:[%s1207 + $0x58] sm:$0xf] %vm683, %v1021
        %v1263 = vld [vmem:[%s1207 + $0x5c] sm:$0x1]
        %v1264 = vsel %vm694, %v1022, %v1263
        %1265 = vst [vmem:[%s1207 + $0x5c] sm:$0x1] %v1264
        %v1266 = vld [vmem:[%s1207 + $0x60] sm:$0xf]
        %v1267 = vsel %vm1209, %v1029, %v1266
        %1268 = vst [vmem:[%s1207 + $0x60] sm:$0xf] %v1267
        %1269 = vst.msk [vmem:[%s1207 + $0x64] sm:$0xf] %vm683, %v1038
        %v1270 = vld [vmem:[%s1207 + $0x68] sm:$0x1]
        %v1271 = vsel %vm694, %v1039, %v1270
        %1272 = vst [vmem:[%s1207 + $0x68] sm:$0x1] %v1271
        %v1273 = vld [vmem:[%s1207 + $0x6c] sm:$0xf]
        %v1274 = vsel %vm1209, %v1046, %v1273
        %1275 = vst [vmem:[%s1207 + $0x6c] sm:$0xf] %v1274
        %1276 = vst.msk [vmem:[%s1207 + $0x70] sm:$0xf] %vm683, %v1055
        %v1277 = vld [vmem:[%s1207 + $0x74] sm:$0x1]
        %v1278 = vsel %vm694, %v1056, %v1277
        %1279 = vst [vmem:[%s1207 + $0x74] sm:$0x1] %v1278
        %v1280 = vld [vmem:[%s1207 + $0x78] sm:$0xf]
        %v1281 = vsel %vm1209, %v1063, %v1280
        %1282 = vst [vmem:[%s1207 + $0x78] sm:$0xf] %v1281
        %1283 = vst.msk [vmem:[%s1207 + $0x7c] sm:$0xf] %vm683, %v1072
        %v1284 = vld [vmem:[%s1207 + $0x80] sm:$0x1]
        %v1285 = vsel %vm694, %v1073, %v1284
        %1286 = vst [vmem:[%s1207 + $0x80] sm:$0x1] %v1285
        %v1287 = vld [vmem:[%s1207 + $0x84] sm:$0xf]
        %v1288 = vsel %vm1209, %v1080, %v1287
        %1289 = vst [vmem:[%s1207 + $0x84] sm:$0xf] %v1288
        %1290 = vst.msk [vmem:[%s1207 + $0x88] sm:$0xf] %vm683, %v1089
        %v1291 = vld [vmem:[%s1207 + $0x8c] sm:$0x1]
        %v1292 = vsel %vm694, %v1090, %v1291
        %1293 = vst [vmem:[%s1207 + $0x8c] sm:$0x1] %v1292
        %v1294 = vld [vmem:[%s1207 + $0x90] sm:$0xf]
        %v1295 = vsel %vm1209, %v1097, %v1294
        %1296 = vst [vmem:[%s1207 + $0x90] sm:$0xf] %v1295
        %1297 = vst.msk [vmem:[%s1207 + $0x94] sm:$0xf] %vm683, %v1106
        %v1298 = vld [vmem:[%s1207 + $0x98] sm:$0x1]
        %v1299 = vsel %vm694, %v1107, %v1298
        %1300 = vst [vmem:[%s1207 + $0x98] sm:$0x1] %v1299
        %v1301 = vld [vmem:[%s1207 + $0x9c] sm:$0xf]
        %v1302 = vsel %vm1209, %v1114, %v1301
        %1303 = vst [vmem:[%s1207 + $0x9c] sm:$0xf] %v1302
        %1304 = vst.msk [vmem:[%s1207 + $0xa0] sm:$0xf] %vm683, %v1123
        %v1305 = vld [vmem:[%s1207 + $0xa4] sm:$0x1]
        %v1306 = vsel %vm694, %v1124, %v1305
        %1307 = vst [vmem:[%s1207 + $0xa4] sm:$0x1] %v1306
        %v1308 = vld [vmem:[%s1207 + $0xa8] sm:$0xf]
        %v1309 = vsel %vm1209, %v1131, %v1308
        %1310 = vst [vmem:[%s1207 + $0xa8] sm:$0xf] %v1309
        %1311 = vst.msk [vmem:[%s1207 + $0xac] sm:$0xf] %vm683, %v1140
        %v1312 = vld [vmem:[%s1207 + $0xb0] sm:$0x1]
        %v1313 = vsel %vm694, %v1141, %v1312
        %1314 = vst [vmem:[%s1207 + $0xb0] sm:$0x1] %v1313
        %v1315 = vld [vmem:[%s1207 + $0xb4] sm:$0xf]
        %v1316 = vsel %vm1209, %v1148, %v1315
        %1317 = vst [vmem:[%s1207 + $0xb4] sm:$0xf] %v1316
        %1318 = vst.msk [vmem:[%s1207 + $0xb8] sm:$0xf] %vm683, %v1157
        %v1319 = vld [vmem:[%s1207 + $0xbc] sm:$0x1]
        %v1320 = vsel %vm694, %v1158, %v1319
        %1321 = vst [vmem:[%s1207 + $0xbc] sm:$0x1] %v1320
        %v1322 = vld [vmem:[#allocation2] sm:$0xf]
        %v1323 = vld [vmem:[#allocation2 + $0x4] sm:$0xf]
        %v1324 = vld [vmem:[#allocation2 + $0x8] sm:$0x1]
        %v1325 = vld [vmem:[#allocation2 + $0xc] sm:$0xf]
        %v1326 = vld [vmem:[#allocation2 + $0x10] sm:$0xf]
        %v1327 = vld [vmem:[#allocation2 + $0x14] sm:$0x1]
        %v1328 = vld [vmem:[#allocation2 + $0x18] sm:$0xf]
        %v1329 = vld [vmem:[#allocation2 + $0x1c] sm:$0xf]
        %v1330 = vld [vmem:[#allocation2 + $0x20] sm:$0x1]
        %v1331 = vld [vmem:[#allocation2 + $0x24] sm:$0xf]
        %v1332 = vld [vmem:[#allocation2 + $0x28] sm:$0xf]
        %v1333 = vld [vmem:[#allocation2 + $0x2c] sm:$0x1]
        %v1334 = vld [vmem:[#allocation2 + $0x30] sm:$0xf]
        %v1335 = vld [vmem:[#allocation2 + $0x34] sm:$0xf]
        %v1336 = vld [vmem:[#allocation2 + $0x38] sm:$0x1]
        %v1337 = vld [vmem:[#allocation2 + $0x3c] sm:$0xf]
        %v1338 = vld [vmem:[#allocation2 + $0x40] sm:$0xf]
        %v1339 = vld [vmem:[#allocation2 + $0x44] sm:$0x1]
        %v1340 = vld [vmem:[#allocation2 + $0x48] sm:$0xf]
        %v1341 = vld [vmem:[#allocation2 + $0x4c] sm:$0xf]
        %v1342 = vld [vmem:[#allocation2 + $0x50] sm:$0x1]
        %v1343 = vld [vmem:[#allocation2 + $0x54] sm:$0xf]
        %v1344 = vld [vmem:[#allocation2 + $0x58] sm:$0xf]
        %v1345 = vld [vmem:[#allocation2 + $0x5c] sm:$0x1]
        %v1346 = vld [vmem:[#allocation2 + $0x60] sm:$0xf]
        %v1347 = vld [vmem:[#allocation2 + $0x64] sm:$0xf]
        %v1348 = vld [vmem:[#allocation2 + $0x68] sm:$0x1]
        %v1349 = vld [vmem:[#allocation2 + $0x6c] sm:$0xf]
        %v1350 = vld [vmem:[#allocation2 + $0x70] sm:$0xf]
        %v1351 = vld [vmem:[#allocation2 + $0x74] sm:$0x1]
        %v1352 = vld [vmem:[#allocation2 + $0x78] sm:$0xf]
        %v1353 = vld [vmem:[#allocation2 + $0x7c] sm:$0xf]
        %v1354 = vld [vmem:[#allocation2 + $0x80] sm:$0x1]
        %v1355 = vld [vmem:[#allocation2 + $0x84] sm:$0xf]
        %v1356 = vld [vmem:[#allocation2 + $0x88] sm:$0xf]
        %v1357 = vld [vmem:[#allocation2 + $0x8c] sm:$0x1]
        %v1358 = vld [vmem:[#allocation2 + $0x90] sm:$0xf]
        %v1359 = vld [vmem:[#allocation2 + $0x94] sm:$0xf]
        %v1360 = vld [vmem:[#allocation2 + $0x98] sm:$0x1]
        %v1361 = vld [vmem:[#allocation2 + $0x9c] sm:$0xf]
        %v1362 = vld [vmem:[#allocation2 + $0xa0] sm:$0xf]
        %v1363 = vld [vmem:[#allocation2 + $0xa4] sm:$0x1]
        %v1364 = vld [vmem:[#allocation2 + $0xa8] sm:$0xf]
        %v1365 = vld [vmem:[#allocation2 + $0xac] sm:$0xf]
        %v1366 = vld [vmem:[#allocation2 + $0xb0] sm:$0x1]
        %v1367 = vld [vmem:[#allocation2 + $0xb4] sm:$0xf]
        %v1368 = vld [vmem:[#allocation2 + $0xb8] sm:$0xf]
        %v1369 = vld [vmem:[#allocation2 + $0xbc] sm:$0x1]
        %v1370 = vld [vmem:[#allocation2 + $0xc0] sm:$0xf]
        %v1371 = vld [vmem:[#allocation2 + $0xc4] sm:$0xf]
        %v1372 = vld [vmem:[#allocation2 + $0xc8] sm:$0x1]
        %v1373 = vld [vmem:[#allocation2 + $0xcc] sm:$0xf]
        %v1374 = vld [vmem:[#allocation2 + $0xd0] sm:$0xf]
        %v1375 = vld [vmem:[#allocation2 + $0xd4] sm:$0x1]
        %v1424 = vunpack.c.l.b16 %v1322
        %v1425 = vunpack.c.l.b16 %v1323
        %v1426 = vunpack.c.l.b16 %v1324
        %v1427 = vunpack.c.l.b16 %v1325
        %v1428 = vunpack.c.l.b16 %v1326
        %v1429 = vunpack.c.l.b16 %v1327
        %v1430 = vunpack.c.l.b16 %v1328
        %v1431 = vunpack.c.l.b16 %v1329
        %v1432 = vunpack.c.l.b16 %v1330
        %v1433 = vunpack.c.l.b16 %v1331
        %v1434 = vunpack.c.l.b16 %v1332
        %v1435 = vunpack.c.l.b16 %v1333
        %v1436 = vunpack.c.l.b16 %v1334
        %v1437 = vunpack.c.l.b16 %v1335
        %v1438 = vunpack.c.l.b16 %v1336
        %v1439 = vunpack.c.l.b16 %v1337
        %v1440 = vunpack.c.l.b16 %v1338
        %v1441 = vunpack.c.l.b16 %v1339
        %v1442 = vunpack.c.l.b16 %v1340
        %v1443 = vunpack.c.l.b16 %v1341
        %v1444 = vunpack.c.l.b16 %v1342
        %v1445 = vunpack.c.l.b16 %v1343
        %v1446 = vunpack.c.l.b16 %v1344
        %v1447 = vunpack.c.l.b16 %v1345
        %v1448 = vunpack.c.l.b16 %v1346
        %v1449 = vunpack.c.l.b16 %v1347
        %v1450 = vunpack.c.l.b16 %v1348
        %v1451 = vunpack.c.l.b16 %v1349
        %v1452 = vunpack.c.l.b16 %v1350
        %v1453 = vunpack.c.l.b16 %v1351
        %v1454 = vunpack.c.l.b16 %v1352
        %v1455 = vunpack.c.l.b16 %v1353
        %v1456 = vunpack.c.l.b16 %v1354
        %v1457 = vunpack.c.l.b16 %v1355
        %v1458 = vunpack.c.l.b16 %v1356
        %v1459 = vunpack.c.l.b16 %v1357
        %v1460 = vunpack.c.l.b16 %v1358
        %v1461 = vunpack.c.l.b16 %v1359
        %v1462 = vunpack.c.l.b16 %v1360
        %v1463 = vunpack.c.l.b16 %v1361
        %v1464 = vunpack.c.l.b16 %v1362
        %v1465 = vunpack.c.l.b16 %v1363
        %v1466 = vunpack.c.l.b16 %v1364
        %v1467 = vunpack.c.l.b16 %v1365
        %v1468 = vunpack.c.l.b16 %v1366
        %v1469 = vunpack.c.l.b16 %v1367
        %v1470 = vunpack.c.l.b16 %v1368
        %v1471 = vunpack.c.l.b16 %v1369
        %v1472 = vpack.c.b16 %v1425, %v1424
        %v1473 = vpack.c.b16 %v1426, %v1426
        %v1474 = vpack.c.b16 %v1428, %v1427
        %v1475 = vpack.c.b16 %v1429, %v1429
        %v1476 = vpack.c.b16 %v1431, %v1430
        %v1477 = vpack.c.b16 %v1432, %v1432
        %v1478 = vpack.c.b16 %v1434, %v1433
        %v1479 = vpack.c.b16 %v1435, %v1435
        %v1480 = vpack.c.b16 %v1437, %v1436
        %v1481 = vpack.c.b16 %v1438, %v1438
        %v1482 = vpack.c.b16 %v1440, %v1439
        %v1483 = vpack.c.b16 %v1441, %v1441
        %v1484 = vpack.c.b16 %v1443, %v1442
        %v1485 = vpack.c.b16 %v1444, %v1444
        %v1486 = vpack.c.b16 %v1446, %v1445
        %v1487 = vpack.c.b16 %v1447, %v1447
        %v1488 = vpack.c.b16 %v1449, %v1448
        %v1489 = vpack.c.b16 %v1450, %v1450
        %v1490 = vpack.c.b16 %v1452, %v1451
        %v1491 = vpack.c.b16 %v1453, %v1453
        %v1492 = vpack.c.b16 %v1455, %v1454
        %v1493 = vpack.c.b16 %v1456, %v1456
        %v1494 = vpack.c.b16 %v1458, %v1457
        %v1495 = vpack.c.b16 %v1459, %v1459
        %v1496 = vpack.c.b16 %v1461, %v1460
        %v1497 = vpack.c.b16 %v1462, %v1462
        %v1498 = vpack.c.b16 %v1464, %v1463
        %v1499 = vpack.c.b16 %v1465, %v1465
        %v1500 = vpack.c.b16 %v1467, %v1466
        %v1501 = vpack.c.b16 %v1468, %v1468
        %v1502 = vpack.c.b16 %v1470, %v1469
        %v1503 = vpack.c.b16 %v1471, %v1471
        %v1507 = vunpack.c.l.b16 %v1370
        %v1508 = vunpack.c.l.b16 %v1371
        %v1509 = vunpack.c.l.b16 %v1372
        %v1510 = vpack.c.b16 %v1508, %v1507
        %v1511 = vpack.c.b16 %v1509, %v1509
        %1512 = vrot.lane.b32.xlu0 %v1474, 4
        %v1513 = vpop.permute.xlu0 %1512
        %1514 = vrot.lane.b32.xlu0 %v1475, 4
        %v1515 = vpop.permute.xlu0 %1514
        %1516 = vrot.lane.b32.xlu0 %v1476, 4
        %v1517 = vpop.permute.xlu0 %1516
        %1518 = vrot.lane.b32.xlu0 %v1477, 4
        %v1519 = vpop.permute.xlu0 %1518
        %1520 = vrot.lane.b32.xlu0 %v1478, 4
        %v1521 = vpop.permute.xlu0 %1520
        %1522 = vrot.lane.b32.xlu0 %v1479, 4
        %v1523 = vpop.permute.xlu0 %1522
        %1524 = vrot.lane.b32.xlu0 %v1480, 4
        %v1525 = vpop.permute.xlu0 %1524
        %1526 = vrot.lane.b32.xlu0 %v1481, 4
        %v1527 = vpop.permute.xlu0 %1526
        %1528 = vrot.lane.b32.xlu0 %v1482, 4
        %v1529 = vpop.permute.xlu0 %1528
        %1530 = vrot.lane.b32.xlu0 %v1483, 4
        %v1531 = vpop.permute.xlu0 %1530
        %1532 = vrot.lane.b32.xlu0 %v1484, 4
        %v1533 = vpop.permute.xlu0 %1532
        %1534 = vrot.lane.b32.xlu0 %v1485, 4
        %v1535 = vpop.permute.xlu0 %1534
        %1536 = vrot.lane.b32.xlu0 %v1486, 4
        %v1537 = vpop.permute.xlu0 %1536
        %1538 = vrot.lane.b32.xlu0 %v1487, 4
        %v1539 = vpop.permute.xlu0 %1538
        %1540 = vrot.lane.b32.xlu0 %v1488, 4
        %v1541 = vpop.permute.xlu0 %1540
        %1542 = vrot.lane.b32.xlu0 %v1489, 4
        %v1543 = vpop.permute.xlu0 %1542
        %1544 = vrot.lane.b32.xlu0 %v1490, 4
        %v1545 = vpop.permute.xlu0 %1544
        %1546 = vrot.lane.b32.xlu0 %v1491, 4
        %v1547 = vpop.permute.xlu0 %1546
        %1548 = vrot.lane.b32.xlu0 %v1492, 4
        %v1549 = vpop.permute.xlu0 %1548
        %1550 = vrot.lane.b32.xlu0 %v1493, 4
        %v1551 = vpop.permute.xlu0 %1550
        %1552 = vrot.lane.b32.xlu0 %v1494, 4
        %v1553 = vpop.permute.xlu0 %1552
        %1554 = vrot.lane.b32.xlu0 %v1495, 4
        %v1555 = vpop.permute.xlu0 %1554
        %1556 = vrot.lane.b32.xlu0 %v1496, 4
        %v1557 = vpop.permute.xlu0 %1556
        %1558 = vrot.lane.b32.xlu0 %v1497, 4
        %v1559 = vpop.permute.xlu0 %1558
        %1560 = vrot.lane.b32.xlu0 %v1498, 4
        %v1561 = vpop.permute.xlu0 %1560
        %1562 = vrot.lane.b32.xlu0 %v1499, 4
        %v1563 = vpop.permute.xlu0 %1562
        %1564 = vrot.lane.b32.xlu0 %v1500, 4
        %v1565 = vpop.permute.xlu0 %1564
        %1566 = vrot.lane.b32.xlu0 %v1501, 4
        %v1567 = vpop.permute.xlu0 %1566
        %1568 = vrot.lane.b32.xlu0 %v1502, 4
        %v1569 = vpop.permute.xlu0 %1568
        %1570 = vrot.lane.b32.xlu0 %v1503, 4
        %v1571 = vpop.permute.xlu0 %1570
        %1572 = vrot.lane.b32.xlu0 %v1510, 4
        %v1573 = vpop.permute.xlu0 %1572
        %1574 = vrot.lane.b32.xlu0 %v1511, 4
        %v1575 = vpop.permute.xlu0 %1574
        %v1579 = vunpack.c.l.b16 %v1373
        %v1580 = vunpack.c.l.b16 %v1374
        %v1581 = vunpack.c.l.b16 %v1375
        %v1582 = vpack.c.b16 %v1580, %v1579
        %v1583 = vpack.c.b16 %v1581, %v1581
        %1584 = vrot.lane.b32.xlu0 %v1476, 8
        %v1585 = vpop.permute.xlu0 %1584
        %1586 = vrot.lane.b32.xlu0 %v1477, 8
        %v1587 = vpop.permute.xlu0 %1586
        %1588 = vrot.lane.b32.xlu0 %v1478, 8
        %v1589 = vpop.permute.xlu0 %1588
        %1590 = vrot.lane.b32.xlu0 %v1479, 8
        %v1591 = vpop.permute.xlu0 %1590
        %1592 = vrot.lane.b32.xlu0 %v1480, 8
        %v1593 = vpop.permute.xlu0 %1592
        %1594 = vrot.lane.b32.xlu0 %v1481, 8
        %v1595 = vpop.permute.xlu0 %1594
        %1596 = vrot.lane.b32.xlu0 %v1482, 8
        %v1597 = vpop.permute.xlu0 %1596
        %1598 = vrot.lane.b32.xlu0 %v1483, 8
        %v1599 = vpop.permute.xlu0 %1598
        %1600 = vrot.lane.b32.xlu0 %v1484, 8
        %v1601 = vpop.permute.xlu0 %1600
        %1602 = vrot.lane.b32.xlu0 %v1485, 8
        %v1603 = vpop.permute.xlu0 %1602
        %1604 = vrot.lane.b32.xlu0 %v1486, 8
        %v1605 = vpop.permute.xlu0 %1604
        %1606 = vrot.lane.b32.xlu0 %v1487, 8
        %v1607 = vpop.permute.xlu0 %1606
        %1608 = vrot.lane.b32.xlu0 %v1488, 8
        %v1609 = vpop.permute.xlu0 %1608
        %1610 = vrot.lane.b32.xlu0 %v1489, 8
        %v1611 = vpop.permute.xlu0 %1610
        %1612 = vrot.lane.b32.xlu0 %v1490, 8
        %v1613 = vpop.permute.xlu0 %1612
        %1614 = vrot.lane.b32.xlu0 %v1491, 8
        %v1615 = vpop.permute.xlu0 %1614
        %1616 = vrot.lane.b32.xlu0 %v1492, 8
        %v1617 = vpop.permute.xlu0 %1616
        %1618 = vrot.lane.b32.xlu0 %v1493, 8
        %v1619 = vpop.permute.xlu0 %1618
        %1620 = vrot.lane.b32.xlu0 %v1494, 8
        %v1621 = vpop.permute.xlu0 %1620
        %1622 = vrot.lane.b32.xlu0 %v1495, 8
        %v1623 = vpop.permute.xlu0 %1622
        %1624 = vrot.lane.b32.xlu0 %v1496, 8
        %v1625 = vpop.permute.xlu0 %1624
        %1626 = vrot.lane.b32.xlu0 %v1497, 8
        %v1627 = vpop.permute.xlu0 %1626
        %1628 = vrot.lane.b32.xlu0 %v1498, 8
        %v1629 = vpop.permute.xlu0 %1628
        %1630 = vrot.lane.b32.xlu0 %v1499, 8
        %v1631 = vpop.permute.xlu0 %1630
        %1632 = vrot.lane.b32.xlu0 %v1500, 8
        %v1633 = vpop.permute.xlu0 %1632
        %1634 = vrot.lane.b32.xlu0 %v1501, 8
        %v1635 = vpop.permute.xlu0 %1634
        %1636 = vrot.lane.b32.xlu0 %v1502, 8
        %v1637 = vpop.permute.xlu0 %1636
        %1638 = vrot.lane.b32.xlu0 %v1503, 8
        %v1639 = vpop.permute.xlu0 %1638
        %1640 = vrot.lane.b32.xlu0 %v1510, 8
        %v1641 = vpop.permute.xlu0 %1640
        %1642 = vrot.lane.b32.xlu0 %v1511, 8
        %v1643 = vpop.permute.xlu0 %1642
        %1644 = vrot.lane.b32.xlu0 %v1582, 8
        %v1645 = vpop.permute.xlu0 %1644
        %1646 = vrot.lane.b32.xlu0 %v1583, 8
        %v1647 = vpop.permute.xlu0 %1646
        %vm1648 = vcmask 31744
        %v1651 = vsel %vm1648, %v1472, %v1513
        %v1654 = vsel %vm1648, %v1473, %v1515
        %v1657 = vsel %vm1648, %v1474, %v1517
        %v1660 = vsel %vm1648, %v1475, %v1519
        %v1663 = vsel %vm1648, %v1476, %v1521
        %v1666 = vsel %vm1648, %v1477, %v1523
        %v1669 = vsel %vm1648, %v1478, %v1525
        %v1672 = vsel %vm1648, %v1479, %v1527
        %v1675 = vsel %vm1648, %v1480, %v1529
        %v1678 = vsel %vm1648, %v1481, %v1531
        %v1681 = vsel %vm1648, %v1482, %v1533
        %v1684 = vsel %vm1648, %v1483, %v1535
        %v1687 = vsel %vm1648, %v1484, %v1537
        %v1690 = vsel %vm1648, %v1485, %v1539
        %v1693 = vsel %vm1648, %v1486, %v1541
        %v1696 = vsel %vm1648, %v1487, %v1543
        %v1699 = vsel %vm1648, %v1488, %v1545
        %v1702 = vsel %vm1648, %v1489, %v1547
        %v1705 = vsel %vm1648, %v1490, %v1549
        %v1708 = vsel %vm1648, %v1491, %v1551
        %v1711 = vsel %vm1648, %v1492, %v1553
        %v1714 = vsel %vm1648, %v1493, %v1555
        %v1717 = vsel %vm1648, %v1494, %v1557
        %v1720 = vsel %vm1648, %v1495, %v1559
        %v1723 = vsel %vm1648, %v1496, %v1561
        %v1726 = vsel %vm1648, %v1497, %v1563
        %v1729 = vsel %vm1648, %v1498, %v1565
        %v1732 = vsel %vm1648, %v1499, %v1567
        %v1735 = vsel %vm1648, %v1500, %v1569
        %v1738 = vsel %vm1648, %v1501, %v1571
        %v1741 = vsel %vm1648, %v1502, %v1573
        %v1744 = vsel %vm1648, %v1503, %v1575
        %vm1745 = vcmask 64512
        %v1747 = vsel %vm1745, %v1651, %v1585
        %v1749 = vsel %vm1745, %v1654, %v1587
        %v1751 = vsel %vm1745, %v1657, %v1589
        %v1753 = vsel %vm1745, %v1660, %v1591
        %v1755 = vsel %vm1745, %v1663, %v1593
        %v1757 = vsel %vm1745, %v1666, %v1595
        %v1759 = vsel %vm1745, %v1669, %v1597
        %v1761 = vsel %vm1745, %v1672, %v1599
        %v1763 = vsel %vm1745, %v1675, %v1601
        %v1765 = vsel %vm1745, %v1678, %v1603
        %v1767 = vsel %vm1745, %v1681, %v1605
        %v1769 = vsel %vm1745, %v1684, %v1607
        %v1771 = vsel %vm1745, %v1687, %v1609
        %v1773 = vsel %vm1745, %v1690, %v1611
        %v1775 = vsel %vm1745, %v1693, %v1613
        %v1777 = vsel %vm1745, %v1696, %v1615
        %v1779 = vsel %vm1745, %v1699, %v1617
        %v1781 = vsel %vm1745, %v1702, %v1619
        %v1783 = vsel %vm1745, %v1705, %v1621
        %v1785 = vsel %vm1745, %v1708, %v1623
        %v1787 = vsel %vm1745, %v1711, %v1625
        %v1789 = vsel %vm1745, %v1714, %v1627
        %v1791 = vsel %vm1745, %v1717, %v1629
        %v1793 = vsel %vm1745, %v1720, %v1631
        %v1795 = vsel %vm1745, %v1723, %v1633
        %v1797 = vsel %vm1745, %v1726, %v1635
        %v1799 = vsel %vm1745, %v1729, %v1637
        %v1801 = vsel %vm1745, %v1732, %v1639
        %v1803 = vsel %vm1745, %v1735, %v1641
        %v1805 = vsel %vm1745, %v1738, %v1643
        %v1807 = vsel %vm1745, %v1741, %v1645
        %v1809 = vsel %vm1745, %v1744, %v1647
        %v1810 = vld [vmem:[%s3] sm:$0xf]
        %v1811 = vld [vmem:[%s3 + $0x4] sm:$0x3]
        %vm1812 = vsmask.f32 7424
        %v1813 = vshrl.u32 %v1747, 16
        %v1815 = vshll.u32 %v1747, 16
        %v1817 = vrot.slane %v1815, 1
        %v1818 = vor.u32 %v1813, %v1817
        %v1819 = vshll.u32 %v1749, 16
        %v1821 = vrot.slane %v1819, 1
        %v1822 = vsel %vm1812, %v1818, %v1821
        %v1823 = vshrl.u32 %v1751, 16
        %v1825 = vshll.u32 %v1751, 16
        %v1827 = vrot.slane %v1825, 1
        %v1828 = vor.u32 %v1823, %v1827
        %v1829 = vshll.u32 %v1753, 16
        %v1831 = vrot.slane %v1829, 1
        %v1832 = vsel %vm1812, %v1828, %v1831
        %v1833 = vshrl.u32 %v1755, 16
        %v1835 = vshll.u32 %v1755, 16
        %v1837 = vrot.slane %v1835, 1
        %v1838 = vor.u32 %v1833, %v1837
        %v1839 = vshll.u32 %v1757, 16
        %v1841 = vrot.slane %v1839, 1
        %v1842 = vsel %vm1812, %v1838, %v1841
        %v1843 = vshrl.u32 %v1759, 16
        %v1845 = vshll.u32 %v1759, 16
        %v1847 = vrot.slane %v1845, 1
        %v1848 = vor.u32 %v1843, %v1847
        %v1849 = vshll.u32 %v1761, 16
        %v1851 = vrot.slane %v1849, 1
        %v1852 = vsel %vm1812, %v1848, %v1851
        %v1853 = vshrl.u32 %v1763, 16
        %v1855 = vshll.u32 %v1763, 16
        %v1857 = vrot.slane %v1855, 1
        %v1858 = vor.u32 %v1853, %v1857
        %v1859 = vshll.u32 %v1765, 16
        %v1861 = vrot.slane %v1859, 1
        %v1862 = vsel %vm1812, %v1858, %v1861
        %v1863 = vshrl.u32 %v1767, 16
        %v1865 = vshll.u32 %v1767, 16
        %v1867 = vrot.slane %v1865, 1
        %v1868 = vor.u32 %v1863, %v1867
        %v1869 = vshll.u32 %v1769, 16
        %v1871 = vrot.slane %v1869, 1
        %v1872 = vsel %vm1812, %v1868, %v1871
        %v1873 = vshrl.u32 %v1771, 16
        %v1875 = vshll.u32 %v1771, 16
        %v1877 = vrot.slane %v1875, 1
        %v1878 = vor.u32 %v1873, %v1877
        %v1879 = vshll.u32 %v1773, 16
        %v1881 = vrot.slane %v1879, 1
        %v1882 = vsel %vm1812, %v1878, %v1881
        %v1883 = vshrl.u32 %v1775, 16
        %v1885 = vshll.u32 %v1775, 16
        %v1887 = vrot.slane %v1885, 1
        %v1888 = vor.u32 %v1883, %v1887
        %v1889 = vshll.u32 %v1777, 16
        %v1891 = vrot.slane %v1889, 1
        %v1892 = vsel %vm1812, %v1888, %v1891
        %v1893 = vshrl.u32 %v1779, 16
        %v1895 = vshll.u32 %v1779, 16
        %v1897 = vrot.slane %v1895, 1
        %v1898 = vor.u32 %v1893, %v1897
        %v1899 = vshll.u32 %v1781, 16
        %v1901 = vrot.slane %v1899, 1
        %v1902 = vsel %vm1812, %v1898, %v1901
        %v1903 = vshrl.u32 %v1783, 16
        %v1905 = vshll.u32 %v1783, 16
        %v1907 = vrot.slane %v1905, 1
        %v1908 = vor.u32 %v1903, %v1907
        %v1909 = vshll.u32 %v1785, 16
        %v1911 = vrot.slane %v1909, 1
        %v1912 = vsel %vm1812, %v1908, %v1911
        %v1913 = vshrl.u32 %v1787, 16
        %v1915 = vshll.u32 %v1787, 16
        %v1917 = vrot.slane %v1915, 1
        %v1918 = vor.u32 %v1913, %v1917
        %v1919 = vshll.u32 %v1789, 16
        %v1921 = vrot.slane %v1919, 1
        %v1922 = vsel %vm1812, %v1918, %v1921
        %v1923 = vshrl.u32 %v1791, 16
        %v1925 = vshll.u32 %v1791, 16
        %v1927 = vrot.slane %v1925, 1
        %v1928 = vor.u32 %v1923, %v1927
        %v1929 = vshll.u32 %v1793, 16
        %v1931 = vrot.slane %v1929, 1
        %v1932 = vsel %vm1812, %v1928, %v1931
        %v1933 = vshrl.u32 %v1795, 16
        %v1935 = vshll.u32 %v1795, 16
        %v1937 = vrot.slane %v1935, 1
        %v1938 = vor.u32 %v1933, %v1937
        %v1939 = vshll.u32 %v1797, 16
        %v1941 = vrot.slane %v1939, 1
        %v1942 = vsel %vm1812, %v1938, %v1941
        %v1943 = vshrl.u32 %v1799, 16
        %v1945 = vshll.u32 %v1799, 16
        %v1947 = vrot.slane %v1945, 1
        %v1948 = vor.u32 %v1943, %v1947
        %v1949 = vshll.u32 %v1801, 16
        %v1951 = vrot.slane %v1949, 1
        %v1952 = vsel %vm1812, %v1948, %v1951
        %v1953 = vshrl.u32 %v1803, 16
        %v1955 = vshll.u32 %v1803, 16
        %v1957 = vrot.slane %v1955, 1
        %v1958 = vor.u32 %v1953, %v1957
        %v1959 = vshll.u32 %v1805, 16
        %v1961 = vrot.slane %v1959, 1
        %v1962 = vsel %vm1812, %v1958, %v1961
        %v1963 = vshrl.u32 %v1807, 16
        %v1965 = vshll.u32 %v1807, 16
        %v1967 = vrot.slane %v1965, 1
        %v1968 = vor.u32 %v1963, %v1967
        %v1969 = vshll.u32 %v1809, 16
        %v1971 = vrot.slane %v1969, 1
        %v1972 = vsel %vm1812, %v1968, %v1971
        %s1973 = scalar_lea.vmem %s3, 8
        %v1974 = vld [vmem:[%s1973] sm:$0xf]
        %v1975 = vld [vmem:[%s1973 + $0x4] sm:$0x3]
        %v1978 = vunpack.c.l.b16 %v1974
        %v1979 = vunpack.c.l.b16 %v1975
        %v1980 = vpack.c.b16 %v1979, %v1978
        %vm1981 = vcmask 97280
        %v1983 = vsel %vm1981, %v1822, 0
        %v1986 = vsel %vm1981, %v1832, 0
        %v1989 = vsel %vm1981, %v1842, 0
        %v1992 = vsel %vm1981, %v1852, 0
        %v1995 = vsel %vm1981, %v1862, 0
        %v1998 = vsel %vm1981, %v1872, 0
        %v2001 = vsel %vm1981, %v1882, 0
        %v2004 = vsel %vm1981, %v1892, 0
        %v2007 = vsel %vm1981, %v1902, 0
        %v2010 = vsel %vm1981, %v1912, 0
        %v2013 = vsel %vm1981, %v1922, 0
        %v2016 = vsel %vm1981, %v1932, 0
        %v2019 = vsel %vm1981, %v1942, 0
        %v2022 = vsel %vm1981, %v1952, 0
        %v2025 = vsel %vm1981, %v1962, 0
        %v2028 = vsel %vm1981, %v1972, 0
        %vm2030 = vcmask 1045504
        %v2032 = vsel %vm2030, %v1980, 0
        %2034 = vmatprep.subr.bf16.mxu0 0
        %2035 = vmatpush1.bf16.msra.mxu0 %v2032
        %2036 = vmatprep.subr.bf16.mxu0 0
        %2037 = vmatpush1.bf16.msra.mxu0 0
        %2038 = vmatprep.subr.bf16.mxu0 0
        %2039 = vmatpush1.bf16.msra.mxu0 0
        %2040 = vmatprep.subr.bf16.mxu0 0
        %2041 = vmatpush1.bf16.msra.mxu0 0
        %2042 = vmatprep.subr.bf16.mxu0 0
        %2043 = vmatpush1.bf16.msra.mxu0 0
        %2044 = vmatprep.subr.bf16.mxu0 0
        %2045 = vmatpush1.bf16.msra.mxu0 0
        %2046 = vmatprep.subr.bf16.mxu0 0
        %2047 = vmatpush1.bf16.msra.mxu0 0
        %2048 = vmatprep.subr.bf16.mxu0 0
        %2049 = vmatpush1.bf16.msra.mxu0 0
        %2050 = vmatprep.subr.bf16.mxu0 0
        %2051 = vmatpush1.bf16.msra.mxu0 0
        %2052 = vmatprep.subr.bf16.mxu0 0
        %2053 = vmatpush1.bf16.msra.mxu0 0
        %2054 = vmatprep.subr.bf16.mxu0 0
        %2055 = vmatpush1.bf16.msra.mxu0 0
        %2056 = vmatprep.subr.bf16.mxu0 0
        %2057 = vmatpush1.bf16.msra.mxu0 0
        %2058 = vmatprep.subr.bf16.mxu0 0
        %2059 = vmatpush1.bf16.msra.mxu0 0
        %2060 = vmatprep.subr.bf16.mxu0 0
        %2061 = vmatpush1.bf16.msra.mxu0 0
        %2062 = vmatprep.subr.bf16.mxu0 0
        %2063 = vmatpush1.bf16.msra.mxu0 0
        %2064 = vmatprep.subr.bf16.mxu0 0
        %2065 = vmatpush1.bf16.msra.mxu0 0
        %2066 = vmatprep.mubr.bf16.mxu0 0
        %2067 = vmatmul.mubr.bf16.gmra.mrb[0].mxu0 %v1983
        %v2068 = vpop.f32.mrb[0].mxu0
        %v2069 = vadd.f32 0.0, %v2068
        %v2070 = vpop.f32.mrb[0].mxu0
        %v2071 = vpop.f32.mrb[0].mxu0
        %v2072 = vadd.f32 0.0, %v2071
        %v2073 = vpop.f32.mrb[0].mxu0
        %2074 = vmatprep.mubr.bf16.mxu0 0
        %2075 = vmatmul.mubr.bf16.gmra.mrb[0].mxu0 %v1986
        %v2076 = vpop.f32.mrb[0].mxu0
        %v2077 = vadd.f32 0.0, %v2076
        %v2078 = vpop.f32.mrb[0].mxu0
        %v2079 = vpop.f32.mrb[0].mxu0
        %v2080 = vadd.f32 0.0, %v2079
        %v2081 = vpop.f32.mrb[0].mxu0
        %2082 = vmatprep.mubr.bf16.mxu0 0
        %2083 = vmatmul.mubr.bf16.gmra.mrb[0].mxu0 %v1989
        %v2084 = vpop.f32.mrb[0].mxu0
        %v2085 = vadd.f32 0.0, %v2084
        %v2086 = vpop.f32.mrb[0].mxu0
        %v2087 = vpop.f32.mrb[0].mxu0
        %v2088 = vadd.f32 0.0, %v2087
        %v2089 = vpop.f32.mrb[0].mxu0
        %2090 = vmatprep.mubr.bf16.mxu0 0
        %2091 = vmatmul.mubr.bf16.gmra.mrb[0].mxu0 %v1992
        %v2092 = vpop.f32.mrb[0].mxu0
        %v2093 = vadd.f32 0.0, %v2092
        %v2094 = vpop.f32.mrb[0].mxu0
        %v2095 = vpop.f32.mrb[0].mxu0
        %v2096 = vadd.f32 0.0, %v2095
        %v2097 = vpop.f32.mrb[0].mxu0
        %2098 = vmatprep.mubr.bf16.mxu0 0
        %2099 = vmatmul.mubr.bf16.gmra.mrb[0].mxu0 %v1995
        %v2100 = vpop.f32.mrb[0].mxu0
        %v2101 = vadd.f32 0.0, %v2100
        %v2102 = vpop.f32.mrb[0].mxu0
        %v2103 = vpop.f32.mrb[0].mxu0
        %v2104 = vadd.f32 0.0, %v2103
        %v2105 = vpop.f32.mrb[0].mxu0
        %2106 = vmatprep.mubr.bf16.mxu0 0
        %2107 = vmatmul.mubr.bf16.gmra.mrb[0].mxu0 %v1998
        %v2108 = vpop.f32.mrb[0].mxu0
        %v2109 = vadd.f32 0.0, %v2108
        %v2110 = vpop.f32.mrb[0].mxu0
        %v2111 = vpop.f32.mrb[0].mxu0
        %v2112 = vadd.f32 0.0, %v2111
        %v2113 = vpop.f32.mrb[0].mxu0
        %2114 = vmatprep.mubr.bf16.mxu0 0
        %2115 = vmatmul.mubr.bf16.gmra.mrb[0].mxu0 %v2001
        %v2116 = vpop.f32.mrb[0].mxu0
        %v2117 = vadd.f32 0.0, %v2116
        %v2118 = vpop.f32.mrb[0].mxu0
        %v2119 = vpop.f32.mrb[0].mxu0
        %v2120 = vadd.f32 0.0, %v2119
        %v2121 = vpop.f32.mrb[0].mxu0
        %2122 = vmatprep.mubr.bf16.mxu0 0
        %2123 = vmatmul.mubr.bf16.gmra.mrb[0].mxu0 %v2004
        %v2124 = vpop.f32.mrb[0].mxu0
        %v2125 = vadd.f32 0.0, %v2124
        %v2126 = vpop.f32.mrb[0].mxu0
        %v2127 = vpop.f32.mrb[0].mxu0
        %v2128 = vadd.f32 0.0, %v2127
        %v2129 = vpop.f32.mrb[0].mxu0
        %2130 = vmatprep.mubr.bf16.mxu0 0
        %2131 = vmatmul.mubr.bf16.gmra.mrb[0].mxu0 %v2007
        %v2132 = vpop.f32.mrb[0].mxu0
        %v2133 = vadd.f32 0.0, %v2132
        %v2134 = vpop.f32.mrb[0].mxu0
        %v2135 = vpop.f32.mrb[0].mxu0
        %v2136 = vadd.f32 0.0, %v2135
        %v2137 = vpop.f32.mrb[0].mxu0
        %2138 = vmatprep.mubr.bf16.mxu0 0
        %2139 = vmatmul.mubr.bf16.gmra.mrb[0].mxu0 %v2010
        %v2140 = vpop.f32.mrb[0].mxu0
        %v2141 = vadd.f32 0.0, %v2140
        %v2142 = vpop.f32.mrb[0].mxu0
        %v2143 = vpop.f32.mrb[0].mxu0
        %v2144 = vadd.f32 0.0, %v2143
        %v2145 = vpop.f32.mrb[0].mxu0
        %2146 = vmatprep.mubr.bf16.mxu0 0
        %2147 = vmatmul.mubr.bf16.gmra.mrb[0].mxu0 %v2013
        %v2148 = vpop.f32.mrb[0].mxu0
        %v2149 = vadd.f32 0.0, %v2148
        %v2150 = vpop.f32.mrb[0].mxu0
        %v2151 = vpop.f32.mrb[0].mxu0
        %v2152 = vadd.f32 0.0, %v2151
        %v2153 = vpop.f32.mrb[0].mxu0
        %2154 = vmatprep.mubr.bf16.mxu0 0
        %2155 = vmatmul.mubr.bf16.gmra.mrb[0].mxu0 %v2016
        %v2156 = vpop.f32.mrb[0].mxu0
        %v2157 = vadd.f32 0.0, %v2156
        %v2158 = vpop.f32.mrb[0].mxu0
        %v2159 = vpop.f32.mrb[0].mxu0
        %v2160 = vadd.f32 0.0, %v2159
        %v2161 = vpop.f32.mrb[0].mxu0
        %2162 = vmatprep.mubr.bf16.mxu0 0
        %2163 = vmatmul.mubr.bf16.gmra.mrb[0].mxu0 %v2019
        %v2164 = vpop.f32.mrb[0].mxu0
        %v2165 = vadd.f32 0.0, %v2164
        %v2166 = vpop.f32.mrb[0].mxu0
        %v2167 = vpop.f32.mrb[0].mxu0
        %v2168 = vadd.f32 0.0, %v2167
        %v2169 = vpop.f32.mrb[0].mxu0
        %2170 = vmatprep.mubr.bf16.mxu0 0
        %2171 = vmatmul.mubr.bf16.gmra.mrb[0].mxu0 %v2022
        %v2172 = vpop.f32.mrb[0].mxu0
        %v2173 = vadd.f32 0.0, %v2172
        %v2174 = vpop.f32.mrb[0].mxu0
        %v2175 = vpop.f32.mrb[0].mxu0
        %v2176 = vadd.f32 0.0, %v2175
        %v2177 = vpop.f32.mrb[0].mxu0
        %2178 = vmatprep.mubr.bf16.mxu0 0
        %2179 = vmatmul.mubr.bf16.gmra.mrb[0].mxu0 %v2025
        %v2180 = vpop.f32.mrb[0].mxu0
        %v2181 = vadd.f32 0.0, %v2180
        %v2182 = vpop.f32.mrb[0].mxu0
        %v2183 = vpop.f32.mrb[0].mxu0
        %v2184 = vadd.f32 0.0, %v2183
        %v2185 = vpop.f32.mrb[0].mxu0
        %2186 = vmatprep.mubr.bf16.mxu0 0
        %2187 = vmatmul.mubr.bf16.gmra.mrb[0].mxu0 %v2028
        %v2188 = vpop.f32.mrb[0].mxu0
        %v2189 = vadd.f32 0.0, %v2188
        %v2190 = vpop.f32.mrb[0].mxu0
        %v2191 = vpop.f32.mrb[0].mxu0
        %v2192 = vadd.f32 0.0, %v2191
        %v2193 = vpop.f32.mrb[0].mxu0
        %2194 = vdwg.mxu0
        %v2197 = vunpack.c.l.b16 %v1810
        %v2198 = vunpack.c.l.b16 %v1811
        %v2199 = vpack.c.b16 %v2198, %v2197
        %v2200 = vsel %vm1981, %v1747, 0
        %v2202 = vsel %vm1981, %v1751, 0
        %v2204 = vsel %vm1981, %v1755, 0
        %v2206 = vsel %vm1981, %v1759, 0
        %v2208 = vsel %vm1981, %v1763, 0
        %v2210 = vsel %vm1981, %v1767, 0
        %v2212 = vsel %vm1981, %v1771, 0
        %v2214 = vsel %vm1981, %v1775, 0
        %v2216 = vsel %vm1981, %v1779, 0
        %v2218 = vsel %vm1981, %v1783, 0
        %v2220 = vsel %vm1981, %v1787, 0
        %v2222 = vsel %vm1981, %v1791, 0
        %v2224 = vsel %vm1981, %v1795, 0
        %v2226 = vsel %vm1981, %v1799, 0
        %v2228 = vsel %vm1981, %v1803, 0
        %v2230 = vsel %vm1981, %v1807, 0
        %v2233 = vsel %vm2030, %v2199, 0
        %2235 = vmatprep.subr.bf16.mxu0 0
        %2236 = vmatpush1.bf16.msra.mxu0 %v2233
        %2237 = vmatprep.subr.bf16.mxu0 0
        %2238 = vmatpush1.bf16.msra.mxu0 0
        %2239 = vmatprep.subr.bf16.mxu0 0
        %2240 = vmatpush1.bf16.msra.mxu0 0
        %2241 = vmatprep.subr.bf16.mxu0 0
        %2242 = vmatpush1.bf16.msra.mxu0 0
        %2243 = vmatprep.subr.bf16.mxu0 0
        %2244 = vmatpush1.bf16.msra.mxu0 0
        %2245 = vmatprep.subr.bf16.mxu0 0
        %2246 = vmatpush1.bf16.msra.mxu0 0
        %2247 = vmatprep.subr.bf16.mxu0 0
        %2248 = vmatpush1.bf16.msra.mxu0 0
        %2249 = vmatprep.subr.bf16.mxu0 0
        %2250 = vmatpush1.bf16.msra.mxu0 0
        %2251 = vmatprep.subr.bf16.mxu0 0
        %2252 = vmatpush1.bf16.msra.mxu0 0
        %2253 = vmatprep.subr.bf16.mxu0 0
        %2254 = vmatpush1.bf16.msra.mxu0 0
        %2255 = vmatprep.subr.bf16.mxu0 0
        %2256 = vmatpush1.bf16.msra.mxu0 0
        %2257 = vmatprep.subr.bf16.mxu0 0
        %2258 = vmatpush1.bf16.msra.mxu0 0
        %2259 = vmatprep.subr.bf16.mxu0 0
        %2260 = vmatpush1.bf16.msra.mxu0 0
        %2261 = vmatprep.subr.bf16.mxu0 0
        %2262 = vmatpush1.bf16.msra.mxu0 0
        %2263 = vmatprep.subr.bf16.mxu0 0
        %2264 = vmatpush1.bf16.msra.mxu0 0
        %2265 = vmatprep.subr.bf16.mxu0 0
        %2266 = vmatpush1.bf16.msra.mxu0 0
        %2267 = vmatprep.mubr.bf16.mxu0 0
        %2268 = vmatmul.mubr.bf16.gmra.mrb[0].mxu0 %v2200
        %v2269 = vpop.f32.mrb[0].mxu0
        %v2270 = vadd.f32 %v2069, %v2269
        %v2271 = vpop.f32.mrb[0].mxu0
        %v2272 = vpop.f32.mrb[0].mxu0
        %v2273 = vadd.f32 %v2072, %v2272
        %v2274 = vpop.f32.mrb[0].mxu0
        %2275 = vmatprep.mubr.bf16.mxu0 0
        %2276 = vmatmul.mubr.bf16.gmra.mrb[0].mxu0 %v2202
        %v2277 = vpop.f32.mrb[0].mxu0
        %v2278 = vadd.f32 %v2077, %v2277
        %v2279 = vpop.f32.mrb[0].mxu0
        %v2280 = vpop.f32.mrb[0].mxu0
        %v2281 = vadd.f32 %v2080, %v2280
        %v2282 = vpop.f32.mrb[0].mxu0
        %2283 = vmatprep.mubr.bf16.mxu0 0
        %2284 = vmatmul.mubr.bf16.gmra.mrb[0].mxu0 %v2204
        %v2285 = vpop.f32.mrb[0].mxu0
        %v2286 = vadd.f32 %v2085, %v2285
        %v2287 = vpop.f32.mrb[0].mxu0
        %v2288 = vpop.f32.mrb[0].mxu0
        %v2289 = vadd.f32 %v2088, %v2288
        %v2290 = vpop.f32.mrb[0].mxu0
        %2291 = vmatprep.mubr.bf16.mxu0 0
        %2292 = vmatmul.mubr.bf16.gmra.mrb[0].mxu0 %v2206
        %v2293 = vpop.f32.mrb[0].mxu0
        %v2294 = vadd.f32 %v2093, %v2293
        %v2295 = vpop.f32.mrb[0].mxu0
        %v2296 = vpop.f32.mrb[0].mxu0
        %v2297 = vadd.f32 %v2096, %v2296
        %v2298 = vpop.f32.mrb[0].mxu0
        %2299 = vmatprep.mubr.bf16.mxu0 0
        %2300 = vmatmul.mubr.bf16.gmra.mrb[0].mxu0 %v2208
        %v2301 = vpop.f32.mrb[0].mxu0
        %v2302 = vadd.f32 %v2101, %v2301
        %v2303 = vpop.f32.mrb[0].mxu0
        %v2304 = vpop.f32.mrb[0].mxu0
        %v2305 = vadd.f32 %v2104, %v2304
        %v2306 = vpop.f32.mrb[0].mxu0
        %2307 = vmatprep.mubr.bf16.mxu0 0
        %2308 = vmatmul.mubr.bf16.gmra.mrb[0].mxu0 %v2210
        %v2309 = vpop.f32.mrb[0].mxu0
        %v2310 = vadd.f32 %v2109, %v2309
        %v2311 = vpop.f32.mrb[0].mxu0
        %v2312 = vpop.f32.mrb[0].mxu0
        %v2313 = vadd.f32 %v2112, %v2312
        %v2314 = vpop.f32.mrb[0].mxu0
        %2315 = vmatprep.mubr.bf16.mxu0 0
        %2316 = vmatmul.mubr.bf16.gmra.mrb[0].mxu0 %v2212
        %v2317 = vpop.f32.mrb[0].mxu0
        %v2318 = vadd.f32 %v2117, %v2317
        %v2319 = vpop.f32.mrb[0].mxu0
        %v2320 = vpop.f32.mrb[0].mxu0
        %v2321 = vadd.f32 %v2120, %v2320
        %v2322 = vpop.f32.mrb[0].mxu0
        %2323 = vmatprep.mubr.bf16.mxu0 0
        %2324 = vmatmul.mubr.bf16.gmra.mrb[0].mxu0 %v2214
        %v2325 = vpop.f32.mrb[0].mxu0
        %v2326 = vadd.f32 %v2125, %v2325
        %v2327 = vpop.f32.mrb[0].mxu0
        %v2328 = vpop.f32.mrb[0].mxu0
        %v2329 = vadd.f32 %v2128, %v2328
        %v2330 = vpop.f32.mrb[0].mxu0
        %2331 = vmatprep.mubr.bf16.mxu0 0
        %2332 = vmatmul.mubr.bf16.gmra.mrb[0].mxu0 %v2216
        %v2333 = vpop.f32.mrb[0].mxu0
        %v2334 = vadd.f32 %v2133, %v2333
        %v2335 = vpop.f32.mrb[0].mxu0
        %v2336 = vpop.f32.mrb[0].mxu0
        %v2337 = vadd.f32 %v2136, %v2336
        %v2338 = vpop.f32.mrb[0].mxu0
        %2339 = vmatprep.mubr.bf16.mxu0 0
        %2340 = vmatmul.mubr.bf16.gmra.mrb[0].mxu0 %v2218
        %v2341 = vpop.f32.mrb[0].mxu0
        %v2342 = vadd.f32 %v2141, %v2341
        %v2343 = vpop.f32.mrb[0].mxu0
        %v2344 = vpop.f32.mrb[0].mxu0
        %v2345 = vadd.f32 %v2144, %v2344
        %v2346 = vpop.f32.mrb[0].mxu0
        %2347 = vmatprep.mubr.bf16.mxu0 0
        %2348 = vmatmul.mubr.bf16.gmra.mrb[0].mxu0 %v2220
        %v2349 = vpop.f32.mrb[0].mxu0
        %v2350 = vadd.f32 %v2149, %v2349
        %v2351 = vpop.f32.mrb[0].mxu0
        %v2352 = vpop.f32.mrb[0].mxu0
        %v2353 = vadd.f32 %v2152, %v2352
        %v2354 = vpop.f32.mrb[0].mxu0
        %2355 = vmatprep.mubr.bf16.mxu0 0
        %2356 = vmatmul.mubr.bf16.gmra.mrb[0].mxu0 %v2222
        %v2357 = vpop.f32.mrb[0].mxu0
        %v2358 = vadd.f32 %v2157, %v2357
        %v2359 = vpop.f32.mrb[0].mxu0
        %v2360 = vpop.f32.mrb[0].mxu0
        %v2361 = vadd.f32 %v2160, %v2360
        %v2362 = vpop.f32.mrb[0].mxu0
        %2363 = vmatprep.mubr.bf16.mxu0 0
        %2364 = vmatmul.mubr.bf16.gmra.mrb[0].mxu0 %v2224
        %v2365 = vpop.f32.mrb[0].mxu0
        %v2366 = vadd.f32 %v2165, %v2365
        %v2367 = vpop.f32.mrb[0].mxu0
        %v2368 = vpop.f32.mrb[0].mxu0
        %v2369 = vadd.f32 %v2168, %v2368
        %v2370 = vpop.f32.mrb[0].mxu0
        %2371 = vmatprep.mubr.bf16.mxu0 0
        %2372 = vmatmul.mubr.bf16.gmra.mrb[0].mxu0 %v2226
        %v2373 = vpop.f32.mrb[0].mxu0
        %v2374 = vadd.f32 %v2173, %v2373
        %v2375 = vpop.f32.mrb[0].mxu0
        %v2376 = vpop.f32.mrb[0].mxu0
        %v2377 = vadd.f32 %v2176, %v2376
        %v2378 = vpop.f32.mrb[0].mxu0
        %2379 = vmatprep.mubr.bf16.mxu0 0
        %2380 = vmatmul.mubr.bf16.gmra.mrb[0].mxu0 %v2228
        %v2381 = vpop.f32.mrb[0].mxu0
        %v2382 = vadd.f32 %v2181, %v2381
        %v2383 = vpop.f32.mrb[0].mxu0
        %v2384 = vpop.f32.mrb[0].mxu0
        %v2385 = vadd.f32 %v2184, %v2384
        %v2386 = vpop.f32.mrb[0].mxu0
        %2387 = vmatprep.mubr.bf16.mxu0 0
        %2388 = vmatmul.mubr.bf16.gmra.mrb[0].mxu0 %v2230
        %v2389 = vpop.f32.mrb[0].mxu0
        %v2390 = vadd.f32 %v2189, %v2389
        %v2391 = vpop.f32.mrb[0].mxu0
        %v2392 = vpop.f32.mrb[0].mxu0
        %v2393 = vadd.f32 %v2192, %v2392
        %v2394 = vpop.f32.mrb[0].mxu0
        %2395 = vdwg.mxu0
        %vm2428 = vcmask 1046528
        %v2429 = vrot.slane %v1747, 1
        %v2430 = vrot.slane %v1749, 1
        %v2431 = vsel %vm2428, %v2429, %v2430
        %v2432 = vrot.slane %v1751, 1
        %v2433 = vrot.slane %v1753, 1
        %v2434 = vsel %vm2428, %v2432, %v2433
        %v2435 = vrot.slane %v1755, 1
        %v2436 = vrot.slane %v1757, 1
        %v2437 = vsel %vm2428, %v2435, %v2436
        %v2438 = vrot.slane %v1759, 1
        %v2439 = vrot.slane %v1761, 1
        %v2440 = vsel %vm2428, %v2438, %v2439
        %v2441 = vrot.slane %v1763, 1
        %v2442 = vrot.slane %v1765, 1
        %v2443 = vsel %vm2428, %v2441, %v2442
        %v2444 = vrot.slane %v1767, 1
        %v2445 = vrot.slane %v1769, 1
        %v2446 = vsel %vm2428, %v2444, %v2445
        %v2447 = vrot.slane %v1771, 1
        %v2448 = vrot.slane %v1773, 1
        %v2449 = vsel %vm2428, %v2447, %v2448
        %v2450 = vrot.slane %v1775, 1
        %v2451 = vrot.slane %v1777, 1
        %v2452 = vsel %vm2428, %v2450, %v2451
        %v2453 = vrot.slane %v1779, 1
        %v2454 = vrot.slane %v1781, 1
        %v2455 = vsel %vm2428, %v2453, %v2454
        %v2456 = vrot.slane %v1783, 1
        %v2457 = vrot.slane %v1785, 1
        %v2458 = vsel %vm2428, %v2456, %v2457
        %v2459 = vrot.slane %v1787, 1
        %v2460 = vrot.slane %v1789, 1
        %v2461 = vsel %vm2428, %v2459, %v2460
        %v2462 = vrot.slane %v1791, 1
        %v2463 = vrot.slane %v1793, 1
        %v2464 = vsel %vm2428, %v2462, %v2463
        %v2465 = vrot.slane %v1795, 1
        %v2466 = vrot.slane %v1797, 1
        %v2467 = vsel %vm2428, %v2465, %v2466
        %v2468 = vrot.slane %v1799, 1
        %v2469 = vrot.slane %v1801, 1
        %v2470 = vsel %vm2428, %v2468, %v2469
        %v2471 = vrot.slane %v1803, 1
        %v2472 = vrot.slane %v1805, 1
        %v2473 = vsel %vm2428, %v2471, %v2472
        %v2474 = vrot.slane %v1807, 1
        %v2475 = vrot.slane %v1809, 1
        %v2476 = vsel %vm2428, %v2474, %v2475
        %s2477 = scalar_lea.vmem %s3, 16
        %v2478 = vld [vmem:[%s2477] sm:$0xf]
        %v2479 = vld [vmem:[%s2477 + $0x4] sm:$0x3]
        %v2482 = vunpack.c.l.b16 %v2478
        %v2483 = vunpack.c.l.b16 %v2479
        %v2484 = vpack.c.b16 %v2483, %v2482
        %v2486 = vsel %vm1981, %v2431, 0
        %v2489 = vsel %vm1981, %v2434, 0
        %v2492 = vsel %vm1981, %v2437, 0
        %v2495 = vsel %vm1981, %v2440, 0
        %v2498 = vsel %vm1981, %v2443, 0
        %v2501 = vsel %vm1981, %v2446, 0
        %v2504 = vsel %vm1981, %v2449, 0
        %v2507 = vsel %vm1981, %v2452, 0
        %v2510 = vsel %vm1981, %v2455, 0
        %v2513 = vsel %vm1981, %v2458, 0
        %v2516 = vsel %vm1981, %v2461, 0
        %v2519 = vsel %vm1981, %v2464, 0
        %v2522 = vsel %vm1981, %v2467, 0
        %v2525 = vsel %vm1981, %v2470, 0
        %v2528 = vsel %vm1981, %v2473, 0
        %v2531 = vsel %vm1981, %v2476, 0
        %v2534 = vsel %vm2030, %v2484, 0
        %2536 = vmatprep.subr.bf16.mxu0 0
        %2537 = vmatpush1.bf16.msra.mxu0 %v2534
        %2538 = vmatprep.subr.bf16.mxu0 0
        %2539 = vmatpush1.bf16.msra.mxu0 0
        %2540 = vmatprep.subr.bf16.mxu0 0
        %2541 = vmatpush1.bf16.msra.mxu0 0
        %2542 = vmatprep.subr.bf16.mxu0 0
        %2543 = vmatpush1.bf16.msra.mxu0 0
        %2544 = vmatprep.subr.bf16.mxu0 0
        %2545 = vmatpush1.bf16.msra.mxu0 0
        %2546 = vmatprep.subr.bf16.mxu0 0
        %2547 = vmatpush1.bf16.msra.mxu0 0
        %2548 = vmatprep.subr.bf16.mxu0 0
        %2549 = vmatpush1.bf16.msra.mxu0 0
        %2550 = vmatprep.subr.bf16.mxu0 0
        %2551 = vmatpush1.bf16.msra.mxu0 0
        %2552 = vmatprep.subr.bf16.mxu0 0
        %2553 = vmatpush1.bf16.msra.mxu0 0
        %2554 = vmatprep.subr.bf16.mxu0 0
        %2555 = vmatpush1.bf16.msra.mxu0 0
        %2556 = vmatprep.subr.bf16.mxu0 0
        %2557 = vmatpush1.bf16.msra.mxu0 0
        %2558 = vmatprep.subr.bf16.mxu0 0
        %2559 = vmatpush1.bf16.msra.mxu0 0
        %2560 = vmatprep.subr.bf16.mxu0 0
        %2561 = vmatpush1.bf16.msra.mxu0 0
        %2562 = vmatprep.subr.bf16.mxu0 0
        %2563 = vmatpush1.bf16.msra.mxu0 0
        %2564 = vmatprep.subr.bf16.mxu0 0
        %2565 = vmatpush1.bf16.msra.mxu0 0
        %2566 = vmatprep.subr.bf16.mxu0 0
        %2567 = vmatpush1.bf16.msra.mxu0 0
        %2568 = vmatprep.mubr.bf16.mxu0 0
        %2569 = vmatmul.mubr.bf16.gmra.mrb[0].mxu0 %v2486
        %v2570 = vpop.f32.mrb[0].mxu0
        %v2571 = vadd.f32 0.0, %v2570
        %v2572 = vpop.f32.mrb[0].mxu0
        %v2573 = vpop.f32.mrb[0].mxu0
        %v2574 = vadd.f32 0.0, %v2573
        %v2575 = vpop.f32.mrb[0].mxu0
        %2576 = vmatprep.mubr.bf16.mxu0 0
        %2577 = vmatmul.mubr.bf16.gmra.mrb[0].mxu0 %v2489
        %v2578 = vpop.f32.mrb[0].mxu0
        %v2579 = vadd.f32 0.0, %v2578
        %v2580 = vpop.f32.mrb[0].mxu0
        %v2581 = vpop.f32.mrb[0].mxu0
        %v2582 = vadd.f32 0.0, %v2581
        %v2583 = vpop.f32.mrb[0].mxu0
        %2584 = vmatprep.mubr.bf16.mxu0 0
        %2585 = vmatmul.mubr.bf16.gmra.mrb[0].mxu0 %v2492
        %v2586 = vpop.f32.mrb[0].mxu0
        %v2587 = vadd.f32 0.0, %v2586
        %v2588 = vpop.f32.mrb[0].mxu0
        %v2589 = vpop.f32.mrb[0].mxu0
        %v2590 = vadd.f32 0.0, %v2589
        %v2591 = vpop.f32.mrb[0].mxu0
        %2592 = vmatprep.mubr.bf16.mxu0 0
        %2593 = vmatmul.mubr.bf16.gmra.mrb[0].mxu0 %v2495
        %v2594 = vpop.f32.mrb[0].mxu0
        %v2595 = vadd.f32 0.0, %v2594
        %v2596 = vpop.f32.mrb[0].mxu0
        %v2597 = vpop.f32.mrb[0].mxu0
        %v2598 = vadd.f32 0.0, %v2597
        %v2599 = vpop.f32.mrb[0].mxu0
        %2600 = vmatprep.mubr.bf16.mxu0 0
        %2601 = vmatmul.mubr.bf16.gmra.mrb[0].mxu0 %v2498
        %v2602 = vpop.f32.mrb[0].mxu0
        %v2603 = vadd.f32 0.0, %v2602
        %v2604 = vpop.f32.mrb[0].mxu0
        %v2605 = vpop.f32.mrb[0].mxu0
        %v2606 = vadd.f32 0.0, %v2605
        %v2607 = vpop.f32.mrb[0].mxu0
        %2608 = vmatprep.mubr.bf16.mxu0 0
        %2609 = vmatmul.mubr.bf16.gmra.mrb[0].mxu0 %v2501
        %v2610 = vpop.f32.mrb[0].mxu0
        %v2611 = vadd.f32 0.0, %v2610
        %v2612 = vpop.f32.mrb[0].mxu0
        %v2613 = vpop.f32.mrb[0].mxu0
        %v2614 = vadd.f32 0.0, %v2613
        %v2615 = vpop.f32.mrb[0].mxu0
        %2616 = vmatprep.mubr.bf16.mxu0 0
        %2617 = vmatmul.mubr.bf16.gmra.mrb[0].mxu0 %v2504
        %v2618 = vpop.f32.mrb[0].mxu0
        %v2619 = vadd.f32 0.0, %v2618
        %v2620 = vpop.f32.mrb[0].mxu0
        %v2621 = vpop.f32.mrb[0].mxu0
        %v2622 = vadd.f32 0.0, %v2621
        %v2623 = vpop.f32.mrb[0].mxu0
        %2624 = vmatprep.mubr.bf16.mxu0 0
        %2625 = vmatmul.mubr.bf16.gmra.mrb[0].mxu0 %v2507
        %v2626 = vpop.f32.mrb[0].mxu0
        %v2627 = vadd.f32 0.0, %v2626
        %v2628 = vpop.f32.mrb[0].mxu0
        %v2629 = vpop.f32.mrb[0].mxu0
        %v2630 = vadd.f32 0.0, %v2629
        %v2631 = vpop.f32.mrb[0].mxu0
        %2632 = vmatprep.mubr.bf16.mxu0 0
        %2633 = vmatmul.mubr.bf16.gmra.mrb[0].mxu0 %v2510
        %v2634 = vpop.f32.mrb[0].mxu0
        %v2635 = vadd.f32 0.0, %v2634
        %v2636 = vpop.f32.mrb[0].mxu0
        %v2637 = vpop.f32.mrb[0].mxu0
        %v2638 = vadd.f32 0.0, %v2637
        %v2639 = vpop.f32.mrb[0].mxu0
        %2640 = vmatprep.mubr.bf16.mxu0 0
        %2641 = vmatmul.mubr.bf16.gmra.mrb[0].mxu0 %v2513
        %v2642 = vpop.f32.mrb[0].mxu0
        %v2643 = vadd.f32 0.0, %v2642
        %v2644 = vpop.f32.mrb[0].mxu0
        %v2645 = vpop.f32.mrb[0].mxu0
        %v2646 = vadd.f32 0.0, %v2645
        %v2647 = vpop.f32.mrb[0].mxu0
        %2648 = vmatprep.mubr.bf16.mxu0 0
        %2649 = vmatmul.mubr.bf16.gmra.mrb[0].mxu0 %v2516
        %v2650 = vpop.f32.mrb[0].mxu0
        %v2651 = vadd.f32 0.0, %v2650
        %v2652 = vpop.f32.mrb[0].mxu0
        %v2653 = vpop.f32.mrb[0].mxu0
        %v2654 = vadd.f32 0.0, %v2653
        %v2655 = vpop.f32.mrb[0].mxu0
        %2656 = vmatprep.mubr.bf16.mxu0 0
        %2657 = vmatmul.mubr.bf16.gmra.mrb[0].mxu0 %v2519
        %v2658 = vpop.f32.mrb[0].mxu0
        %v2659 = vadd.f32 0.0, %v2658
        %v2660 = vpop.f32.mrb[0].mxu0
        %v2661 = vpop.f32.mrb[0].mxu0
        %v2662 = vadd.f32 0.0, %v2661
        %v2663 = vpop.f32.mrb[0].mxu0
        %2664 = vmatprep.mubr.bf16.mxu0 0
        %2665 = vmatmul.mubr.bf16.gmra.mrb[0].mxu0 %v2522
        %v2666 = vpop.f32.mrb[0].mxu0
        %v2667 = vadd.f32 0.0, %v2666
        %v2668 = vpop.f32.mrb[0].mxu0
        %v2669 = vpop.f32.mrb[0].mxu0
        %v2670 = vadd.f32 0.0, %v2669
        %v2671 = vpop.f32.mrb[0].mxu0
        %2672 = vmatprep.mubr.bf16.mxu0 0
        %2673 = vmatmul.mubr.bf16.gmra.mrb[0].mxu0 %v2525
        %v2674 = vpop.f32.mrb[0].mxu0
        %v2675 = vadd.f32 0.0, %v2674
        %v2676 = vpop.f32.mrb[0].mxu0
        %v2677 = vpop.f32.mrb[0].mxu0
        %v2678 = vadd.f32 0.0, %v2677
        %v2679 = vpop.f32.mrb[0].mxu0
        %2680 = vmatprep.mubr.bf16.mxu0 0
        %2681 = vmatmul.mubr.bf16.gmra.mrb[0].mxu0 %v2528
        %v2682 = vpop.f32.mrb[0].mxu0
        %v2683 = vadd.f32 0.0, %v2682
        %v2684 = vpop.f32.mrb[0].mxu0
        %v2685 = vpop.f32.mrb[0].mxu0
        %v2686 = vadd.f32 0.0, %v2685
        %v2687 = vpop.f32.mrb[0].mxu0
        %2688 = vmatprep.mubr.bf16.mxu0 0
        %2689 = vmatmul.mubr.bf16.gmra.mrb[0].mxu0 %v2531
        %v2690 = vpop.f32.mrb[0].mxu0
        %v2691 = vadd.f32 0.0, %v2690
        %v2692 = vpop.f32.mrb[0].mxu0
        %v2693 = vpop.f32.mrb[0].mxu0
        %v2694 = vadd.f32 0.0, %v2693
        %v2695 = vpop.f32.mrb[0].mxu0
        %2696 = vdwg.mxu0
        %v2697 = vadd.f32 %v2270, %v2571
        %v2698 = vadd.f32 %v2273, %v2574
        %v2699 = vadd.f32 %v2278, %v2579
        %v2700 = vadd.f32 %v2281, %v2582
        %v2701 = vadd.f32 %v2286, %v2587
        %v2702 = vadd.f32 %v2289, %v2590
        %v2703 = vadd.f32 %v2294, %v2595
        %v2704 = vadd.f32 %v2297, %v2598
        %v2705 = vadd.f32 %v2302, %v2603
        %v2706 = vadd.f32 %v2305, %v2606
        %v2707 = vadd.f32 %v2310, %v2611
        %v2708 = vadd.f32 %v2313, %v2614
        %v2709 = vadd.f32 %v2318, %v2619
        %v2710 = vadd.f32 %v2321, %v2622
        %v2711 = vadd.f32 %v2326, %v2627
        %v2712 = vadd.f32 %v2329, %v2630
        %v2713 = vadd.f32 %v2334, %v2635
        %v2714 = vadd.f32 %v2337, %v2638
        %v2715 = vadd.f32 %v2342, %v2643
        %v2716 = vadd.f32 %v2345, %v2646
        %v2717 = vadd.f32 %v2350, %v2651
        %v2718 = vadd.f32 %v2353, %v2654
        %v2719 = vadd.f32 %v2358, %v2659
        %v2720 = vadd.f32 %v2361, %v2662
        %v2721 = vadd.f32 %v2366, %v2667
        %v2722 = vadd.f32 %v2369, %v2670
        %v2723 = vadd.f32 %v2374, %v2675
        %v2724 = vadd.f32 %v2377, %v2678
        %v2725 = vadd.f32 %v2382, %v2683
        %v2726 = vadd.f32 %v2385, %v2686
        %v2727 = vadd.f32 %v2390, %v2691
        %v2728 = vadd.f32 %v2393, %v2694
        %v2729 = vld [vmem:[%s4] sm:$0x1]
        %v2731 = vlaneseq
        %v2732 = vshrl.u32 %v2731, 7
        %v2733 = vsub.s32 0, %v2732
        %v2734 = vrot.slane %v2729, %v2733
        %v2736 = vadd.f32 %v2697, %v2734
        %v2737 = vadd.f32 %v2698, %v2734
        %v2738 = vadd.f32 %v2699, %v2734
        %v2739 = vadd.f32 %v2700, %v2734
        %v2740 = vadd.f32 %v2701, %v2734
        %v2741 = vadd.f32 %v2702, %v2734
        %v2742 = vadd.f32 %v2703, %v2734
        %v2743 = vadd.f32 %v2704, %v2734
        %v2744 = vadd.f32 %v2705, %v2734
        %v2745 = vadd.f32 %v2706, %v2734
        %v2746 = vadd.f32 %v2707, %v2734
        %v2747 = vadd.f32 %v2708, %v2734
        %v2748 = vadd.f32 %v2709, %v2734
        %v2749 = vadd.f32 %v2710, %v2734
        %v2750 = vadd.f32 %v2711, %v2734
        %v2751 = vadd.f32 %v2712, %v2734
        %v2752 = vadd.f32 %v2713, %v2734
        %v2753 = vadd.f32 %v2714, %v2734
        %v2754 = vadd.f32 %v2715, %v2734
        %v2755 = vadd.f32 %v2716, %v2734
        %v2756 = vadd.f32 %v2717, %v2734
        %v2757 = vadd.f32 %v2718, %v2734
        %v2758 = vadd.f32 %v2719, %v2734
        %v2759 = vadd.f32 %v2720, %v2734
        %v2760 = vadd.f32 %v2721, %v2734
        %v2761 = vadd.f32 %v2722, %v2734
        %v2762 = vadd.f32 %v2723, %v2734
        %v2763 = vadd.f32 %v2724, %v2734
        %v2764 = vadd.f32 %v2725, %v2734
        %v2765 = vadd.f32 %v2726, %v2734
        %v2766 = vadd.f32 %v2727, %v2734
        %v2767 = vadd.f32 %v2728, %v2734
        %v2768 = vmax.f32 %v2736, 0.0
        %v2769 = vmax.f32 %v2737, 0.0
        %v2770 = vmax.f32 %v2738, 0.0
        %v2771 = vmax.f32 %v2739, 0.0
        %v2772 = vmax.f32 %v2740, 0.0
        %v2773 = vmax.f32 %v2741, 0.0
        %v2774 = vmax.f32 %v2742, 0.0
        %v2775 = vmax.f32 %v2743, 0.0
        %v2776 = vmax.f32 %v2744, 0.0
        %v2777 = vmax.f32 %v2745, 0.0
        %v2778 = vmax.f32 %v2746, 0.0
        %v2779 = vmax.f32 %v2747, 0.0
        %v2780 = vmax.f32 %v2748, 0.0
        %v2781 = vmax.f32 %v2749, 0.0
        %v2782 = vmax.f32 %v2750, 0.0
        %v2783 = vmax.f32 %v2751, 0.0
        %v2784 = vmax.f32 %v2752, 0.0
        %v2785 = vmax.f32 %v2753, 0.0
        %v2786 = vmax.f32 %v2754, 0.0
        %v2787 = vmax.f32 %v2755, 0.0
        %v2788 = vmax.f32 %v2756, 0.0
        %v2789 = vmax.f32 %v2757, 0.0
        %v2790 = vmax.f32 %v2758, 0.0
        %v2791 = vmax.f32 %v2759, 0.0
        %v2792 = vmax.f32 %v2760, 0.0
        %v2793 = vmax.f32 %v2761, 0.0
        %v2794 = vmax.f32 %v2762, 0.0
        %v2795 = vmax.f32 %v2763, 0.0
        %v2796 = vmax.f32 %v2764, 0.0
        %v2797 = vmax.f32 %v2765, 0.0
        %v2798 = vmax.f32 %v2766, 0.0
        %v2799 = vmax.f32 %v2767, 0.0
        %v2800 = vpack.c.bf16 %v2769, %v2768
        %v2801 = vpack.c.bf16 %v2771, %v2770
        %v2802 = vpack.c.bf16 %v2773, %v2772
        %v2803 = vpack.c.bf16 %v2775, %v2774
        %v2804 = vpack.c.bf16 %v2777, %v2776
        %v2805 = vpack.c.bf16 %v2779, %v2778
        %v2806 = vpack.c.bf16 %v2781, %v2780
        %v2807 = vpack.c.bf16 %v2783, %v2782
        %v2808 = vpack.c.bf16 %v2785, %v2784
        %v2809 = vpack.c.bf16 %v2787, %v2786
        %v2810 = vpack.c.bf16 %v2789, %v2788
        %v2811 = vpack.c.bf16 %v2791, %v2790
        %v2812 = vpack.c.bf16 %v2793, %v2792
        %v2813 = vpack.c.bf16 %v2795, %v2794
        %v2814 = vpack.c.bf16 %v2797, %v2796
        %v2815 = vpack.c.bf16 %v2799, %v2798
        %v2816 = vld [vmem:[%s5] sm:$0x3]
        %v2817 = vld [vmem:[%s6] sm:$0x1]
        %v2819 = vlaneseq
        %v2820 = vshrl.u32 %v2819, 7
        %v2821 = vsub.s32 0, %v2820
        %v2822 = vrot.slane %v2817, %v2821
        %v2825 = vsel %vm1648, %v2800, 0
        %v2828 = vsel %vm1648, %v2801, 0
        %v2831 = vsel %vm1648, %v2802, 0
        %v2834 = vsel %vm1648, %v2803, 0
        %v2837 = vsel %vm1648, %v2804, 0
        %v2840 = vsel %vm1648, %v2805, 0
        %v2843 = vsel %vm1648, %v2806, 0
        %v2846 = vsel %vm1648, %v2807, 0
        %v2849 = vsel %vm1648, %v2808, 0
        %v2852 = vsel %vm1648, %v2809, 0
        %v2855 = vsel %vm1648, %v2810, 0
        %v2858 = vsel %vm1648, %v2811, 0
        %v2861 = vsel %vm1648, %v2812, 0
        %v2864 = vsel %vm1648, %v2813, 0
        %v2867 = vsel %vm1648, %v2814, 0
        %v2870 = vsel %vm1648, %v2815, 0
        %vm2872 = vcmask 1041408
        %v2874 = vsel %vm2872, %v2816, 0
        %2876 = vmatprep.subr.bf16.mxu0 0
        %2877 = vmatpush1.bf16.msra.mxu0 %v2874
        %2878 = vmatprep.subr.bf16.mxu0 0
        %2879 = vmatpush1.bf16.msra.mxu0 0
        %2880 = vmatprep.subr.bf16.mxu0 0
        %2881 = vmatpush1.bf16.msra.mxu0 0
        %2882 = vmatprep.subr.bf16.mxu0 0
        %2883 = vmatpush1.bf16.msra.mxu0 0
        %2884 = vmatprep.subr.bf16.mxu0 0
        %2885 = vmatpush1.bf16.msra.mxu0 0
        %2886 = vmatprep.subr.bf16.mxu0 0
        %2887 = vmatpush1.bf16.msra.mxu0 0
        %2888 = vmatprep.subr.bf16.mxu0 0
        %2889 = vmatpush1.bf16.msra.mxu0 0
        %2890 = vmatprep.subr.bf16.mxu0 0
        %2891 = vmatpush1.bf16.msra.mxu0 0
        %2892 = vmatprep.subr.bf16.mxu0 0
        %2893 = vmatpush1.bf16.msra.mxu0 0
        %2894 = vmatprep.subr.bf16.mxu0 0
        %2895 = vmatpush1.bf16.msra.mxu0 0
        %2896 = vmatprep.subr.bf16.mxu0 0
        %2897 = vmatpush1.bf16.msra.mxu0 0
        %2898 = vmatprep.subr.bf16.mxu0 0
        %2899 = vmatpush1.bf16.msra.mxu0 0
        %2900 = vmatprep.subr.bf16.mxu0 0
        %2901 = vmatpush1.bf16.msra.mxu0 0
        %2902 = vmatprep.subr.bf16.mxu0 0
        %2903 = vmatpush1.bf16.msra.mxu0 0
        %2904 = vmatprep.subr.bf16.mxu0 0
        %2905 = vmatpush1.bf16.msra.mxu0 0
        %2906 = vmatprep.subr.bf16.mxu0 0
        %2907 = vmatpush1.bf16.msra.mxu0 0
        %2908 = vmatprep.mubr.bf16.mxu0 0
        %2909 = vmatmul.mubr.bf16.gmra.mrb[0].mxu0 %v2825
        %v2910 = vpop.f32.mrb[0].mxu0
        %v2911 = vadd.f32 %v2822, %v2910
        %v2912 = vpop.f32.mrb[0].mxu0
        %v2913 = vpop.f32.mrb[0].mxu0
        %v2914 = vadd.f32 %v2822, %v2913
        %v2915 = vpop.f32.mrb[0].mxu0
        %2916 = vmatprep.mubr.bf16.mxu0 0
        %2917 = vmatmul.mubr.bf16.gmra.mrb[0].mxu0 %v2828
        %v2918 = vpop.f32.mrb[0].mxu0
        %v2919 = vadd.f32 %v2822, %v2918
        %v2920 = vpop.f32.mrb[0].mxu0
        %v2921 = vpop.f32.mrb[0].mxu0
        %v2922 = vadd.f32 %v2822, %v2921
        %v2923 = vpop.f32.mrb[0].mxu0
        %2924 = vmatprep.mubr.bf16.mxu0 0
        %2925 = vmatmul.mubr.bf16.gmra.mrb[0].mxu0 %v2831
        %v2926 = vpop.f32.mrb[0].mxu0
        %v2927 = vadd.f32 %v2822, %v2926
        %v2928 = vpop.f32.mrb[0].mxu0
        %v2929 = vpop.f32.mrb[0].mxu0
        %v2930 = vadd.f32 %v2822, %v2929
        %v2931 = vpop.f32.mrb[0].mxu0
        %2932 = vmatprep.mubr.bf16.mxu0 0
        %2933 = vmatmul.mubr.bf16.gmra.mrb[0].mxu0 %v2834
        %v2934 = vpop.f32.mrb[0].mxu0
        %v2935 = vadd.f32 %v2822, %v2934
        %v2936 = vpop.f32.mrb[0].mxu0
        %v2937 = vpop.f32.mrb[0].mxu0
        %v2938 = vadd.f32 %v2822, %v2937
        %v2939 = vpop.f32.mrb[0].mxu0
        %2940 = vmatprep.mubr.bf16.mxu0 0
        %2941 = vmatmul.mubr.bf16.gmra.mrb[0].mxu0 %v2837
        %v2942 = vpop.f32.mrb[0].mxu0
        %v2943 = vadd.f32 %v2822, %v2942
        %v2944 = vpop.f32.mrb[0].mxu0
        %v2945 = vpop.f32.mrb[0].mxu0
        %v2946 = vadd.f32 %v2822, %v2945
        %v2947 = vpop.f32.mrb[0].mxu0
        %2948 = vmatprep.mubr.bf16.mxu0 0
        %2949 = vmatmul.mubr.bf16.gmra.mrb[0].mxu0 %v2840
        %v2950 = vpop.f32.mrb[0].mxu0
        %v2951 = vadd.f32 %v2822, %v2950
        %v2952 = vpop.f32.mrb[0].mxu0
        %v2953 = vpop.f32.mrb[0].mxu0
        %v2954 = vadd.f32 %v2822, %v2953
        %v2955 = vpop.f32.mrb[0].mxu0
        %2956 = vmatprep.mubr.bf16.mxu0 0
        %2957 = vmatmul.mubr.bf16.gmra.mrb[0].mxu0 %v2843
        %v2958 = vpop.f32.mrb[0].mxu0
        %v2959 = vadd.f32 %v2822, %v2958
        %v2960 = vpop.f32.mrb[0].mxu0
        %v2961 = vpop.f32.mrb[0].mxu0
        %v2962 = vadd.f32 %v2822, %v2961
        %v2963 = vpop.f32.mrb[0].mxu0
        %2964 = vmatprep.mubr.bf16.mxu0 0
        %2965 = vmatmul.mubr.bf16.gmra.mrb[0].mxu0 %v2846
        %v2966 = vpop.f32.mrb[0].mxu0
        %v2967 = vadd.f32 %v2822, %v2966
        %v2968 = vpop.f32.mrb[0].mxu0
        %v2969 = vpop.f32.mrb[0].mxu0
        %v2970 = vadd.f32 %v2822, %v2969
        %v2971 = vpop.f32.mrb[0].mxu0
        %2972 = vmatprep.mubr.bf16.mxu0 0
        %2973 = vmatmul.mubr.bf16.gmra.mrb[0].mxu0 %v2849
        %v2974 = vpop.f32.mrb[0].mxu0
        %v2975 = vadd.f32 %v2822, %v2974
        %v2976 = vpop.f32.mrb[0].mxu0
        %v2977 = vpop.f32.mrb[0].mxu0
        %v2978 = vadd.f32 %v2822, %v2977
        %v2979 = vpop.f32.mrb[0].mxu0
        %2980 = vmatprep.mubr.bf16.mxu0 0
        %2981 = vmatmul.mubr.bf16.gmra.mrb[0].mxu0 %v2852
        %v2982 = vpop.f32.mrb[0].mxu0
        %v2983 = vadd.f32 %v2822, %v2982
        %v2984 = vpop.f32.mrb[0].mxu0
        %v2985 = vpop.f32.mrb[0].mxu0
        %v2986 = vadd.f32 %v2822, %v2985
        %v2987 = vpop.f32.mrb[0].mxu0
        %2988 = vmatprep.mubr.bf16.mxu0 0
        %2989 = vmatmul.mubr.bf16.gmra.mrb[0].mxu0 %v2855
        %v2990 = vpop.f32.mrb[0].mxu0
        %v2991 = vadd.f32 %v2822, %v2990
        %v2992 = vpop.f32.mrb[0].mxu0
        %v2993 = vpop.f32.mrb[0].mxu0
        %v2994 = vadd.f32 %v2822, %v2993
        %v2995 = vpop.f32.mrb[0].mxu0
        %2996 = vmatprep.mubr.bf16.mxu0 0
        %2997 = vmatmul.mubr.bf16.gmra.mrb[0].mxu0 %v2858
        %v2998 = vpop.f32.mrb[0].mxu0
        %v2999 = vadd.f32 %v2822, %v2998
        %v3000 = vpop.f32.mrb[0].mxu0
        %v3001 = vpop.f32.mrb[0].mxu0
        %v3002 = vadd.f32 %v2822, %v3001
        %v3003 = vpop.f32.mrb[0].mxu0
        %3004 = vmatprep.mubr.bf16.mxu0 0
        %3005 = vmatmul.mubr.bf16.gmra.mrb[0].mxu0 %v2861
        %v3006 = vpop.f32.mrb[0].mxu0
        %v3007 = vadd.f32 %v2822, %v3006
        %v3008 = vpop.f32.mrb[0].mxu0
        %v3009 = vpop.f32.mrb[0].mxu0
        %v3010 = vadd.f32 %v2822, %v3009
        %v3011 = vpop.f32.mrb[0].mxu0
        %3012 = vmatprep.mubr.bf16.mxu0 0
        %3013 = vmatmul.mubr.bf16.gmra.mrb[0].mxu0 %v2864
        %v3014 = vpop.f32.mrb[0].mxu0
        %v3015 = vadd.f32 %v2822, %v3014
        %v3016 = vpop.f32.mrb[0].mxu0
        %v3017 = vpop.f32.mrb[0].mxu0
        %v3018 = vadd.f32 %v2822, %v3017
        %v3019 = vpop.f32.mrb[0].mxu0
        %3020 = vmatprep.mubr.bf16.mxu0 0
        %3021 = vmatmul.mubr.bf16.gmra.mrb[0].mxu0 %v2867
        %v3022 = vpop.f32.mrb[0].mxu0
        %v3023 = vadd.f32 %v2822, %v3022
        %v3024 = vpop.f32.mrb[0].mxu0
        %v3025 = vpop.f32.mrb[0].mxu0
        %v3026 = vadd.f32 %v2822, %v3025
        %v3027 = vpop.f32.mrb[0].mxu0
        %3028 = vmatprep.mubr.bf16.mxu0 0
        %3029 = vmatmul.mubr.bf16.gmra.mrb[0].mxu0 %v2870
        %v3030 = vpop.f32.mrb[0].mxu0
        %v3031 = vadd.f32 %v2822, %v3030
        %v3032 = vpop.f32.mrb[0].mxu0
        %v3033 = vpop.f32.mrb[0].mxu0
        %v3034 = vadd.f32 %v2822, %v3033
        %v3035 = vpop.f32.mrb[0].mxu0
        %3036 = vdwg.mxu0
        %v3037 = vld [vmem:[%s266] sm:$0xf]
        %v3038 = vld [vmem:[%s266 + $0x4] sm:$0xf]
        %v3039 = vld [vmem:[%s266 + $0x8] sm:$0xf]
        %v3040 = vld [vmem:[%s266 + $0xc] sm:$0xf]
        %v3041 = vld [vmem:[%s266 + $0x10] sm:$0xf]
        %v3042 = vld [vmem:[%s266 + $0x14] sm:$0xf]
        %v3043 = vld [vmem:[%s266 + $0x18] sm:$0xf]
        %v3044 = vld [vmem:[%s266 + $0x1c] sm:$0xf]
        %v3045 = vld [vmem:[%s266 + $0x20] sm:$0xf]
        %v3046 = vld [vmem:[%s266 + $0x24] sm:$0xf]
        %v3047 = vld [vmem:[%s266 + $0x28] sm:$0xf]
        %v3048 = vld [vmem:[%s266 + $0x2c] sm:$0xf]
        %v3049 = vld [vmem:[%s266 + $0x30] sm:$0xf]
        %v3050 = vld [vmem:[%s266 + $0x34] sm:$0xf]
        %v3051 = vld [vmem:[%s266 + $0x38] sm:$0xf]
        %v3052 = vld [vmem:[%s266 + $0x3c] sm:$0xf]
        %v3053 = vld [vmem:[%s266 + $0x40] sm:$0xf]
        %v3054 = vld [vmem:[%s266 + $0x44] sm:$0xf]
        %v3055 = vld [vmem:[%s266 + $0x48] sm:$0xf]
        %v3056 = vld [vmem:[%s266 + $0x4c] sm:$0xf]
        %v3057 = vld [vmem:[%s266 + $0x50] sm:$0xf]
        %v3058 = vld [vmem:[%s266 + $0x54] sm:$0xf]
        %v3059 = vld [vmem:[%s266 + $0x58] sm:$0xf]
        %v3060 = vld [vmem:[%s266 + $0x5c] sm:$0xf]
        %v3061 = vld [vmem:[%s266 + $0x60] sm:$0xf]
        %v3062 = vld [vmem:[%s266 + $0x64] sm:$0xf]
        %v3063 = vld [vmem:[%s266 + $0x68] sm:$0xf]
        %v3064 = vld [vmem:[%s266 + $0x6c] sm:$0xf]
        %v3065 = vld [vmem:[%s266 + $0x70] sm:$0xf]
        %v3066 = vld [vmem:[%s266 + $0x74] sm:$0xf]
        %v3067 = vld [vmem:[%s266 + $0x78] sm:$0xf]
        %v3068 = vld [vmem:[%s266 + $0x7c] sm:$0xf]
        %v3069 = vunpack.c.l.bf16 %v3037
        %v3070 = vunpack.c.l.bf16 %v3038
        %v3071 = vunpack.c.l.bf16 %v3039
        %v3072 = vunpack.c.l.bf16 %v3040
        %v3073 = vunpack.c.l.bf16 %v3041
        %v3074 = vunpack.c.l.bf16 %v3042
        %v3075 = vunpack.c.l.bf16 %v3043
        %v3076 = vunpack.c.l.bf16 %v3044
        %v3077 = vunpack.c.l.bf16 %v3045
        %v3078 = vunpack.c.l.bf16 %v3046
        %v3079 = vunpack.c.l.bf16 %v3047
        %v3080 = vunpack.c.l.bf16 %v3048
        %v3081 = vunpack.c.l.bf16 %v3049
        %v3082 = vunpack.c.l.bf16 %v3050
        %v3083 = vunpack.c.l.bf16 %v3051
        %v3084 = vunpack.c.l.bf16 %v3052
        %v3085 = vunpack.c.l.bf16 %v3053
        %v3086 = vunpack.c.l.bf16 %v3054
        %v3087 = vunpack.c.l.bf16 %v3055
        %v3088 = vunpack.c.l.bf16 %v3056
        %v3089 = vunpack.c.l.bf16 %v3057
        %v3090 = vunpack.c.l.bf16 %v3058
        %v3091 = vunpack.c.l.bf16 %v3059
        %v3092 = vunpack.c.l.bf16 %v3060
        %v3093 = vunpack.c.l.bf16 %v3061
        %v3094 = vunpack.c.l.bf16 %v3062
        %v3095 = vunpack.c.l.bf16 %v3063
        %v3096 = vunpack.c.l.bf16 %v3064
        %v3097 = vunpack.c.l.bf16 %v3065
        %v3098 = vunpack.c.l.bf16 %v3066
        %v3099 = vunpack.c.l.bf16 %v3067
        %v3100 = vunpack.c.l.bf16 %v3068
        %v3101 = vadd.f32 %v2911, %v3069
        %v3102 = vadd.f32 %v2914, %v3070
        %v3103 = vadd.f32 %v2919, %v3071
        %v3104 = vadd.f32 %v2922, %v3072
        %v3105 = vadd.f32 %v2927, %v3073
        %v3106 = vadd.f32 %v2930, %v3074
        %v3107 = vadd.f32 %v2935, %v3075
        %v3108 = vadd.f32 %v2938, %v3076
        %v3109 = vadd.f32 %v2943, %v3077
        %v3110 = vadd.f32 %v2946, %v3078
        %v3111 = vadd.f32 %v2951, %v3079
        %v3112 = vadd.f32 %v2954, %v3080
        %v3113 = vadd.f32 %v2959, %v3081
        %v3114 = vadd.f32 %v2962, %v3082
        %v3115 = vadd.f32 %v2967, %v3083
        %v3116 = vadd.f32 %v2970, %v3084
        %v3117 = vadd.f32 %v2975, %v3085
        %v3118 = vadd.f32 %v2978, %v3086
        %v3119 = vadd.f32 %v2983, %v3087
        %v3120 = vadd.f32 %v2986, %v3088
        %v3121 = vadd.f32 %v2991, %v3089
        %v3122 = vadd.f32 %v2994, %v3090
        %v3123 = vadd.f32 %v2999, %v3091
        %v3124 = vadd.f32 %v3002, %v3092
        %v3125 = vadd.f32 %v3007, %v3093
        %v3126 = vadd.f32 %v3010, %v3094
        %v3127 = vadd.f32 %v3015, %v3095
        %v3128 = vadd.f32 %v3018, %v3096
        %v3129 = vadd.f32 %v3023, %v3097
        %v3130 = vadd.f32 %v3026, %v3098
        %v3131 = vadd.f32 %v3031, %v3099
        %v3132 = vadd.f32 %v3034, %v3100
        %v3133 = vmax.f32 %v3101, 0.0
        %v3134 = vmax.f32 %v3102, 0.0
        %v3135 = vmax.f32 %v3103, 0.0
        %v3136 = vmax.f32 %v3104, 0.0
        %v3137 = vmax.f32 %v3105, 0.0
        %v3138 = vmax.f32 %v3106, 0.0
        %v3139 = vmax.f32 %v3107, 0.0
        %v3140 = vmax.f32 %v3108, 0.0
        %v3141 = vmax.f32 %v3109, 0.0
        %v3142 = vmax.f32 %v3110, 0.0
        %v3143 = vmax.f32 %v3111, 0.0
        %v3144 = vmax.f32 %v3112, 0.0
        %v3145 = vmax.f32 %v3113, 0.0
        %v3146 = vmax.f32 %v3114, 0.0
        %v3147 = vmax.f32 %v3115, 0.0
        %v3148 = vmax.f32 %v3116, 0.0
        %v3149 = vmax.f32 %v3117, 0.0
        %v3150 = vmax.f32 %v3118, 0.0
        %v3151 = vmax.f32 %v3119, 0.0
        %v3152 = vmax.f32 %v3120, 0.0
        %v3153 = vmax.f32 %v3121, 0.0
        %v3154 = vmax.f32 %v3122, 0.0
        %v3155 = vmax.f32 %v3123, 0.0
        %v3156 = vmax.f32 %v3124, 0.0
        %v3157 = vmax.f32 %v3125, 0.0
        %v3158 = vmax.f32 %v3126, 0.0
        %v3159 = vmax.f32 %v3127, 0.0
        %v3160 = vmax.f32 %v3128, 0.0
        %v3161 = vmax.f32 %v3129, 0.0
        %v3162 = vmax.f32 %v3130, 0.0
        %v3163 = vmax.f32 %v3131, 0.0
        %v3164 = vmax.f32 %v3132, 0.0
        %v3165 = vpack.c.bf16 %v3134, %v3133
        %v3166 = vpack.c.bf16 %v3136, %v3135
        %v3167 = vpack.c.bf16 %v3138, %v3137
        %v3168 = vpack.c.bf16 %v3140, %v3139
        %v3169 = vpack.c.bf16 %v3142, %v3141
        %v3170 = vpack.c.bf16 %v3144, %v3143
        %v3171 = vpack.c.bf16 %v3146, %v3145
        %v3172 = vpack.c.bf16 %v3148, %v3147
        %v3173 = vpack.c.bf16 %v3150, %v3149
        %v3174 = vpack.c.bf16 %v3152, %v3151
        %v3175 = vpack.c.bf16 %v3154, %v3153
        %v3176 = vpack.c.bf16 %v3156, %v3155
        %v3177 = vpack.c.bf16 %v3158, %v3157
        %v3178 = vpack.c.bf16 %v3160, %v3159
        %v3179 = vpack.c.bf16 %v3162, %v3161
        %v3180 = vpack.c.bf16 %v3164, %v3163
        %v3197 = vunpack.c.l.b16 %v3165
        %v3198 = vunpack.c.h.b16 %v3165
        %v3199 = vunpack.c.l.b16 %v3166
        %v3200 = vunpack.c.h.b16 %v3166
        %v3201 = vunpack.c.l.b16 %v3167
        %v3202 = vunpack.c.h.b16 %v3167
        %v3203 = vunpack.c.l.b16 %v3168
        %v3204 = vunpack.c.h.b16 %v3168
        %v3205 = vunpack.c.l.b16 %v3169
        %v3206 = vunpack.c.h.b16 %v3169
        %v3207 = vunpack.c.l.b16 %v3170
        %v3208 = vunpack.c.h.b16 %v3170
        %v3209 = vunpack.c.l.b16 %v3171
        %v3210 = vunpack.c.h.b16 %v3171
        %v3211 = vunpack.c.l.b16 %v3172
        %v3212 = vunpack.c.h.b16 %v3172
        %v3213 = vunpack.c.l.b16 %v3173
        %v3214 = vunpack.c.h.b16 %v3173
        %v3215 = vunpack.c.l.b16 %v3174
        %v3216 = vunpack.c.h.b16 %v3174
        %v3217 = vunpack.c.l.b16 %v3175
        %v3218 = vunpack.c.h.b16 %v3175
        %v3219 = vunpack.c.l.b16 %v3176
        %v3220 = vunpack.c.h.b16 %v3176
        %v3221 = vunpack.c.l.b16 %v3177
        %v3222 = vunpack.c.h.b16 %v3177
        %v3223 = vunpack.c.l.b16 %v3178
        %v3224 = vunpack.c.h.b16 %v3178
        %v3225 = vunpack.c.l.b16 %v3179
        %v3226 = vunpack.c.h.b16 %v3179
        %v3227 = vunpack.c.l.b16 %v3180
        %v3228 = vunpack.c.h.b16 %v3180
        %v3229 = vpack.c.b16 %v3197, %v3197
        %v3230 = vpack.c.b16 %v3198, %v3198
        %v3231 = vpack.c.b16 %v3199, %v3199
        %v3232 = vpack.c.b16 %v3200, %v3200
        %v3233 = vpack.c.b16 %v3201, %v3201
        %v3234 = vpack.c.b16 %v3202, %v3202
        %v3235 = vpack.c.b16 %v3203, %v3203
        %v3236 = vpack.c.b16 %v3204, %v3204
        %v3237 = vpack.c.b16 %v3205, %v3205
        %v3238 = vpack.c.b16 %v3206, %v3206
        %v3239 = vpack.c.b16 %v3207, %v3207
        %v3240 = vpack.c.b16 %v3208, %v3208
        %v3241 = vpack.c.b16 %v3209, %v3209
        %v3242 = vpack.c.b16 %v3210, %v3210
        %v3243 = vpack.c.b16 %v3211, %v3211
        %v3244 = vpack.c.b16 %v3212, %v3212
        %v3245 = vpack.c.b16 %v3213, %v3213
        %v3246 = vpack.c.b16 %v3214, %v3214
        %v3247 = vpack.c.b16 %v3215, %v3215
        %v3248 = vpack.c.b16 %v3216, %v3216
        %v3249 = vpack.c.b16 %v3217, %v3217
        %v3250 = vpack.c.b16 %v3218, %v3218
        %v3251 = vpack.c.b16 %v3219, %v3219
        %v3252 = vpack.c.b16 %v3220, %v3220
        %v3253 = vpack.c.b16 %v3221, %v3221
        %v3254 = vpack.c.b16 %v3222, %v3222
        %v3255 = vpack.c.b16 %v3223, %v3223
        %v3256 = vpack.c.b16 %v3224, %v3224
        %v3257 = vpack.c.b16 %v3225, %v3225
        %v3258 = vpack.c.b16 %v3226, %v3226
        %v3259 = vpack.c.b16 %v3227, %v3227
        %v3260 = vpack.c.b16 %v3228, %v3228
        %vm3293 = vcmask 125952
        %3294 = vst.msk [vmem:[%s296] sm:$0xf] %vm3293, %v3229
        %3295 = vst.msk [vmem:[%s296 + $0x4] sm:$0xf] %vm3293, %v3230
        %3296 = vst.msk [vmem:[%s296 + $0x8] sm:$0xf] %vm3293, %v3231
        %3297 = vst.msk [vmem:[%s296 + $0xc] sm:$0xf] %vm3293, %v3232
        %3298 = vst.msk [vmem:[%s296 + $0x10] sm:$0xf] %vm3293, %v3233
        %3299 = vst.msk [vmem:[%s296 + $0x14] sm:$0xf] %vm3293, %v3234
        %3300 = vst.msk [vmem:[%s296 + $0x18] sm:$0xf] %vm3293, %v3235
        %3301 = vst.msk [vmem:[%s296 + $0x1c] sm:$0xf] %vm3293, %v3236
        %3302 = vst.msk [vmem:[%s296 + $0x20] sm:$0xf] %vm3293, %v3237
        %3303 = vst.msk [vmem:[%s296 + $0x24] sm:$0xf] %vm3293, %v3238
        %3304 = vst.msk [vmem:[%s296 + $0x28] sm:$0xf] %vm3293, %v3239
        %3305 = vst.msk [vmem:[%s296 + $0x2c] sm:$0xf] %vm3293, %v3240
        %3306 = vst.msk [vmem:[%s296 + $0x30] sm:$0xf] %vm3293, %v3241
        %3307 = vst.msk [vmem:[%s296 + $0x34] sm:$0xf] %vm3293, %v3242
        %3308 = vst.msk [vmem:[%s296 + $0x38] sm:$0xf] %vm3293, %v3243
        %3309 = vst.msk [vmem:[%s296 + $0x3c] sm:$0xf] %vm3293, %v3244
        %3310 = vst.msk [vmem:[%s296 + $0x40] sm:$0xf] %vm3293, %v3245
        %3311 = vst.msk [vmem:[%s296 + $0x44] sm:$0xf] %vm3293, %v3246
        %3312 = vst.msk [vmem:[%s296 + $0x48] sm:$0xf] %vm3293, %v3247
        %3313 = vst.msk [vmem:[%s296 + $0x4c] sm:$0xf] %vm3293, %v3248
        %3314 = vst.msk [vmem:[%s296 + $0x50] sm:$0xf] %vm3293, %v3249
        %3315 = vst.msk [vmem:[%s296 + $0x54] sm:$0xf] %vm3293, %v3250
        %3316 = vst.msk [vmem:[%s296 + $0x58] sm:$0xf] %vm3293, %v3251
        %3317 = vst.msk [vmem:[%s296 + $0x5c] sm:$0xf] %vm3293, %v3252
        %3318 = vst.msk [vmem:[%s296 + $0x60] sm:$0xf] %vm3293, %v3253
        %3319 = vst.msk [vmem:[%s296 + $0x64] sm:$0xf] %vm3293, %v3254
        %3320 = vst.msk [vmem:[%s296 + $0x68] sm:$0xf] %vm3293, %v3255
        %3321 = vst.msk [vmem:[%s296 + $0x6c] sm:$0xf] %vm3293, %v3256
        %3322 = vst.msk [vmem:[%s296 + $0x70] sm:$0xf] %vm3293, %v3257
        %3323 = vst.msk [vmem:[%s296 + $0x74] sm:$0xf] %vm3293, %v3258
        %3324 = vst.msk [vmem:[%s296 + $0x78] sm:$0xf] %vm3293, %v3259
        %3325 = vst.msk [vmem:[%s296 + $0x7c] sm:$0xf] %vm3293, %v3260
        %s3326 = sand.u32 %s184, 1
        %s3327 = scalar_lea.sflag [#allocation5], %s3326
        %s3328 = sand.u32 %s184, 1
        %s3329 = smul.addr %s3328, 128
        %s3330 = scalar_lea.vmem [#allocation6], %s3329
        // Predicated region
        $region53: #{tpu_custom_call.1} parent=47 // pred_check
          %p3331 = pneg %p194
        $region54: #{tpu_custom_call.1} parent=47 // pred_check_branch
          %3333 = sbr.rel (%p3331) target = $region56
        $region55: #{tpu_custom_call.1} parent=47 // pred_region
          %s3335 = ssub.s32 2048, 2048
          %3336 = vsyncadd %s3327, %s3335
          %s3337 = smul.addr %s24, 32
          %s3338 = smul.addr %s3337, 64
          %s3339 = scalar_lea.hbm %s7, %s3338
          %s3340 = sshll.u32 %s3330, 4
          %s3341 = int_to_ptr.vmem [resolvable:$true] %s3340
          %3346 = dma.vmem_to_hbm [thread:$0]  %s3341, 2048, %s3339, %s3327, 64, 64, 4
        $region56: #{tpu_custom_call.1} parent=47 // pred_fallthru
          _
      $region48: #{tpu_custom_call.1} parent=5 // pred_fallthru
        _
      %p3347 = scmp.le.s32.totalorder 2, %s19
      // Predicated region
      $region57: #{tpu_custom_call.1} parent=5 // pred_check
        %p3348 = pneg %p3347
      $region58: #{tpu_custom_call.1} parent=5 // pred_check_branch
        %3350 = sbr.rel (%p3348) target = $region60
      $region59: #{tpu_custom_call.1} parent=5 // pred_region
        %s3351 = ssub.s32 %s19, 2
        // Predicated region
        $region61: #{tpu_custom_call.1} parent=59 // pred_check
          %p3352 = pneg %p200
        $region62: #{tpu_custom_call.1} parent=59 // pred_check_branch
          %3354 = sbr.rel (%p3352) target = $region64
        $region63: #{tpu_custom_call.1} parent=59 // pred_region
          %s3355 = sand.u32 %s185, 1
          %s3356 = scalar_lea.sflag [#allocation5], %s3355
          %s3357 = sand.u32 %s185, 1
          %s3358 = smul.addr %s3357, 128
          %s3359 = scalar_lea.vmem [#allocation6], %s3358
          %3360 = dma.done %s3356, 2048
        $region64: #{tpu_custom_call.1} parent=59 // pred_fallthru
          _
      $region60: #{tpu_custom_call.1} parent=5 // pred_fallthru
        _
    $region6: #{tpu_custom_call.1} parent=1 // loop_footer
      %s23 = sadd.s32 1, %s19
    $region7: #{tpu_custom_call.1} parent=1 // loop_footer_branch
      %18 = sbr.rel target = $region3
    $region8: #{tpu_custom_call.1} parent=1 // loop_exit
      _
    %3361 = vsyncpa [#allocation4], 1
    %s3362 = scalar_lea.sflag [#allocation4], 1
    %3363 = vsyncpa %s3362, 1
    %3364 = vsyncpa [#allocation5], 1
    %s3365 = scalar_lea.sflag [#allocation5], 1
    %3366 = vsyncpa %s3365, 1

</llo_original>
